<compile_context>
chip_gen: v7x
topology: tpu7x:2x2x1
jax: 0.10.0
libtpu: 0.0.40
codegen_flags: <defaults>
</compile_context>

<pallas_src>
import functools
import math

import jax
import jax.numpy as jnp
from jax.experimental import pallas as pl
from jax.experimental.pallas import tpu as pltpu


# ----------------------------------------------------------------------------
# Fused attention block: per-head QKV proj + attention + out-proj accumulation
# + residual + LayerNorm.   grid = (batch, heads)
# ----------------------------------------------------------------------------

def _attn_block_kernel(xq_ref, xkv_ref, wq_ref, bq_ref, wk_ref, bk_ref,
                       wv_ref, bv_ref, wo_ref, bo_ref, g_ref, beta_ref,
                       o_ref, acc_ref, *, scale, eps):
    h = pl.program_id(1)

    @pl.when(h == 0)
    def _init():
        acc_ref[...] = jnp.zeros_like(acc_ref)

    xq = xq_ref[0].astype(jnp.float32)        # (Sq, D) query source + residual
    xkv = xkv_ref[0].astype(jnp.float32)      # (Sk, D) key/value source
    xq_b = xq.astype(jnp.bfloat16)
    xkv_b = xkv.astype(jnp.bfloat16)

    # Per-head projections on the MXU (bf16 inputs, f32 accumulation).
    # 1/sqrt(Dh) is folded into q (bias included -> equivalent to scaling s).
    q = jnp.dot(xq_b, wq_ref[0], preferred_element_type=jnp.float32) + bq_ref[0]
    q = q * scale                                                   # (Sq, Dh)
    k = jnp.dot(xkv_b, wk_ref[0], preferred_element_type=jnp.float32) + bk_ref[0]
    v = jnp.dot(xkv_b, wv_ref[0], preferred_element_type=jnp.float32) + bv_ref[0]

    # scores = q @ k^T without materializing the transpose.
    s = jax.lax.dot_general(q.astype(jnp.bfloat16), k.astype(jnp.bfloat16),
                            (((1,), (1,)), ((), ())),
                            preferred_element_type=jnp.float32)     # (Sq, Sk)
    s = s - jnp.max(s, axis=-1, keepdims=True)
    p = jnp.exp(s)
    p = p * (1.0 / jnp.sum(p, axis=-1, keepdims=True))   # exact normalization

    ctx = jnp.dot(p.astype(jnp.bfloat16), v.astype(jnp.bfloat16),
                  preferred_element_type=jnp.float32)               # (Sq, Dh)

    # Accumulate this head's contribution of the output projection.
    acc_ref[...] += jnp.dot(ctx.astype(jnp.bfloat16), wo_ref[0],
                            preferred_element_type=jnp.float32)     # (Sq, D)

    @pl.when(h == pl.num_programs(1) - 1)
    def _finalize():
        # residual add + out-proj bias + LayerNorm (biased var, PyTorch-style)
        z = xq + acc_ref[...] + bo_ref[...]
        mean = jnp.mean(z, axis=-1, keepdims=True)
        zc = z - mean
        var = jnp.mean(zc * zc, axis=-1, keepdims=True)
        zn = zc * jax.lax.rsqrt(var + eps)
        o_ref[0] = (zn * g_ref[...] + beta_ref[...]).astype(o_ref.dtype)


def attn_block_pallas(xq, xkv, p, gamma, beta, *, eps=1e-5):
    """xq: (B, Sq, D) queries + residual; xkv: (B, Sk, D) key/value source."""
    B, Sq, D = xq.shape
    Sk = xkv.shape[1]
    H, _, Dh = p["wq"].shape
    scale = 1.0 / math.sqrt(Dh)

    return pl.pallas_call(
        functools.partial(_attn_block_kernel, scale=scale, eps=eps),
        out_shape=jax.ShapeDtypeStruct((B, Sq, D), xq.dtype),
        grid=(B, H),
        in_specs=[
            pl.BlockSpec((1, Sq, D), lambda b, h: (b, 0, 0)),   # xq (resident over h)
            pl.BlockSpec((1, Sk, D), lambda b, h: (b, 0, 0)),   # xkv (resident over h)
            pl.BlockSpec((1, D, Dh), lambda b, h: (h, 0, 0)),   # wq  per head (bf16)
            pl.BlockSpec((1, 1, Dh), lambda b, h: (h, 0, 0)),   # bq
            pl.BlockSpec((1, D, Dh), lambda b, h: (h, 0, 0)),   # wk
            pl.BlockSpec((1, 1, Dh), lambda b, h: (h, 0, 0)),   # bk
            pl.BlockSpec((1, D, Dh), lambda b, h: (h, 0, 0)),   # wv
            pl.BlockSpec((1, 1, Dh), lambda b, h: (h, 0, 0)),   # bv
            pl.BlockSpec((1, Dh, D), lambda b, h: (h, 0, 0)),   # wo  per head (bf16)
            pl.BlockSpec((1, D), lambda b, h: (0, 0)),          # bo
            pl.BlockSpec((1, D), lambda b, h: (0, 0)),          # gamma
            pl.BlockSpec((1, D), lambda b, h: (0, 0)),          # beta
        ],
        out_specs=pl.BlockSpec((1, Sq, D), lambda b, h: (b, 0, 0)),
        scratch_shapes=[pltpu.VMEM((Sq, D), jnp.float32)],
        compiler_params=pltpu.CompilerParams(
            dimension_semantics=("parallel", "arbitrary"),
            vmem_limit_bytes=64 * 1024 * 1024),
    )(xq, xkv, p["wq"], p["bq"], p["wk"], p["bk"], p["wv"], p["bv"],
      p["wo"], p["bo"], gamma, beta)


# ----------------------------------------------------------------------------
# Fused FFN block: linear1 + ReLU + linear2 (accumulated over d_ff tiles)
# + residual + LayerNorm.   grid = (token tiles, d_ff tiles)
# ----------------------------------------------------------------------------

def _ffn_ln_kernel(x_ref, w1_ref, b1_ref, w2_ref, b2_ref, g_ref, beta_ref,
                   o_ref, acc_ref, *, eps):
    j = pl.program_id(1)

    @pl.when(j == 0)
    def _init():
        acc_ref[...] = jnp.zeros_like(acc_ref)

    x = x_ref[...].astype(jnp.float32)                              # (tm, D)
    h = jnp.dot(x.astype(jnp.bfloat16), w1_ref[...],
                preferred_element_type=jnp.float32) + b1_ref[...]   # (tm, tdff)
    h = jnp.maximum(h, 0.0)
    acc_ref[...] += jnp.dot(h.astype(jnp.bfloat16), w2_ref[...],
                            preferred_element_type=jnp.float32)     # (tm, D)

    @pl.when(j == pl.num_programs(1) - 1)
    def _finalize():
        z = x + acc_ref[...] + b2_ref[...]
        mean = jnp.mean(z, axis=-1, keepdims=True)
        zc = z - mean
        var = jnp.mean(zc * zc, axis=-1, keepdims=True)
        zn = zc * jax.lax.rsqrt(var + eps)
        o_ref[...] = (zn * g_ref[...] + beta_ref[...]).astype(o_ref.dtype)


def _pick_tile_m(M):
    """Largest sublane-aligned divisor of M, capped at 256, preferring >= 2
    grid steps (so both v7x TensorCores get work on the parallel axis)."""
    chosen = None
    for t in (256, 128, 64, 32, 16, 8):
        if M % t == 0:
            if chosen is None:
                chosen = t
            if M // t >= 2:
                return t
    if chosen is not None:
        return chosen
    # TODO(synk): pad M to a multiple of 8 for non-sublane-aligned token counts.
    return M


def _pick_tile_dff(dff):
    for t in (512, 256, 128):
        if dff % t == 0:
            return t
    return dff


def ffn_ln_pallas(x, p, gamma, beta, *, eps=1e-5):
    B, S, D = x.shape
    M = B * S
    DFF = p["w1"].shape[1]
    x2 = x.reshape(M, D)
    tm = _pick_tile_m(M)
    tdff = _pick_tile_dff(DFF)

    out = pl.pallas_call(
        functools.partial(_ffn_ln_kernel, eps=eps),
        out_shape=jax.ShapeDtypeStruct((M, D), x.dtype),
        grid=(M // tm, DFF // tdff),
        in_specs=[
            pl.BlockSpec((tm, D), lambda i, j: (i, 0)),     # x tile (resident over j)
            pl.BlockSpec((D, tdff), lambda i, j: (0, j)),   # w1 tile (bf16)
            pl.BlockSpec((1, tdff), lambda i, j: (0, j)),   # b1 tile
            pl.BlockSpec((tdff, D), lambda i, j: (j, 0)),   # w2 tile (bf16)
            pl.BlockSpec((1, D), lambda i, j: (0, 0)),      # b2
            pl.BlockSpec((1, D), lambda i, j: (0, 0)),      # gamma
            pl.BlockSpec((1, D), lambda i, j: (0, 0)),      # beta
        ],
        out_specs=pl.BlockSpec((tm, D), lambda i, j: (i, 0)),
        scratch_shapes=[pltpu.VMEM((tm, D), jnp.float32)],
        compiler_params=pltpu.CompilerParams(
            dimension_semantics=("parallel", "arbitrary"),
            vmem_limit_bytes=64 * 1024 * 1024),
    )(x2, p["w1"], p["b1"], p["w2"], p["b2"], gamma, beta)
    return out.reshape(B, S, D)


# ----------------------------------------------------------------------------
# Decoder layer composition (3 pallas_call launches per layer)
# ----------------------------------------------------------------------------

def decoder_layer(x, enc_output, params):
    # self-attention + residual + LN   (dropout = identity in eval mode)
    x = attn_block_pallas(x, x, params["self_attn"],
                          params["ln1_g"], params["ln1_b"])
    # cross-attention (Sk may differ from Sq) + residual + LN
    x = attn_block_pallas(x, enc_output, params["cross_attn"],
                          params["ln2_g"], params["ln2_b"])
    # feed-forward + residual + LN
    x = ffn_ln_pallas(x, params["ffn"], params["ln3_g"], params["ln3_b"])
    return x


# ----------------------------------------------------------------------------
# Pure-JAX reference (same bf16 weights cast back to f32, f32 math)
# ----------------------------------------------------------------------------

def _merge_qkv_w(w_r):   # (H, D, Dh) -> (D, D)
    H, D, Dh = w_r.shape
    return w_r.transpose(1, 0, 2).reshape(D, H * Dh).astype(jnp.float32)


def _merge_out_w(wo_r):  # (H, Dh, D) -> (D, D)
    H, Dh, D = wo_r.shape
    return wo_r.reshape(H * Dh, D).astype(jnp.float32)


def _merge_b(b_r):
    return b_r.reshape(-1).astype(jnp.float32)


def _ref_ln(z, g, b, eps=1e-5):
    m = jnp.mean(z, axis=-1, keepdims=True)
    v = jnp.mean((z - m) ** 2, axis=-1, keepdims=True)
    return (z - m) * jax.lax.rsqrt(v + eps) * g.reshape(-1) + b.reshape(-1)


def _ref_mha(xq, xkv, p):
    B, Sq, D = xq.shape
    Sk = xkv.shape[1]
    H = p["wq"].shape[0]
    Dh = D // H
    wq, wk, wv = _merge_qkv_w(p["wq"]), _merge_qkv_w(p["wk"]), _merge_qkv_w(p["wv"])
    wo = _merge_out_w(p["wo"])
    q = xq @ wq + _merge_b(p["bq"])
    k = xkv @ wk + _merge_b(p["bk"])
    v = xkv @ wv + _merge_b(p["bv"])
    qh = q.reshape(B, Sq, H, Dh).transpose(0, 2, 1, 3)
    kh = k.reshape(B, Sk, H, Dh).transpose(0, 2, 1, 3)
    vh = v.reshape(B, Sk, H, Dh).transpose(0, 2, 1, 3)
    s = jnp.einsum("bhqd,bhkd->bhqk", qh, kh) / math.sqrt(Dh)
    a = jax.nn.softmax(s, axis=-1)
    o = jnp.einsum("bhqk,bhkd->bhqd", a, vh)
    o = o.transpose(0, 2, 1, 3).reshape(B, Sq, D)
    return o @ wo + p["bo"].reshape(-1)


def decoder_layer_ref(x, enc, params):
    a = _ref_mha(x, x, params["self_attn"])
    x = _ref_ln(x + a, params["ln1_g"], params["ln1_b"])
    a = _ref_mha(x, enc, params["cross_attn"])
    x = _ref_ln(x + a, params["ln2_g"], params["ln2_b"])
    f = params["ffn"]
    h = jnp.maximum(x @ f["w1"].astype(jnp.float32) + f["b1"].reshape(-1), 0.0)
    y = h @ f["w2"].astype(jnp.float32) + f["b2"].reshape(-1)
    return _ref_ln(x + y, params["ln3_g"], params["ln3_b"])


# ----------------------------------------------------------------------------
# Deterministic parameter init (PyTorch-style uniform(-1/sqrt(fan_in), ...))
# Weights stored in bf16 (per-head layout for attention), biases/LN in f32.
# ----------------------------------------------------------------------------

def _linear_params(key, d_in, d_out):
    kw, kb = jax.random.split(key)
    bound = 1.0 / math.sqrt(d_in)
    w = jax.random.uniform(kw, (d_in, d_out), jnp.float32, -bound, bound)
    b = jax.random.uniform(kb, (d_out,), jnp.float32, -bound, bound)
    return w, b


def _attn_params(keys, d_model, num_heads):
    dh = d_model // num_heads
    wq, bq = _linear_params(keys[0], d_model, d_model)
    wk, bk = _linear_params(keys[1], d_model, d_model)
    wv, bv = _linear_params(keys[2], d_model, d_model)
    wo, bo = _linear_params(keys[3], d_model, d_model)

    def head_w(w):   # (D, D) -> (H, D, Dh); column h*Dh+d -> [h, :, d]
        return w.reshape(d_model, num_heads, dh).transpose(1, 0, 2)

    def head_b(b):   # (D,) -> (H, 1, Dh)
        return b.reshape(num_heads, 1, dh)

    return dict(
        wq=head_w(wq).astype(jnp.bfloat16), bq=head_b(bq),
        wk=head_w(wk).astype(jnp.bfloat16), bk=head_b(bk),
        wv=head_w(wv).astype(jnp.bfloat16), bv=head_b(bv),
        wo=wo.reshape(num_heads, dh, d_model).astype(jnp.bfloat16),
        bo=bo.reshape(1, d_model),
    )


def make_params(key, d_model, d_ff, num_heads):
    keys = jax.random.split(key, 10)
    w1, b1 = _linear_params(keys[8], d_model, d_ff)
    w2, b2 = _linear_params(keys[9], d_ff, d_model)
    return dict(
        self_attn=_attn_params(keys[0:4], d_model, num_heads),
        cross_attn=_attn_params(keys[4:8], d_model, num_heads),
        ffn=dict(w1=w1.astype(jnp.bfloat16), b1=b1.reshape(1, d_ff),
                 w2=w2.astype(jnp.bfloat16), b2=b2.reshape(1, d_model)),
        ln1_g=jnp.ones((1, d_model), jnp.float32),
        ln1_b=jnp.zeros((1, d_model), jnp.float32),
        ln2_g=jnp.ones((1, d_model), jnp.float32),
        ln2_b=jnp.zeros((1, d_model), jnp.float32),
        ln3_g=jnp.ones((1, d_model), jnp.float32),
        ln3_b=jnp.zeros((1, d_model), jnp.float32),
    )


# ----------------------------------------------------------------------------
# Main
# ----------------------------------------------------------------------------

if __name__ == "__main__":
    # decoder seq != encoder seq to exercise the cross-attention Sq != Sk path
    B, S_DEC, S_ENC, D, H, DFF = 2, 8, 16, 32, 4, 64

    root = jax.random.PRNGKey(0)
    k_x, k_enc, k_p = jax.random.split(root, 3)
    x = jax.random.normal(k_x, (B, S_DEC, D), jnp.float32)
    enc_output = jax.random.normal(k_enc, (B, S_ENC, D), jnp.float32)
    params = make_params(k_p, D, DFF, H)

    fn = jax.jit(decoder_layer)
    out = fn(x, enc_output, params)
    jax.block_until_ready(out)

    assert out.shape == (B, S_DEC, D), out.shape
    assert bool(jnp.all(jnp.isfinite(out)))

    ref = decoder_layer_ref(x, enc_output, params)
    max_err = float(jnp.max(jnp.abs(out - ref)))
    assert max_err < 5e-2, f"max abs error vs reference: {max_err}"

    print("KERNEL_OK")
</pallas_src>

<mosaic_0001>
module attributes {stable_mosaic.version = 11 : i64} {
  func.func @_attn_block_kernel(%arg0: i32, %arg1: i32, %arg2: memref<1x8x32xf32, #tpu.memory_space<vmem>>, %arg3: memref<1x8x32xf32, #tpu.memory_space<vmem>>, %arg4: memref<1x32x8xbf16, #tpu.memory_space<vmem>>, %arg5: memref<1x1x8xf32, #tpu.memory_space<vmem>>, %arg6: memref<1x32x8xbf16, #tpu.memory_space<vmem>>, %arg7: memref<1x1x8xf32, #tpu.memory_space<vmem>>, %arg8: memref<1x32x8xbf16, #tpu.memory_space<vmem>>, %arg9: memref<1x1x8xf32, #tpu.memory_space<vmem>>, %arg10: memref<1x8x32xbf16, #tpu.memory_space<vmem>>, %arg11: memref<1x32xf32, #tpu.memory_space<vmem>>, %arg12: memref<1x32xf32, #tpu.memory_space<vmem>>, %arg13: memref<1x32xf32, #tpu.memory_space<vmem>>, %arg14: memref<1x8x32xf32, #tpu.memory_space<vmem>>, %arg15: memref<8x32xf32, #tpu.memory_space<vmem>>) attributes {dimension_semantics = [#tpu.dimension_semantics<parallel>, #tpu.dimension_semantics<arbitrary>], iteration_bounds = array<i64: 2, 4>, scalar_prefetch = 0 : i64, scratch_operands = 1 : i64, tpu.core_type = #tpu.core_type<tc>, window_params = [{transform_indices = @transform_0, window_bounds = array<i64: 1, 8, 32>}, {transform_indices = @transform_1, window_bounds = array<i64: 1, 8, 32>}, {transform_indices = @transform_2, window_bounds = array<i64: 1, 32, 8>}, {transform_indices = @transform_3, window_bounds = array<i64: 1, 1, 8>}, {transform_indices = @transform_4, window_bounds = array<i64: 1, 32, 8>}, {transform_indices = @transform_5, window_bounds = array<i64: 1, 1, 8>}, {transform_indices = @transform_6, window_bounds = array<i64: 1, 32, 8>}, {transform_indices = @transform_7, window_bounds = array<i64: 1, 1, 8>}, {transform_indices = @transform_8, window_bounds = array<i64: 1, 8, 32>}, {pipeline_mode = #tpu.pipeline_mode<synchronous>, transform_indices = @transform_9, window_bounds = array<i64: 1, 32>}, {pipeline_mode = #tpu.pipeline_mode<synchronous>, transform_indices = @transform_10, window_bounds = array<i64: 1, 32>}, {pipeline_mode = #tpu.pipeline_mode<synchronous>, transform_indices = @transform_11, window_bounds = array<i64: 1, 32>}, {transform_indices = @transform_12, window_bounds = array<i64: 1, 8, 32>}]} {
    %c0_i32 = arith.constant 0 : i32
    %0 = arith.cmpi eq, %arg1, %c0_i32 : i32
    %1 = arith.extui %0 : i1 to i32
    %c0_i32_0 = arith.constant 0 : i32
    %2 = arith.cmpi ne, %1, %c0_i32_0 : i32
    scf.if %2 {
      %cst_41 = arith.constant 0.000000e+00 : f32
      %59 = vector.broadcast %cst_41 : f32 to vector<8x32xf32>
      %c0_42 = arith.constant 0 : index
      %c0_43 = arith.constant 0 : index
      %60 = vector.load %arg15[%c0_42, %c0_43] : memref<8x32xf32, #tpu.memory_space<vmem>>, vector<8x32xf32>
      tpu.vector_store %arg15[%c0_42, %c0_43], %59 {strides = array<i32>} : memref<8x32xf32, #tpu.memory_space<vmem>>, vector<8x32xf32>,
    } else {
    }
    %c0 = arith.constant 0 : index
    %c0_1 = arith.constant 0 : index
    %c0_2 = arith.constant 0 : index
    %3 = vector.load %arg2[%c0, %c0_1, %c0_2] : memref<1x8x32xf32, #tpu.memory_space<vmem>>, vector<1x8x32xf32>
    %4 = vector.shape_cast %3 : vector<1x8x32xf32> to vector<8x32xf32>
    %c0_3 = arith.constant 0 : index
    %c0_4 = arith.constant 0 : index
    %c0_5 = arith.constant 0 : index
    %5 = vector.load %arg3[%c0_3, %c0_4, %c0_5] : memref<1x8x32xf32, #tpu.memory_space<vmem>>, vector<1x8x32xf32>
    %6 = vector.shape_cast %5 : vector<1x8x32xf32> to vector<8x32xf32>
    %7 = arith.truncf %4 : vector<8x32xf32> to vector<8x32xbf16>
    %8 = arith.truncf %6 : vector<8x32xf32> to vector<8x32xbf16>
    %c0_6 = arith.constant 0 : index
    %c0_7 = arith.constant 0 : index
    %c0_8 = arith.constant 0 : index
    %9 = vector.load %arg4[%c0_6, %c0_7, %c0_8] : memref<1x32x8xbf16, #tpu.memory_space<vmem>>, vector<1x32x8xbf16>
    %10 = vector.shape_cast %9 : vector<1x32x8xbf16> to vector<32x8xbf16>
    %cst = arith.constant dense<0.000000e+00> : vector<8x8xf32>
    %11 = tpu.matmul %7, %10, %cst {dimension_numbers = #tpu.dot_dimension_numbers<[1], [0], [0], [1], [0, 0, 1, 1], [], []>} : vector<8x32xbf16>, vector<32x8xbf16>, vector<8x8xf32> -> vector<8x8xf32>
    %c0_9 = arith.constant 0 : index
    %c0_10 = arith.constant 0 : index
    %c0_11 = arith.constant 0 : index
    %12 = vector.load %arg5[%c0_9, %c0_10, %c0_11] : memref<1x1x8xf32, #tpu.memory_space<vmem>>, vector<1x1x8xf32>
    %13 = vector.shape_cast %12 : vector<1x1x8xf32> to vector<1x8xf32>
    %14 = vector.broadcast %13 : vector<1x8xf32> to vector<8x8xf32>
    %15 = arith.addf %11, %14 : vector<8x8xf32>
    %cst_12 = arith.constant 0.353553385 : f32
    %16 = vector.broadcast %cst_12 : f32 to vector<8x8xf32>
    %17 = arith.mulf %15, %16 : vector<8x8xf32>
    %c0_13 = arith.constant 0 : index
    %c0_14 = arith.constant 0 : index
    %c0_15 = arith.constant 0 : index
    %18 = vector.load %arg6[%c0_13, %c0_14, %c0_15] : memref<1x32x8xbf16, #tpu.memory_space<vmem>>, vector<1x32x8xbf16>
    %19 = vector.shape_cast %18 : vector<1x32x8xbf16> to vector<32x8xbf16>
    %cst_16 = arith.constant dense<0.000000e+00> : vector<8x8xf32>
    %20 = tpu.matmul %8, %19, %cst_16 {dimension_numbers = #tpu.dot_dimension_numbers<[1], [0], [0], [1], [0, 0, 1, 1], [], []>} : vector<8x32xbf16>, vector<32x8xbf16>, vector<8x8xf32> -> vector<8x8xf32>
    %c0_17 = arith.constant 0 : index
    %c0_18 = arith.constant 0 : index
    %c0_19 = arith.constant 0 : index
    %21 = vector.load %arg7[%c0_17, %c0_18, %c0_19] : memref<1x1x8xf32, #tpu.memory_space<vmem>>, vector<1x1x8xf32>
    %22 = vector.shape_cast %21 : vector<1x1x8xf32> to vector<1x8xf32>
    %23 = vector.broadcast %22 : vector<1x8xf32> to vector<8x8xf32>
    %24 = arith.addf %20, %23 : vector<8x8xf32>
    %c0_20 = arith.constant 0 : index
    %c0_21 = arith.constant 0 : index
    %c0_22 = arith.constant 0 : index
    %25 = vector.load %arg8[%c0_20, %c0_21, %c0_22] : memref<1x32x8xbf16, #tpu.memory_space<vmem>>, vector<1x32x8xbf16>
    %26 = vector.shape_cast %25 : vector<1x32x8xbf16> to vector<32x8xbf16>
    %cst_23 = arith.constant dense<0.000000e+00> : vector<8x8xf32>
    %27 = tpu.matmul %8, %26, %cst_23 {dimension_numbers = #tpu.dot_dimension_numbers<[1], [0], [0], [1], [0, 0, 1, 1], [], []>} : vector<8x32xbf16>, vector<32x8xbf16>, vector<8x8xf32> -> vector<8x8xf32>
    %c0_24 = arith.constant 0 : index
    %c0_25 = arith.constant 0 : index
    %c0_26 = arith.constant 0 : index
    %28 = vector.load %arg9[%c0_24, %c0_25, %c0_26] : memref<1x1x8xf32, #tpu.memory_space<vmem>>, vector<1x1x8xf32>
    %29 = vector.shape_cast %28 : vector<1x1x8xf32> to vector<1x8xf32>
    %30 = vector.broadcast %29 : vector<1x8xf32> to vector<8x8xf32>
    %31 = arith.addf %27, %30 : vector<8x8xf32>
    %32 = arith.truncf %17 : vector<8x8xf32> to vector<8x8xbf16>
    %33 = arith.truncf %24 : vector<8x8xf32> to vector<8x8xbf16>
    %cst_27 = arith.constant dense<0.000000e+00> : vector<8x8xf32>
    %34 = tpu.matmul %32, %33, %cst_27 {dimension_numbers = #tpu.dot_dimension_numbers<[1], [1], [0], [0], [0, 0, 1, 0], [], []>} : vector<8x8xbf16>, vector<8x8xbf16>, vector<8x8xf32> -> vector<8x8xf32>
    %cst_28 = arith.constant dense<0xFF800000> : vector<8xf32>
    %35 = vector.multi_reduction <maximumf>, %34, %cst_28 [1] : vector<8x8xf32> to vector<8xf32>
    %36 = vector.shape_cast %35 : vector<8xf32> to vector<8x1xf32>
    %37 = vector.broadcast %36 : vector<8x1xf32> to vector<8x8xf32>
    %38 = arith.subf %34, %37 : vector<8x8xf32>
    %39 = math.exp %38 : vector<8x8xf32>
    %cst_29 = arith.constant dense<0.000000e+00> : vector<8xf32>
    %40 = vector.multi_reduction <add>, %39, %cst_29 [1] : vector<8x8xf32> to vector<8xf32>
    %41 = vector.shape_cast %40 : vector<8xf32> to vector<8x1xf32>
    %cst_30 = arith.constant 1.000000e+00 : f32
    %42 = vector.broadcast %cst_30 : f32 to vector<8x1xf32>
    %43 = arith.divf %42, %41 : vector<8x1xf32>
    %44 = vector.broadcast %43 : vector<8x1xf32> to vector<8x8xf32>
    %45 = arith.mulf %39, %44 : vector<8x8xf32>
    %46 = arith.truncf %45 : vector<8x8xf32> to vector<8x8xbf16>
    %47 = arith.truncf %31 : vector<8x8xf32> to vector<8x8xbf16>
    %cst_31 = arith.constant dense<0.000000e+00> : vector<8x8xf32>
    %48 = tpu.matmul %46, %47, %cst_31 {dimension_numbers = #tpu.dot_dimension_numbers<[1], [0], [0], [1], [0, 0, 1, 1], [], []>} : vector<8x8xbf16>, vector<8x8xbf16>, vector<8x8xf32> -> vector<8x8xf32>
    %c0_32 = arith.constant 0 : index
    %c0_33 = arith.constant 0 : index
    %49 = vector.load %arg15[%c0_32, %c0_33] : memref<8x32xf32, #tpu.memory_space<vmem>>, vector<8x32xf32>
    %50 = arith.truncf %48 : vector<8x8xf32> to vector<8x8xbf16>
    %c0_34 = arith.constant 0 : index
    %c0_35 = arith.constant 0 : index
    %c0_36 = arith.constant 0 : index
    %51 = vector.load %arg10[%c0_34, %c0_35, %c0_36] : memref<1x8x32xbf16, #tpu.memory_space<vmem>>, vector<1x8x32xbf16>
    %52 = vector.shape_cast %51 : vector<1x8x32xbf16> to vector<8x32xbf16>
    %cst_37 = arith.constant dense<0.000000e+00> : vector<8x32xf32>
    %53 = tpu.matmul %50, %52, %cst_37 {dimension_numbers = #tpu.dot_dimension_numbers<[1], [0], [0], [1], [0, 0, 1, 1], [], []>} : vector<8x8xbf16>, vector<8x32xbf16>, vector<8x32xf32> -> vector<8x32xf32>
    %54 = arith.addf %49, %53 : vector<8x32xf32>
    %c0_38 = arith.constant 0 : index
    %c0_39 = arith.constant 0 : index
    %55 = vector.load %arg15[%c0_38, %c0_39] : memref<8x32xf32, #tpu.memory_space<vmem>>, vector<8x32xf32>
    tpu.vector_store %arg15[%c0_38, %c0_39], %54 {strides = array<i32>} : memref<8x32xf32, #tpu.memory_space<vmem>>, vector<8x32xf32>,
    %c3_i32 = arith.constant 3 : i32
    %56 = arith.cmpi eq, %arg1, %c3_i32 : i32
    %57 = arith.extui %56 : i1 to i32
    %c0_i32_40 = arith.constant 0 : i32
    %58 = arith.cmpi ne, %57, %c0_i32_40 : i32
    scf.if %58 {
      %c0_41 = arith.constant 0 : index
      %c0_42 = arith.constant 0 : index
      %59 = vector.load %arg15[%c0_41, %c0_42] : memref<8x32xf32, #tpu.memory_space<vmem>>, vector<8x32xf32>
      %60 = arith.addf %4, %59 : vector<8x32xf32>
      %c0_43 = arith.constant 0 : index
      %c0_44 = arith.constant 0 : index
      %61 = vector.load %arg11[%c0_43, %c0_44] : memref<1x32xf32, #tpu.memory_space<vmem>>, vector<1x32xf32>
      %62 = vector.broadcast %61 : vector<1x32xf32> to vector<8x32xf32>
      %63 = arith.addf %60, %62 : vector<8x32xf32>
      %cst_45 = arith.constant dense<0.000000e+00> : vector<8xf32>
      %64 = vector.multi_reduction <add>, %63, %cst_45 [1] : vector<8x32xf32> to vector<8xf32>
      %65 = vector.shape_cast %64 : vector<8xf32> to vector<8x1xf32>
      %cst_46 = arith.constant 3.200000e+01 : f32
      %66 = vector.broadcast %cst_46 : f32 to vector<8x1xf32>
      %67 = arith.divf %65, %66 : vector<8x1xf32>
      %68 = vector.broadcast %67 : vector<8x1xf32> to vector<8x32xf32>
      %69 = arith.subf %63, %68 : vector<8x32xf32>
      %70 = arith.mulf %69, %69 : vector<8x32xf32>
      %cst_47 = arith.constant dense<0.000000e+00> : vector<8xf32>
      %71 = vector.multi_reduction <add>, %70, %cst_47 [1] : vector<8x32xf32> to vector<8xf32>
      %72 = vector.shape_cast %71 : vector<8xf32> to vector<8x1xf32>
      %cst_48 = arith.constant 3.200000e+01 : f32
      %73 = vector.broadcast %cst_48 : f32 to vector<8x1xf32>
      %74 = arith.divf %72, %73 : vector<8x1xf32>
      %cst_49 = arith.constant 9.99999974E-6 : f32
      %75 = vector.broadcast %cst_49 : f32 to vector<8x1xf32>
      %76 = arith.addf %74, %75 : vector<8x1xf32>
      %77 = math.rsqrt %76 : vector<8x1xf32>
      %78 = vector.broadcast %77 : vector<8x1xf32> to vector<8x32xf32>
      %79 = arith.mulf %69, %78 : vector<8x32xf32>
      %c0_50 = arith.constant 0 : index
      %c0_51 = arith.constant 0 : index
      %80 = vector.load %arg12[%c0_50, %c0_51] : memref<1x32xf32, #tpu.memory_space<vmem>>, vector<1x32xf32>
      %81 = vector.broadcast %80 : vector<1x32xf32> to vector<8x32xf32>
      %82 = arith.mulf %79, %81 : vector<8x32xf32>
      %c0_52 = arith.constant 0 : index
      %c0_53 = arith.constant 0 : index
      %83 = vector.load %arg13[%c0_52, %c0_53] : memref<1x32xf32, #tpu.memory_space<vmem>>, vector<1x32xf32>
      %84 = vector.broadcast %83 : vector<1x32xf32> to vector<8x32xf32>
      %85 = arith.addf %82, %84 : vector<8x32xf32>
      %c0_54 = arith.constant 0 : index
      %c0_55 = arith.constant 0 : index
      %c0_56 = arith.constant 0 : index
      %86 = vector.load %arg14[%c0_54, %c0_55, %c0_56] : memref<1x8x32xf32, #tpu.memory_space<vmem>>, vector<1x8x32xf32>
      %87 = vector.shape_cast %86 : vector<1x8x32xf32> to vector<8x32xf32>
      %88 = vector.shape_cast %85 : vector<8x32xf32> to vector<1x8x32xf32>
      tpu.vector_store %arg14[%c0_54, %c0_55, %c0_56], %88 {strides = array<i32>} : memref<1x8x32xf32, #tpu.memory_space<vmem>>, vector<1x8x32xf32>,
    } else {
    }
    return
  }
  func.func @transform_0(%arg0: i32, %arg1: i32) -> (i32, i32, i32) {
    %c0_i32 = arith.constant 0 : i32
    %c0_i32_0 = arith.constant 0 : i32
    %c0_i32_1 = arith.constant 0 : i32
    return %arg0, %c0_i32, %c0_i32_0 : i32, i32, i32
  }
  func.func @transform_1(%arg0: i32, %arg1: i32) -> (i32, i32, i32) {
    %c0_i32 = arith.constant 0 : i32
    %c0_i32_0 = arith.constant 0 : i32
    %c0_i32_1 = arith.constant 0 : i32
    return %arg0, %c0_i32, %c0_i32_0 : i32, i32, i32
  }
  func.func @transform_2(%arg0: i32, %arg1: i32) -> (i32, i32, i32) {
    %c0_i32 = arith.constant 0 : i32
    %c0_i32_0 = arith.constant 0 : i32
    %c0_i32_1 = arith.constant 0 : i32
    return %arg1, %c0_i32, %c0_i32_0 : i32, i32, i32
  }
  func.func @transform_3(%arg0: i32, %arg1: i32) -> (i32, i32, i32) {
    %c0_i32 = arith.constant 0 : i32
    %c0_i32_0 = arith.constant 0 : i32
    %c0_i32_1 = arith.constant 0 : i32
    return %arg1, %c0_i32, %c0_i32_0 : i32, i32, i32
  }
  func.func @transform_4(%arg0: i32, %arg1: i32) -> (i32, i32, i32) {
    %c0_i32 = arith.constant 0 : i32
    %c0_i32_0 = arith.constant 0 : i32
    %c0_i32_1 = arith.constant 0 : i32
    return %arg1, %c0_i32, %c0_i32_0 : i32, i32, i32
  }
  func.func @transform_5(%arg0: i32, %arg1: i32) -> (i32, i32, i32) {
    %c0_i32 = arith.constant 0 : i32
    %c0_i32_0 = arith.constant 0 : i32
    %c0_i32_1 = arith.constant 0 : i32
    return %arg1, %c0_i32, %c0_i32_0 : i32, i32, i32
  }
  func.func @transform_6(%arg0: i32, %arg1: i32) -> (i32, i32, i32) {
    %c0_i32 = arith.constant 0 : i32
    %c0_i32_0 = arith.constant 0 : i32
    %c0_i32_1 = arith.constant 0 : i32
    return %arg1, %c0_i32, %c0_i32_0 : i32, i32, i32
  }
  func.func @transform_7(%arg0: i32, %arg1: i32) -> (i32, i32, i32) {
    %c0_i32 = arith.constant 0 : i32
    %c0_i32_0 = arith.constant 0 : i32
    %c0_i32_1 = arith.constant 0 : i32
    return %arg1, %c0_i32, %c0_i32_0 : i32, i32, i32
  }
  func.func @transform_8(%arg0: i32, %arg1: i32) -> (i32, i32, i32) {
    %c0_i32 = arith.constant 0 : i32
    %c0_i32_0 = arith.constant 0 : i32
    %c0_i32_1 = arith.constant 0 : i32
    return %arg1, %c0_i32, %c0_i32_0 : i32, i32, i32
  }
  func.func @transform_9(%arg0: i32, %arg1: i32) -> (i32, i32) {
    %c0_i32 = arith.constant 0 : i32
    %c0_i32_0 = arith.constant 0 : i32
    %c0_i32_1 = arith.constant 0 : i32
    return %c0_i32, %c0_i32_0 : i32, i32
  }
  func.func @transform_10(%arg0: i32, %arg1: i32) -> (i32, i32) {
    %c0_i32 = arith.constant 0 : i32
    %c0_i32_0 = arith.constant 0 : i32
    %c0_i32_1 = arith.constant 0 : i32
    return %c0_i32, %c0_i32_0 : i32, i32
  }
  func.func @transform_11(%arg0: i32, %arg1: i32) -> (i32, i32) {
    %c0_i32 = arith.constant 0 : i32
    %c0_i32_0 = arith.constant 0 : i32
    %c0_i32_1 = arith.constant 0 : i32
    return %c0_i32, %c0_i32_0 : i32, i32
  }
  func.func @transform_12(%arg0: i32, %arg1: i32) -> (i32, i32, i32) {
    %c0_i32 = arith.constant 0 : i32
    %c0_i32_0 = arith.constant 0 : i32
    %c0_i32_1 = arith.constant 0 : i32
    return %arg0, %c0_i32, %c0_i32_0 : i32, i32, i32
  }
}

module attributes {stable_mosaic.version = 11 : i64} {
  func.func @_attn_block_kernel(%arg0: i32, %arg1: i32, %arg2: memref<1x8x32xf32, #tpu.memory_space<vmem>>, %arg3: memref<1x16x32xf32, #tpu.memory_space<vmem>>, %arg4: memref<1x32x8xbf16, #tpu.memory_space<vmem>>, %arg5: memref<1x1x8xf32, #tpu.memory_space<vmem>>, %arg6: memref<1x32x8xbf16, #tpu.memory_space<vmem>>, %arg7: memref<1x1x8xf32, #tpu.memory_space<vmem>>, %arg8: memref<1x32x8xbf16, #tpu.memory_space<vmem>>, %arg9: memref<1x1x8xf32, #tpu.memory_space<vmem>>, %arg10: memref<1x8x32xbf16, #tpu.memory_space<vmem>>, %arg11: memref<1x32xf32, #tpu.memory_space<vmem>>, %arg12: memref<1x32xf32, #tpu.memory_space<vmem>>, %arg13: memref<1x32xf32, #tpu.memory_space<vmem>>, %arg14: memref<1x8x32xf32, #tpu.memory_space<vmem>>, %arg15: memref<8x32xf32, #tpu.memory_space<vmem>>) attributes {dimension_semantics = [#tpu.dimension_semantics<parallel>, #tpu.dimension_semantics<arbitrary>], iteration_bounds = array<i64: 2, 4>, scalar_prefetch = 0 : i64, scratch_operands = 1 : i64, tpu.core_type = #tpu.core_type<tc>, window_params = [{transform_indices = @transform_0, window_bounds = array<i64: 1, 8, 32>}, {transform_indices = @transform_1, window_bounds = array<i64: 1, 16, 32>}, {transform_indices = @transform_2, window_bounds = array<i64: 1, 32, 8>}, {transform_indices = @transform_3, window_bounds = array<i64: 1, 1, 8>}, {transform_indices = @transform_4, window_bounds = array<i64: 1, 32, 8>}, {transform_indices = @transform_5, window_bounds = array<i64: 1, 1, 8>}, {transform_indices = @transform_6, window_bounds = array<i64: 1, 32, 8>}, {transform_indices = @transform_7, window_bounds = array<i64: 1, 1, 8>}, {transform_indices = @transform_8, window_bounds = array<i64: 1, 8, 32>}, {pipeline_mode = #tpu.pipeline_mode<synchronous>, transform_indices = @transform_9, window_bounds = array<i64: 1, 32>}, {pipeline_mode = #tpu.pipeline_mode<synchronous>, transform_indices = @transform_10, window_bounds = array<i64: 1, 32>}, {pipeline_mode = #tpu.pipeline_mode<synchronous>, transform_indices = @transform_11, window_bounds = array<i64: 1, 32>}, {transform_indices = @transform_12, window_bounds = array<i64: 1, 8, 32>}]} {
    %c0_i32 = arith.constant 0 : i32
    %0 = arith.cmpi eq, %arg1, %c0_i32 : i32
    %1 = arith.extui %0 : i1 to i32
    %c0_i32_0 = arith.constant 0 : i32
    %2 = arith.cmpi ne, %1, %c0_i32_0 : i32
    scf.if %2 {
      %cst_41 = arith.constant 0.000000e+00 : f32
      %59 = vector.broadcast %cst_41 : f32 to vector<8x32xf32>
      %c0_42 = arith.constant 0 : index
      %c0_43 = arith.constant 0 : index
      %60 = vector.load %arg15[%c0_42, %c0_43] : memref<8x32xf32, #tpu.memory_space<vmem>>, vector<8x32xf32>
      tpu.vector_store %arg15[%c0_42, %c0_43], %59 {strides = array<i32>} : memref<8x32xf32, #tpu.memory_space<vmem>>, vector<8x32xf32>,
    } else {
    }
    %c0 = arith.constant 0 : index
    %c0_1 = arith.constant 0 : index
    %c0_2 = arith.constant 0 : index
    %3 = vector.load %arg2[%c0, %c0_1, %c0_2] : memref<1x8x32xf32, #tpu.memory_space<vmem>>, vector<1x8x32xf32>
    %4 = vector.shape_cast %3 : vector<1x8x32xf32> to vector<8x32xf32>
    %c0_3 = arith.constant 0 : index
    %c0_4 = arith.constant 0 : index
    %c0_5 = arith.constant 0 : index
    %5 = vector.load %arg3[%c0_3, %c0_4, %c0_5] : memref<1x16x32xf32, #tpu.memory_space<vmem>>, vector<1x16x32xf32>
    %6 = vector.shape_cast %5 : vector<1x16x32xf32> to vector<16x32xf32>
    %7 = arith.truncf %4 : vector<8x32xf32> to vector<8x32xbf16>
    %8 = arith.truncf %6 : vector<16x32xf32> to vector<16x32xbf16>
    %c0_6 = arith.constant 0 : index
    %c0_7 = arith.constant 0 : index
    %c0_8 = arith.constant 0 : index
    %9 = vector.load %arg4[%c0_6, %c0_7, %c0_8] : memref<1x32x8xbf16, #tpu.memory_space<vmem>>, vector<1x32x8xbf16>
    %10 = vector.shape_cast %9 : vector<1x32x8xbf16> to vector<32x8xbf16>
    %cst = arith.constant dense<0.000000e+00> : vector<8x8xf32>
    %11 = tpu.matmul %7, %10, %cst {dimension_numbers = #tpu.dot_dimension_numbers<[1], [0], [0], [1], [0, 0, 1, 1], [], []>} : vector<8x32xbf16>, vector<32x8xbf16>, vector<8x8xf32> -> vector<8x8xf32>
    %c0_9 = arith.constant 0 : index
    %c0_10 = arith.constant 0 : index
    %c0_11 = arith.constant 0 : index
    %12 = vector.load %arg5[%c0_9, %c0_10, %c0_11] : memref<1x1x8xf32, #tpu.memory_space<vmem>>, vector<1x1x8xf32>
    %13 = vector.shape_cast %12 : vector<1x1x8xf32> to vector<1x8xf32>
    %14 = vector.broadcast %13 : vector<1x8xf32> to vector<8x8xf32>
    %15 = arith.addf %11, %14 : vector<8x8xf32>
    %cst_12 = arith.constant 0.353553385 : f32
    %16 = vector.broadcast %cst_12 : f32 to vector<8x8xf32>
    %17 = arith.mulf %15, %16 : vector<8x8xf32>
    %c0_13 = arith.constant 0 : index
    %c0_14 = arith.constant 0 : index
    %c0_15 = arith.constant 0 : index
    %18 = vector.load %arg6[%c0_13, %c0_14, %c0_15] : memref<1x32x8xbf16, #tpu.memory_space<vmem>>, vector<1x32x8xbf16>
    %19 = vector.shape_cast %18 : vector<1x32x8xbf16> to vector<32x8xbf16>
    %cst_16 = arith.constant dense<0.000000e+00> : vector<16x8xf32>
    %20 = tpu.matmul %8, %19, %cst_16 {dimension_numbers = #tpu.dot_dimension_numbers<[1], [0], [0], [1], [0, 0, 1, 1], [], []>} : vector<16x32xbf16>, vector<32x8xbf16>, vector<16x8xf32> -> vector<16x8xf32>
    %c0_17 = arith.constant 0 : index
    %c0_18 = arith.constant 0 : index
    %c0_19 = arith.constant 0 : index
    %21 = vector.load %arg7[%c0_17, %c0_18, %c0_19] : memref<1x1x8xf32, #tpu.memory_space<vmem>>, vector<1x1x8xf32>
    %22 = vector.shape_cast %21 : vector<1x1x8xf32> to vector<1x8xf32>
    %23 = vector.broadcast %22 : vector<1x8xf32> to vector<16x8xf32>
    %24 = arith.addf %20, %23 : vector<16x8xf32>
    %c0_20 = arith.constant 0 : index
    %c0_21 = arith.constant 0 : index
    %c0_22 = arith.constant 0 : index
    %25 = vector.load %arg8[%c0_20, %c0_21, %c0_22] : memref<1x32x8xbf16, #tpu.memory_space<vmem>>, vector<1x32x8xbf16>
    %26 = vector.shape_cast %25 : vector<1x32x8xbf16> to vector<32x8xbf16>
    %cst_23 = arith.constant dense<0.000000e+00> : vector<16x8xf32>
    %27 = tpu.matmul %8, %26, %cst_23 {dimension_numbers = #tpu.dot_dimension_numbers<[1], [0], [0], [1], [0, 0, 1, 1], [], []>} : vector<16x32xbf16>, vector<32x8xbf16>, vector<16x8xf32> -> vector<16x8xf32>
    %c0_24 = arith.constant 0 : index
    %c0_25 = arith.constant 0 : index
    %c0_26 = arith.constant 0 : index
    %28 = vector.load %arg9[%c0_24, %c0_25, %c0_26] : memref<1x1x8xf32, #tpu.memory_space<vmem>>, vector<1x1x8xf32>
    %29 = vector.shape_cast %28 : vector<1x1x8xf32> to vector<1x8xf32>
    %30 = vector.broadcast %29 : vector<1x8xf32> to vector<16x8xf32>
    %31 = arith.addf %27, %30 : vector<16x8xf32>
    %32 = arith.truncf %17 : vector<8x8xf32> to vector<8x8xbf16>
    %33 = arith.truncf %24 : vector<16x8xf32> to vector<16x8xbf16>
    %cst_27 = arith.constant dense<0.000000e+00> : vector<8x16xf32>
    %34 = tpu.matmul %32, %33, %cst_27 {dimension_numbers = #tpu.dot_dimension_numbers<[1], [1], [0], [0], [0, 0, 1, 0], [], []>} : vector<8x8xbf16>, vector<16x8xbf16>, vector<8x16xf32> -> vector<8x16xf32>
    %cst_28 = arith.constant dense<0xFF800000> : vector<8xf32>
    %35 = vector.multi_reduction <maximumf>, %34, %cst_28 [1] : vector<8x16xf32> to vector<8xf32>
    %36 = vector.shape_cast %35 : vector<8xf32> to vector<8x1xf32>
    %37 = vector.broadcast %36 : vector<8x1xf32> to vector<8x16xf32>
    %38 = arith.subf %34, %37 : vector<8x16xf32>
    %39 = math.exp %38 : vector<8x16xf32>
    %cst_29 = arith.constant dense<0.000000e+00> : vector<8xf32>
    %40 = vector.multi_reduction <add>, %39, %cst_29 [1] : vector<8x16xf32> to vector<8xf32>
    %41 = vector.shape_cast %40 : vector<8xf32> to vector<8x1xf32>
    %cst_30 = arith.constant 1.000000e+00 : f32
    %42 = vector.broadcast %cst_30 : f32 to vector<8x1xf32>
    %43 = arith.divf %42, %41 : vector<8x1xf32>
    %44 = vector.broadcast %43 : vector<8x1xf32> to vector<8x16xf32>
    %45 = arith.mulf %39, %44 : vector<8x16xf32>
    %46 = arith.truncf %45 : vector<8x16xf32> to vector<8x16xbf16>
    %47 = arith.truncf %31 : vector<16x8xf32> to vector<16x8xbf16>
    %cst_31 = arith.constant dense<0.000000e+00> : vector<8x8xf32>
    %48 = tpu.matmul %46, %47, %cst_31 {dimension_numbers = #tpu.dot_dimension_numbers<[1], [0], [0], [1], [0, 0, 1, 1], [], []>} : vector<8x16xbf16>, vector<16x8xbf16>, vector<8x8xf32> -> vector<8x8xf32>
    %c0_32 = arith.constant 0 : index
    %c0_33 = arith.constant 0 : index
    %49 = vector.load %arg15[%c0_32, %c0_33] : memref<8x32xf32, #tpu.memory_space<vmem>>, vector<8x32xf32>
    %50 = arith.truncf %48 : vector<8x8xf32> to vector<8x8xbf16>
    %c0_34 = arith.constant 0 : index
    %c0_35 = arith.constant 0 : index
    %c0_36 = arith.constant 0 : index
    %51 = vector.load %arg10[%c0_34, %c0_35, %c0_36] : memref<1x8x32xbf16, #tpu.memory_space<vmem>>, vector<1x8x32xbf16>
    %52 = vector.shape_cast %51 : vector<1x8x32xbf16> to vector<8x32xbf16>
    %cst_37 = arith.constant dense<0.000000e+00> : vector<8x32xf32>
    %53 = tpu.matmul %50, %52, %cst_37 {dimension_numbers = #tpu.dot_dimension_numbers<[1], [0], [0], [1], [0, 0, 1, 1], [], []>} : vector<8x8xbf16>, vector<8x32xbf16>, vector<8x32xf32> -> vector<8x32xf32>
    %54 = arith.addf %49, %53 : vector<8x32xf32>
    %c0_38 = arith.constant 0 : index
    %c0_39 = arith.constant 0 : index
    %55 = vector.load %arg15[%c0_38, %c0_39] : memref<8x32xf32, #tpu.memory_space<vmem>>, vector<8x32xf32>
    tpu.vector_store %arg15[%c0_38, %c0_39], %54 {strides = array<i32>} : memref<8x32xf32, #tpu.memory_space<vmem>>, vector<8x32xf32>,
    %c3_i32 = arith.constant 3 : i32
    %56 = arith.cmpi eq, %arg1, %c3_i32 : i32
    %57 = arith.extui %56 : i1 to i32
    %c0_i32_40 = arith.constant 0 : i32
    %58 = arith.cmpi ne, %57, %c0_i32_40 : i32
    scf.if %58 {
      %c0_41 = arith.constant 0 : index
      %c0_42 = arith.constant 0 : index
      %59 = vector.load %arg15[%c0_41, %c0_42] : memref<8x32xf32, #tpu.memory_space<vmem>>, vector<8x32xf32>
      %60 = arith.addf %4, %59 : vector<8x32xf32>
      %c0_43 = arith.constant 0 : index
      %c0_44 = arith.constant 0 : index
      %61 = vector.load %arg11[%c0_43, %c0_44] : memref<1x32xf32, #tpu.memory_space<vmem>>, vector<1x32xf32>
      %62 = vector.broadcast %61 : vector<1x32xf32> to vector<8x32xf32>
      %63 = arith.addf %60, %62 : vector<8x32xf32>
      %cst_45 = arith.constant dense<0.000000e+00> : vector<8xf32>
      %64 = vector.multi_reduction <add>, %63, %cst_45 [1] : vector<8x32xf32> to vector<8xf32>
      %65 = vector.shape_cast %64 : vector<8xf32> to vector<8x1xf32>
      %cst_46 = arith.constant 3.200000e+01 : f32
      %66 = vector.broadcast %cst_46 : f32 to vector<8x1xf32>
      %67 = arith.divf %65, %66 : vector<8x1xf32>
      %68 = vector.broadcast %67 : vector<8x1xf32> to vector<8x32xf32>
      %69 = arith.subf %63, %68 : vector<8x32xf32>
      %70 = arith.mulf %69, %69 : vector<8x32xf32>
      %cst_47 = arith.constant dense<0.000000e+00> : vector<8xf32>
      %71 = vector.multi_reduction <add>, %70, %cst_47 [1] : vector<8x32xf32> to vector<8xf32>
      %72 = vector.shape_cast %71 : vector<8xf32> to vector<8x1xf32>
      %cst_48 = arith.constant 3.200000e+01 : f32
      %73 = vector.broadcast %cst_48 : f32 to vector<8x1xf32>
      %74 = arith.divf %72, %73 : vector<8x1xf32>
      %cst_49 = arith.constant 9.99999974E-6 : f32
      %75 = vector.broadcast %cst_49 : f32 to vector<8x1xf32>
      %76 = arith.addf %74, %75 : vector<8x1xf32>
      %77 = math.rsqrt %76 : vector<8x1xf32>
      %78 = vector.broadcast %77 : vector<8x1xf32> to vector<8x32xf32>
      %79 = arith.mulf %69, %78 : vector<8x32xf32>
      %c0_50 = arith.constant 0 : index
      %c0_51 = arith.constant 0 : index
      %80 = vector.load %arg12[%c0_50, %c0_51] : memref<1x32xf32, #tpu.memory_space<vmem>>, vector<1x32xf32>
      %81 = vector.broadcast %80 : vector<1x32xf32> to vector<8x32xf32>
      %82 = arith.mulf %79, %81 : vector<8x32xf32>
      %c0_52 = arith.constant 0 : index
      %c0_53 = arith.constant 0 : index
      %83 = vector.load %arg13[%c0_52, %c0_53] : memref<1x32xf32, #tpu.memory_space<vmem>>, vector<1x32xf32>
      %84 = vector.broadcast %83 : vector<1x32xf32> to vector<8x32xf32>
      %85 = arith.addf %82, %84 : vector<8x32xf32>
      %c0_54 = arith.constant 0 : index
      %c0_55 = arith.constant 0 : index
      %c0_56 = arith.constant 0 : index
      %86 = vector.load %arg14[%c0_54, %c0_55, %c0_56] : memref<1x8x32xf32, #tpu.memory_space<vmem>>, vector<1x8x32xf32>
      %87 = vector.shape_cast %86 : vector<1x8x32xf32> to vector<8x32xf32>
      %88 = vector.shape_cast %85 : vector<8x32xf32> to vector<1x8x32xf32>
      tpu.vector_store %arg14[%c0_54, %c0_55, %c0_56], %88 {strides = array<i32>} : memref<1x8x32xf32, #tpu.memory_space<vmem>>, vector<1x8x32xf32>,
    } else {
    }
    return
  }
  func.func @transform_0(%arg0: i32, %arg1: i32) -> (i32, i32, i32) {
    %c0_i32 = arith.constant 0 : i32
    %c0_i32_0 = arith.constant 0 : i32
    %c0_i32_1 = arith.constant 0 : i32
    return %arg0, %c0_i32, %c0_i32_0 : i32, i32, i32
  }
  func.func @transform_1(%arg0: i32, %arg1: i32) -> (i32, i32, i32) {
    %c0_i32 = arith.constant 0 : i32
    %c0_i32_0 = arith.constant 0 : i32
    %c0_i32_1 = arith.constant 0 : i32
    return %arg0, %c0_i32, %c0_i32_0 : i32, i32, i32
  }
  func.func @transform_2(%arg0: i32, %arg1: i32) -> (i32, i32, i32) {
    %c0_i32 = arith.constant 0 : i32
    %c0_i32_0 = arith.constant 0 : i32
    %c0_i32_1 = arith.constant 0 : i32
    return %arg1, %c0_i32, %c0_i32_0 : i32, i32, i32
  }
  func.func @transform_3(%arg0: i32, %arg1: i32) -> (i32, i32, i32) {
    %c0_i32 = arith.constant 0 : i32
    %c0_i32_0 = arith.constant 0 : i32
    %c0_i32_1 = arith.constant 0 : i32
    return %arg1, %c0_i32, %c0_i32_0 : i32, i32, i32
  }
  func.func @transform_4(%arg0: i32, %arg1: i32) -> (i32, i32, i32) {
    %c0_i32 = arith.constant 0 : i32
    %c0_i32_0 = arith.constant 0 : i32
    %c0_i32_1 = arith.constant 0 : i32
    return %arg1, %c0_i32, %c0_i32_0 : i32, i32, i32
  }
  func.func @transform_5(%arg0: i32, %arg1: i32) -> (i32, i32, i32) {
    %c0_i32 = arith.constant 0 : i32
    %c0_i32_0 = arith.constant 0 : i32
    %c0_i32_1 = arith.constant 0 : i32
    return %arg1, %c0_i32, %c0_i32_0 : i32, i32, i32
  }
  func.func @transform_6(%arg0: i32, %arg1: i32) -> (i32, i32, i32) {
    %c0_i32 = arith.constant 0 : i32
    %c0_i32_0 = arith.constant 0 : i32
    %c0_i32_1 = arith.constant 0 : i32
    return %arg1, %c0_i32, %c0_i32_0 : i32, i32, i32
  }
  func.func @transform_7(%arg0: i32, %arg1: i32) -> (i32, i32, i32) {
    %c0_i32 = arith.constant 0 : i32
    %c0_i32_0 = arith.constant 0 : i32
    %c0_i32_1 = arith.constant 0 : i32
    return %arg1, %c0_i32, %c0_i32_0 : i32, i32, i32
  }
  func.func @transform_8(%arg0: i32, %arg1: i32) -> (i32, i32, i32) {
    %c0_i32 = arith.constant 0 : i32
    %c0_i32_0 = arith.constant 0 : i32
    %c0_i32_1 = arith.constant 0 : i32
    return %arg1, %c0_i32, %c0_i32_0 : i32, i32, i32
  }
  func.func @transform_9(%arg0: i32, %arg1: i32) -> (i32, i32) {
    %c0_i32 = arith.constant 0 : i32
    %c0_i32_0 = arith.constant 0 : i32
    %c0_i32_1 = arith.constant 0 : i32
    return %c0_i32, %c0_i32_0 : i32, i32
  }
  func.func @transform_10(%arg0: i32, %arg1: i32) -> (i32, i32) {
    %c0_i32 = arith.constant 0 : i32
    %c0_i32_0 = arith.constant 0 : i32
    %c0_i32_1 = arith.constant 0 : i32
    return %c0_i32, %c0_i32_0 : i32, i32
  }
  func.func @transform_11(%arg0: i32, %arg1: i32) -> (i32, i32) {
    %c0_i32 = arith.constant 0 : i32
    %c0_i32_0 = arith.constant 0 : i32
    %c0_i32_1 = arith.constant 0 : i32
    return %c0_i32, %c0_i32_0 : i32, i32
  }
  func.func @transform_12(%arg0: i32, %arg1: i32) -> (i32, i32, i32) {
    %c0_i32 = arith.constant 0 : i32
    %c0_i32_0 = arith.constant 0 : i32
    %c0_i32_1 = arith.constant 0 : i32
    return %arg0, %c0_i32, %c0_i32_0 : i32, i32, i32
  }
}

module attributes {stable_mosaic.version = 11 : i64} {
  func.func @_ffn_ln_kernel(%arg0: i32, %arg1: i32, %arg2: memref<8x32xf32, #tpu.memory_space<vmem>>, %arg3: memref<32x64xbf16, #tpu.memory_space<vmem>>, %arg4: memref<1x64xf32, #tpu.memory_space<vmem>>, %arg5: memref<64x32xbf16, #tpu.memory_space<vmem>>, %arg6: memref<1x32xf32, #tpu.memory_space<vmem>>, %arg7: memref<1x32xf32, #tpu.memory_space<vmem>>, %arg8: memref<1x32xf32, #tpu.memory_space<vmem>>, %arg9: memref<8x32xf32, #tpu.memory_space<vmem>>, %arg10: memref<8x32xf32, #tpu.memory_space<vmem>>) attributes {dimension_semantics = [#tpu.dimension_semantics<parallel>, #tpu.dimension_semantics<arbitrary>], iteration_bounds = array<i64: 2, 1>, scalar_prefetch = 0 : i64, scratch_operands = 1 : i64, tpu.core_type = #tpu.core_type<tc>, window_params = [{transform_indices = @transform_0, window_bounds = array<i64: 8, 32>}, {transform_indices = @transform_1, window_bounds = array<i64: 32, 64>}, {transform_indices = @transform_2, window_bounds = array<i64: 1, 64>}, {transform_indices = @transform_3, window_bounds = array<i64: 64, 32>}, {pipeline_mode = #tpu.pipeline_mode<synchronous>, transform_indices = @transform_4, window_bounds = array<i64: 1, 32>}, {pipeline_mode = #tpu.pipeline_mode<synchronous>, transform_indices = @transform_5, window_bounds = array<i64: 1, 32>}, {pipeline_mode = #tpu.pipeline_mode<synchronous>, transform_indices = @transform_6, window_bounds = array<i64: 1, 32>}, {transform_indices = @transform_7, window_bounds = array<i64: 8, 32>}]} {
    %c0_i32 = arith.constant 0 : i32
    %0 = arith.cmpi eq, %arg1, %c0_i32 : i32
    %1 = arith.extui %0 : i1 to i32
    %c0_i32_0 = arith.constant 0 : i32
    %2 = arith.cmpi ne, %1, %c0_i32_0 : i32
    scf.if %2 {
      %cst_16 = arith.constant 0.000000e+00 : f32
      %21 = vector.broadcast %cst_16 : f32 to vector<8x32xf32>
      %c0_17 = arith.constant 0 : index
      %c0_18 = arith.constant 0 : index
      %22 = vector.load %arg10[%c0_17, %c0_18] : memref<8x32xf32, #tpu.memory_space<vmem>>, vector<8x32xf32>
      tpu.vector_store %arg10[%c0_17, %c0_18], %21 {strides = array<i32>} : memref<8x32xf32, #tpu.memory_space<vmem>>, vector<8x32xf32>,
    } else {
    }
    %c0 = arith.constant 0 : index
    %c0_1 = arith.constant 0 : index
    %3 = vector.load %arg2[%c0, %c0_1] : memref<8x32xf32, #tpu.memory_space<vmem>>, vector<8x32xf32>
    %4 = arith.truncf %3 : vector<8x32xf32> to vector<8x32xbf16>
    %c0_2 = arith.constant 0 : index
    %c0_3 = arith.constant 0 : index
    %5 = vector.load %arg3[%c0_2, %c0_3] : memref<32x64xbf16, #tpu.memory_space<vmem>>, vector<32x64xbf16>
    %cst = arith.constant dense<0.000000e+00> : vector<8x64xf32>
    %6 = tpu.matmul %4, %5, %cst {dimension_numbers = #tpu.dot_dimension_numbers<[1], [0], [0], [1], [0, 0, 1, 1], [], []>} : vector<8x32xbf16>, vector<32x64xbf16>, vector<8x64xf32> -> vector<8x64xf32>
    %c0_4 = arith.constant 0 : index
    %c0_5 = arith.constant 0 : index
    %7 = vector.load %arg4[%c0_4, %c0_5] : memref<1x64xf32, #tpu.memory_space<vmem>>, vector<1x64xf32>
    %8 = vector.broadcast %7 : vector<1x64xf32> to vector<8x64xf32>
    %9 = arith.addf %6, %8 : vector<8x64xf32>
    %cst_6 = arith.constant 0.000000e+00 : f32
    %10 = vector.broadcast %cst_6 : f32 to vector<8x64xf32>
    %11 = arith.maximumf %9, %10 : vector<8x64xf32>
    %c0_7 = arith.constant 0 : index
    %c0_8 = arith.constant 0 : index
    %12 = vector.load %arg10[%c0_7, %c0_8] : memref<8x32xf32, #tpu.memory_space<vmem>>, vector<8x32xf32>
    %13 = arith.truncf %11 : vector<8x64xf32> to vector<8x64xbf16>
    %c0_9 = arith.constant 0 : index
    %c0_10 = arith.constant 0 : index
    %14 = vector.load %arg5[%c0_9, %c0_10] : memref<64x32xbf16, #tpu.memory_space<vmem>>, vector<64x32xbf16>
    %cst_11 = arith.constant dense<0.000000e+00> : vector<8x32xf32>
    %15 = tpu.matmul %13, %14, %cst_11 {dimension_numbers = #tpu.dot_dimension_numbers<[1], [0], [0], [1], [0, 0, 1, 1], [], []>} : vector<8x64xbf16>, vector<64x32xbf16>, vector<8x32xf32> -> vector<8x32xf32>
    %16 = arith.addf %12, %15 : vector<8x32xf32>
    %c0_12 = arith.constant 0 : index
    %c0_13 = arith.constant 0 : index
    %17 = vector.load %arg10[%c0_12, %c0_13] : memref<8x32xf32, #tpu.memory_space<vmem>>, vector<8x32xf32>
    tpu.vector_store %arg10[%c0_12, %c0_13], %16 {strides = array<i32>} : memref<8x32xf32, #tpu.memory_space<vmem>>, vector<8x32xf32>,
    %c0_i32_14 = arith.constant 0 : i32
    %18 = arith.cmpi eq, %arg1, %c0_i32_14 : i32
    %19 = arith.extui %18 : i1 to i32
    %c0_i32_15 = arith.constant 0 : i32
    %20 = arith.cmpi ne, %19, %c0_i32_15 : i32
    scf.if %20 {
      %c0_16 = arith.constant 0 : index
      %c0_17 = arith.constant 0 : index
      %21 = vector.load %arg10[%c0_16, %c0_17] : memref<8x32xf32, #tpu.memory_space<vmem>>, vector<8x32xf32>
      %22 = arith.addf %3, %21 : vector<8x32xf32>
      %c0_18 = arith.constant 0 : index
      %c0_19 = arith.constant 0 : index
      %23 = vector.load %arg6[%c0_18, %c0_19] : memref<1x32xf32, #tpu.memory_space<vmem>>, vector<1x32xf32>
      %24 = vector.broadcast %23 : vector<1x32xf32> to vector<8x32xf32>
      %25 = arith.addf %22, %24 : vector<8x32xf32>
      %cst_20 = arith.constant dense<0.000000e+00> : vector<8xf32>
      %26 = vector.multi_reduction <add>, %25, %cst_20 [1] : vector<8x32xf32> to vector<8xf32>
      %27 = vector.shape_cast %26 : vector<8xf32> to vector<8x1xf32>
      %cst_21 = arith.constant 3.200000e+01 : f32
      %28 = vector.broadcast %cst_21 : f32 to vector<8x1xf32>
      %29 = arith.divf %27, %28 : vector<8x1xf32>
      %30 = vector.broadcast %29 : vector<8x1xf32> to vector<8x32xf32>
      %31 = arith.subf %25, %30 : vector<8x32xf32>
      %32 = arith.mulf %31, %31 : vector<8x32xf32>
      %cst_22 = arith.constant dense<0.000000e+00> : vector<8xf32>
      %33 = vector.multi_reduction <add>, %32, %cst_22 [1] : vector<8x32xf32> to vector<8xf32>
      %34 = vector.shape_cast %33 : vector<8xf32> to vector<8x1xf32>
      %cst_23 = arith.constant 3.200000e+01 : f32
      %35 = vector.broadcast %cst_23 : f32 to vector<8x1xf32>
      %36 = arith.divf %34, %35 : vector<8x1xf32>
      %cst_24 = arith.constant 9.99999974E-6 : f32
      %37 = vector.broadcast %cst_24 : f32 to vector<8x1xf32>
      %38 = arith.addf %36, %37 : vector<8x1xf32>
      %39 = math.rsqrt %38 : vector<8x1xf32>
      %40 = vector.broadcast %39 : vector<8x1xf32> to vector<8x32xf32>
      %41 = arith.mulf %31, %40 : vector<8x32xf32>
      %c0_25 = arith.constant 0 : index
      %c0_26 = arith.constant 0 : index
      %42 = vector.load %arg7[%c0_25, %c0_26] : memref<1x32xf32, #tpu.memory_space<vmem>>, vector<1x32xf32>
      %43 = vector.broadcast %42 : vector<1x32xf32> to vector<8x32xf32>
      %44 = arith.mulf %41, %43 : vector<8x32xf32>
      %c0_27 = arith.constant 0 : index
      %c0_28 = arith.constant 0 : index
      %45 = vector.load %arg8[%c0_27, %c0_28] : memref<1x32xf32, #tpu.memory_space<vmem>>, vector<1x32xf32>
      %46 = vector.broadcast %45 : vector<1x32xf32> to vector<8x32xf32>
      %47 = arith.addf %44, %46 : vector<8x32xf32>
      %c0_29 = arith.constant 0 : index
      %c0_30 = arith.constant 0 : index
      %48 = vector.load %arg9[%c0_29, %c0_30] : memref<8x32xf32, #tpu.memory_space<vmem>>, vector<8x32xf32>
      tpu.vector_store %arg9[%c0_29, %c0_30], %47 {strides = array<i32>} : memref<8x32xf32, #tpu.memory_space<vmem>>, vector<8x32xf32>,
    } else {
    }
    return
  }
  func.func @transform_0(%arg0: i32, %arg1: i32) -> (i32, i32) {
    %c0_i32 = arith.constant 0 : i32
    %c0_i32_0 = arith.constant 0 : i32
    return %arg0, %c0_i32 : i32, i32
  }
  func.func @transform_1(%arg0: i32, %arg1: i32) -> (i32, i32) {
    %c0_i32 = arith.constant 0 : i32
    %c0_i32_0 = arith.constant 0 : i32
    return %c0_i32, %arg1 : i32, i32
  }
  func.func @transform_2(%arg0: i32, %arg1: i32) -> (i32, i32) {
    %c0_i32 = arith.constant 0 : i32
    %c0_i32_0 = arith.constant 0 : i32
    return %c0_i32, %arg1 : i32, i32
  }
  func.func @transform_3(%arg0: i32, %arg1: i32) -> (i32, i32) {
    %c0_i32 = arith.constant 0 : i32
    %c0_i32_0 = arith.constant 0 : i32
    return %arg1, %c0_i32 : i32, i32
  }
  func.func @transform_4(%arg0: i32, %arg1: i32) -> (i32, i32) {
    %c0_i32 = arith.constant 0 : i32
    %c0_i32_0 = arith.constant 0 : i32
    %c0_i32_1 = arith.constant 0 : i32
    return %c0_i32, %c0_i32_0 : i32, i32
  }
  func.func @transform_5(%arg0: i32, %arg1: i32) -> (i32, i32) {
    %c0_i32 = arith.constant 0 : i32
    %c0_i32_0 = arith.constant 0 : i32
    %c0_i32_1 = arith.constant 0 : i32
    return %c0_i32, %c0_i32_0 : i32, i32
  }
  func.func @transform_6(%arg0: i32, %arg1: i32) -> (i32, i32) {
    %c0_i32 = arith.constant 0 : i32
    %c0_i32_0 = arith.constant 0 : i32
    %c0_i32_1 = arith.constant 0 : i32
    return %c0_i32, %c0_i32_0 : i32, i32
  }
  func.func @transform_7(%arg0: i32, %arg1: i32) -> (i32, i32) {
    %c0_i32 = arith.constant 0 : i32
    %c0_i32_0 = arith.constant 0 : i32
    return %arg0, %c0_i32 : i32, i32
  }
}

</mosaic_0001>

<llo_original>
// kernel: decoder_layer.3
$region0: #{decoder_layer.3}
  #allocation0 [shape = 'u32[]', space=smem, size = 0x4, offset = 0x4, fixed_abs, tag = 'smem constant byte address 0x4 - core index']
  #allocation1 [shape = 'u32[144,128]{1,0:T(1,128)}', space=vmem, size = 0x12000, scoped, tag = 'internal scratch']
  #allocation2 [shape = 'f32[8,32]{1,0:T(8,128)}', space=vmem, size = 0x1000, scoped, tag = 'scratch operand']
  %s0 = inlined_call_operand.hbm [shape: f32[2,8,32], index: 0, kind: input, shape index: {}, may-alias: {0,1}]
  %s1 = inlined_call_operand.hbm [shape: f32[2,8,32], index: 1, kind: input, shape index: {}, may-alias: {0,1}]
  %s2 = inlined_call_operand.hbm [shape: bf16[4,32,8], index: 2, kind: input, shape index: {}]
  %s3 = inlined_call_operand.hbm [shape: f32[4,1,8], index: 3, kind: input, shape index: {}]
  %s4 = inlined_call_operand.hbm [shape: bf16[4,32,8], index: 4, kind: input, shape index: {}]
  %s5 = inlined_call_operand.hbm [shape: f32[4,1,8], index: 5, kind: input, shape index: {}]
  %s6 = inlined_call_operand.hbm [shape: bf16[4,32,8], index: 6, kind: input, shape index: {}]
  %s7 = inlined_call_operand.hbm [shape: f32[4,1,8], index: 7, kind: input, shape index: {}]
  %s8 = inlined_call_operand.hbm [shape: bf16[4,8,32], index: 8, kind: input, shape index: {}]
  %s9 = inlined_call_operand.hbm [shape: f32[1,32], index: 9, kind: input, shape index: {}]
  %s10 = inlined_call_operand.hbm [shape: f32[1,32], index: 10, kind: input, shape index: {}]
  %s11 = inlined_call_operand.hbm [shape: f32[1,32], index: 11, kind: input, shape index: {}]
  %s12 = inlined_call_operand.hbm [shape: f32[2,8,32], index: 12, kind: output, shape index: {}]
  %s13 = sld [smem:[#allocation0]]
  $region137: #{decoder_layer.3} parent=0
    _
  %s15 = ssub.s32 1, %s13
  %s16 = scalar_select 0, %s15, %s13
  $region1: #{decoder_layer.3} parent=0
    #allocation3 [shape = 'u8[8192]{0}', space=vmem, size = 0x2000, scoped, tag = 'input window, operand 0']
    #allocation4 [shape = 's32[2]{0}', space=sflag, size = 0x8, scoped, tag = 'scoped memory for decoder_layer.3']
    #allocation5 [shape = 's32[2]{0}', space=sflag, size = 0x8, scoped, tag = 'scoped memory for decoder_layer.3']
    #allocation6 [shape = 'u8[8192]{0}', space=vmem, size = 0x2000, scoped, tag = 'input window, operand 1']
    #allocation7 [shape = 's32[2]{0}', space=sflag, size = 0x8, scoped, tag = 'scoped memory for decoder_layer.3']
    #allocation8 [shape = 'u8[16384]{0}', space=vmem, size = 0x4000, scoped, tag = 'input window, operand 2']
    #allocation9 [shape = 'u8[1024]{0}', space=vmem, size = 0x400, scoped, tag = 'input window, operand 3']
    #allocation10 [shape = 's32[2]{0}', space=sflag, size = 0x8, scoped, tag = 'scoped memory for decoder_layer.3']
    #allocation11 [shape = 'u8[16384]{0}', space=vmem, size = 0x4000, scoped, tag = 'input window, operand 4']
    #allocation12 [shape = 'u8[1024]{0}', space=vmem, size = 0x400, scoped, tag = 'input window, operand 5']
    #allocation13 [shape = 's32[2]{0}', space=sflag, size = 0x8, scoped, tag = 'scoped memory for decoder_layer.3']
    #allocation14 [shape = 'u8[16384]{0}', space=vmem, size = 0x4000, scoped, tag = 'input window, operand 6']
    #allocation15 [shape = 'u8[1024]{0}', space=vmem, size = 0x400, scoped, tag = 'input window, operand 7']
    #allocation16 [shape = 's32[2]{0}', space=sflag, size = 0x8, scoped, tag = 'scoped memory for decoder_layer.3']
    #allocation17 [shape = 'u8[4096]{0}', space=vmem, size = 0x1000, scoped, tag = 'input window, operand 8']
    #allocation18 [shape = 'u8[512]{0}', space=vmem, size = 0x400, scoped, tag = 'input window, operand 9, single buffered']
    #allocation19 [shape = 's32[1]{0}', space=sflag, size = 0x4, scoped, tag = 'scoped memory for decoder_layer.3']
    #allocation20 [shape = 'u8[512]{0}', space=vmem, size = 0x400, scoped, tag = 'input window, operand 10, single buffered']
    #allocation21 [shape = 'u8[512]{0}', space=vmem, size = 0x400, scoped, tag = 'input window, operand 11, single buffered']
    #allocation22 [shape = 's32[1]{0}', space=sflag, size = 0x4, scoped, tag = 'scoped memory for decoder_layer.3']
    #allocation23 [shape = 'u8[8192]{0}', space=vmem, size = 0x2000, scoped, tag = 'output window, operand 0']
    %17 = vsyncpa [#allocation4], 0
    %s18 = scalar_lea.sflag [#allocation4], 1
    %19 = vsyncpa %s18, 0
    %20 = vsyncpa [#allocation7], 0
    %s21 = scalar_lea.sflag [#allocation7], 1
    %22 = vsyncpa %s21, 0
    %23 = vsyncpa [#allocation10], 0
    %s24 = scalar_lea.sflag [#allocation10], 1
    %25 = vsyncpa %s24, 0
    %26 = vsyncpa [#allocation13], 0
    %s27 = scalar_lea.sflag [#allocation13], 1
    %28 = vsyncpa %s27, 0
    %29 = vsyncpa [#allocation16], 0
    %s30 = scalar_lea.sflag [#allocation16], 1
    %31 = vsyncpa %s30, 0
    %32 = vsyncpa [#allocation19], 0
    %33 = vsyncpa [#allocation22], 0
    %34 = vsyncpa [#allocation5], 0
    %s35 = scalar_lea.sflag [#allocation5], 1
    %36 = vsyncpa %s35, 0
    loop: start=0, step=1, limit=10
    $region2: #{decoder_layer.3} parent=1 // loop_pre_header
      _
    $region3: #{decoder_layer.3} parent=1 // loop_header
      %s38 = sphi 0, %s42
      %p39 = scmp.ge.s32.totalorder %s38, 10
      %s45 = sphi 0, %s57
      %s46 = sphi 0, %s53
      %s47 = sphi 0, %s45
      %s48 = sphi 0, %s46
      %s49 = sphi 0, %s47
      %s50 = sphi 0, %s48
      %s60 = sphi 0, %s62
      %s63 = sphi 0, %s60
      %s64 = sphi 0, %s63
      %s80 = sphi 0, %s64
      %s86 = sphi 0, %s88
      %s89 = sphi 0, %s86
      %s90 = sphi 0, %s89
      %s106 = sphi 0, %s90
      %s112 = sphi 0, %s114
      %s115 = sphi 0, %s112
      %s116 = sphi 0, %s115
      %s132 = sphi 0, %s116
      %s138 = sphi 0, %s140
      %s141 = sphi 0, %s138
      %s142 = sphi 0, %s141
      %s158 = sphi 0, %s142
      %s164 = sphi 0, %s166
      %s167 = sphi 0, %s164
      %s168 = sphi 0, %s167
      %s184 = sphi 0, %s168
      %s190 = sphi 0, %s192
      %s193 = sphi 0, %s190
      %s194 = sphi 0, %s193
      %s210 = sphi 0, %s194
      %s216 = sphi 0, %s218
      %s219 = sphi 0, %s216
      %s220 = sphi 0, %s219
      %s236 = sphi 0, %s220
      %s242 = sphi 0, %s244
      %s245 = sphi 0, %s242
      %s246 = sphi 0, %s245
      %s262 = sphi 0, %s246
      %s268 = sphi 0, %s270
      %s271 = sphi 0, %s268
      %s272 = sphi 0, %s271
      %s288 = sphi 0, %s272
      %s292 = sphi 0, %s292
      %s294 = sphi 0, %s292
      %s295 = sphi 0, %s294
      %s309 = sphi 0, %s295
      %s313 = sphi 0, %s313
      %s315 = sphi 0, %s313
      %s316 = sphi 0, %s315
      %s330 = sphi 0, %s316
      %s334 = sphi 0, %s334
      %s336 = sphi 0, %s334
      %s337 = sphi 0, %s336
      %s351 = sphi 0, %s337
      %s357 = sphi 0, %s359
      %s360 = sphi 0, %s357
      %s361 = sphi 0, %s360
      %s377 = sphi 0, %s361
    $region4: #{decoder_layer.3} parent=1 // loop_header_branch
      %41 = sbr.rel (%p39) target = $region8
    $region5: #{decoder_layer.3} parent=1 // loop_body
      %s43 = ssub.s32 %s38, 1
      %s44 = ssub.s32 %s38, 2
      %s51 = sadd.s32 1, %s46
      %p52 = scmp.ge.s32.totalorder %s51, 4
      %s53 = scalar_select %p52, 0, %s51
      %s54 = sadd.s32 1, %s45
      %s55 = scalar_select %p52, %s54, %s45
      %p56 = scmp.ge.s32.totalorder %s55, 2
      %s57 = scalar_select %p56, 0, %s55
      %s58 = ssub.s32 %s45, %s57
      %p59 = scmp.eq.s32.totalorder %s58, 0
      %s61 = sadd.s32 %s60, 1
      %s62 = scalar_select %p59, %s60, %s61
      %p65 = pneg %p59
      %p66 = scmp.eq.s32.totalorder %s38, 7
      %p67 = por %p65, %p66
      %p68 = scmp.ne.s32.totalorder %s60, %s63
      %p69 = scmp.eq.s32.totalorder %s38, 0
      %p70 = por %p68, %p69
      %p71 = scmp.ne.s32.totalorder %s60, %s63
      %p72 = scmp.eq.s32.totalorder %s43, 7
      %p73 = por %p71, %p72
      %p74 = scmp.ne.s32.totalorder %s63, %s64
      %p75 = scmp.eq.s32.totalorder %s43, 0
      %p76 = por %p74, %p75
      %p77 = scmp.ne.s32.totalorder %s63, %s64
      %p78 = scmp.eq.s32.totalorder %s44, 7
      %p79 = por %p77, %p78
      %p81 = scmp.ne.s32.totalorder %s64, %s80
      %p82 = scmp.eq.s32.totalorder %s44, 0
      %p83 = por %p81, %p82
      %s84 = ssub.s32 %s45, %s57
      %p85 = scmp.eq.s32.totalorder %s84, 0
      %s87 = sadd.s32 %s86, 1
      %s88 = scalar_select %p85, %s86, %s87
      %p91 = pneg %p85
      %p92 = scmp.eq.s32.totalorder %s38, 7
      %p93 = por %p91, %p92
      %p94 = scmp.ne.s32.totalorder %s86, %s89
      %p95 = scmp.eq.s32.totalorder %s38, 0
      %p96 = por %p94, %p95
      %p97 = scmp.ne.s32.totalorder %s86, %s89
      %p98 = scmp.eq.s32.totalorder %s43, 7
      %p99 = por %p97, %p98
      %p100 = scmp.ne.s32.totalorder %s89, %s90
      %p101 = scmp.eq.s32.totalorder %s43, 0
      %p102 = por %p100, %p101
      %p103 = scmp.ne.s32.totalorder %s89, %s90
      %p104 = scmp.eq.s32.totalorder %s44, 7
      %p105 = por %p103, %p104
      %p107 = scmp.ne.s32.totalorder %s90, %s106
      %p108 = scmp.eq.s32.totalorder %s44, 0
      %p109 = por %p107, %p108
      %s110 = ssub.s32 %s46, %s53
      %p111 = scmp.eq.s32.totalorder %s110, 0
      %s113 = sadd.s32 %s112, 1
      %s114 = scalar_select %p111, %s112, %s113
      %p117 = pneg %p111
      %p118 = scmp.eq.s32.totalorder %s38, 7
      %p119 = por %p117, %p118
      %p120 = scmp.ne.s32.totalorder %s112, %s115
      %p121 = scmp.eq.s32.totalorder %s38, 0
      %p122 = por %p120, %p121
      %p123 = scmp.ne.s32.totalorder %s112, %s115
      %p124 = scmp.eq.s32.totalorder %s43, 7
      %p125 = por %p123, %p124
      %p126 = scmp.ne.s32.totalorder %s115, %s116
      %p127 = scmp.eq.s32.totalorder %s43, 0
      %p128 = por %p126, %p127
      %p129 = scmp.ne.s32.totalorder %s115, %s116
      %p130 = scmp.eq.s32.totalorder %s44, 7
      %p131 = por %p129, %p130
      %p133 = scmp.ne.s32.totalorder %s116, %s132
      %p134 = scmp.eq.s32.totalorder %s44, 0
      %p135 = por %p133, %p134
      %s136 = ssub.s32 %s46, %s53
      %p137 = scmp.eq.s32.totalorder %s136, 0
      %s139 = sadd.s32 %s138, 1
      %s140 = scalar_select %p137, %s138, %s139
      %p143 = pneg %p137
      %p144 = scmp.eq.s32.totalorder %s38, 7
      %p145 = por %p143, %p144
      %p146 = scmp.ne.s32.totalorder %s138, %s141
      %p147 = scmp.eq.s32.totalorder %s38, 0
      %p148 = por %p146, %p147
      %p149 = scmp.ne.s32.totalorder %s138, %s141
      %p150 = scmp.eq.s32.totalorder %s43, 7
      %p151 = por %p149, %p150
      %p152 = scmp.ne.s32.totalorder %s141, %s142
      %p153 = scmp.eq.s32.totalorder %s43, 0
      %p154 = por %p152, %p153
      %p155 = scmp.ne.s32.totalorder %s141, %s142
      %p156 = scmp.eq.s32.totalorder %s44, 7
      %p157 = por %p155, %p156
      %p159 = scmp.ne.s32.totalorder %s142, %s158
      %p160 = scmp.eq.s32.totalorder %s44, 0
      %p161 = por %p159, %p160
      %s162 = ssub.s32 %s46, %s53
      %p163 = scmp.eq.s32.totalorder %s162, 0
      %s165 = sadd.s32 %s164, 1
      %s166 = scalar_select %p163, %s164, %s165
      %p169 = pneg %p163
      %p170 = scmp.eq.s32.totalorder %s38, 7
      %p171 = por %p169, %p170
      %p172 = scmp.ne.s32.totalorder %s164, %s167
      %p173 = scmp.eq.s32.totalorder %s38, 0
      %p174 = por %p172, %p173
      %p175 = scmp.ne.s32.totalorder %s164, %s167
      %p176 = scmp.eq.s32.totalorder %s43, 7
      %p177 = por %p175, %p176
      %p178 = scmp.ne.s32.totalorder %s167, %s168
      %p179 = scmp.eq.s32.totalorder %s43, 0
      %p180 = por %p178, %p179
      %p181 = scmp.ne.s32.totalorder %s167, %s168
      %p182 = scmp.eq.s32.totalorder %s44, 7
      %p183 = por %p181, %p182
      %p185 = scmp.ne.s32.totalorder %s168, %s184
      %p186 = scmp.eq.s32.totalorder %s44, 0
      %p187 = por %p185, %p186
      %s188 = ssub.s32 %s46, %s53
      %p189 = scmp.eq.s32.totalorder %s188, 0
      %s191 = sadd.s32 %s190, 1
      %s192 = scalar_select %p189, %s190, %s191
      %p195 = pneg %p189
      %p196 = scmp.eq.s32.totalorder %s38, 7
      %p197 = por %p195, %p196
      %p198 = scmp.ne.s32.totalorder %s190, %s193
      %p199 = scmp.eq.s32.totalorder %s38, 0
      %p200 = por %p198, %p199
      %p201 = scmp.ne.s32.totalorder %s190, %s193
      %p202 = scmp.eq.s32.totalorder %s43, 7
      %p203 = por %p201, %p202
      %p204 = scmp.ne.s32.totalorder %s193, %s194
      %p205 = scmp.eq.s32.totalorder %s43, 0
      %p206 = por %p204, %p205
      %p207 = scmp.ne.s32.totalorder %s193, %s194
      %p208 = scmp.eq.s32.totalorder %s44, 7
      %p209 = por %p207, %p208
      %p211 = scmp.ne.s32.totalorder %s194, %s210
      %p212 = scmp.eq.s32.totalorder %s44, 0
      %p213 = por %p211, %p212
      %s214 = ssub.s32 %s46, %s53
      %p215 = scmp.eq.s32.totalorder %s214, 0
      %s217 = sadd.s32 %s216, 1
      %s218 = scalar_select %p215, %s216, %s217
      %p221 = pneg %p215
      %p222 = scmp.eq.s32.totalorder %s38, 7
      %p223 = por %p221, %p222
      %p224 = scmp.ne.s32.totalorder %s216, %s219
      %p225 = scmp.eq.s32.totalorder %s38, 0
      %p226 = por %p224, %p225
      %p227 = scmp.ne.s32.totalorder %s216, %s219
      %p228 = scmp.eq.s32.totalorder %s43, 7
      %p229 = por %p227, %p228
      %p230 = scmp.ne.s32.totalorder %s219, %s220
      %p231 = scmp.eq.s32.totalorder %s43, 0
      %p232 = por %p230, %p231
      %p233 = scmp.ne.s32.totalorder %s219, %s220
      %p234 = scmp.eq.s32.totalorder %s44, 7
      %p235 = por %p233, %p234
      %p237 = scmp.ne.s32.totalorder %s220, %s236
      %p238 = scmp.eq.s32.totalorder %s44, 0
      %p239 = por %p237, %p238
      %s240 = ssub.s32 %s46, %s53
      %p241 = scmp.eq.s32.totalorder %s240, 0
      %s243 = sadd.s32 %s242, 1
      %s244 = scalar_select %p241, %s242, %s243
      %p247 = pneg %p241
      %p248 = scmp.eq.s32.totalorder %s38, 7
      %p249 = por %p247, %p248
      %p250 = scmp.ne.s32.totalorder %s242, %s245
      %p251 = scmp.eq.s32.totalorder %s38, 0
      %p252 = por %p250, %p251
      %p253 = scmp.ne.s32.totalorder %s242, %s245
      %p254 = scmp.eq.s32.totalorder %s43, 7
      %p255 = por %p253, %p254
      %p256 = scmp.ne.s32.totalorder %s245, %s246
      %p257 = scmp.eq.s32.totalorder %s43, 0
      %p258 = por %p256, %p257
      %p259 = scmp.ne.s32.totalorder %s245, %s246
      %p260 = scmp.eq.s32.totalorder %s44, 7
      %p261 = por %p259, %p260
      %p263 = scmp.ne.s32.totalorder %s246, %s262
      %p264 = scmp.eq.s32.totalorder %s44, 0
      %p265 = por %p263, %p264
      %s266 = ssub.s32 %s46, %s53
      %p267 = scmp.eq.s32.totalorder %s266, 0
      %s269 = sadd.s32 %s268, 1
      %s270 = scalar_select %p267, %s268, %s269
      %p273 = pneg %p267
      %p274 = scmp.eq.s32.totalorder %s38, 7
      %p275 = por %p273, %p274
      %p276 = scmp.ne.s32.totalorder %s268, %s271
      %p277 = scmp.eq.s32.totalorder %s38, 0
      %p278 = por %p276, %p277
      %p279 = scmp.ne.s32.totalorder %s268, %s271
      %p280 = scmp.eq.s32.totalorder %s43, 7
      %p281 = por %p279, %p280
      %p282 = scmp.ne.s32.totalorder %s271, %s272
      %p283 = scmp.eq.s32.totalorder %s43, 0
      %p284 = por %p282, %p283
      %p285 = scmp.ne.s32.totalorder %s271, %s272
      %p286 = scmp.eq.s32.totalorder %s44, 7
      %p287 = por %p285, %p286
      %p289 = scmp.ne.s32.totalorder %s272, %s288
      %p290 = scmp.eq.s32.totalorder %s44, 0
      %p291 = por %p289, %p290
      %s293 = sadd.s32 %s292, 1
      %p296 = scmp.eq.s32.totalorder %s38, 7
      %p297 = scmp.ne.s32.totalorder %s292, %s294
      %p298 = scmp.eq.s32.totalorder %s38, 0
      %p299 = por %p297, %p298
      %p300 = scmp.ne.s32.totalorder %s292, %s294
      %p301 = scmp.eq.s32.totalorder %s43, 7
      %p302 = por %p300, %p301
      %p303 = scmp.ne.s32.totalorder %s294, %s295
      %p304 = scmp.eq.s32.totalorder %s43, 0
      %p305 = por %p303, %p304
      %p306 = scmp.ne.s32.totalorder %s294, %s295
      %p307 = scmp.eq.s32.totalorder %s44, 7
      %p308 = por %p306, %p307
      %p310 = scmp.ne.s32.totalorder %s295, %s309
      %p311 = scmp.eq.s32.totalorder %s44, 0
      %p312 = por %p310, %p311
      %s314 = sadd.s32 %s313, 1
      %p317 = scmp.eq.s32.totalorder %s38, 7
      %p318 = scmp.ne.s32.totalorder %s313, %s315
      %p319 = scmp.eq.s32.totalorder %s38, 0
      %p320 = por %p318, %p319
      %p321 = scmp.ne.s32.totalorder %s313, %s315
      %p322 = scmp.eq.s32.totalorder %s43, 7
      %p323 = por %p321, %p322
      %p324 = scmp.ne.s32.totalorder %s315, %s316
      %p325 = scmp.eq.s32.totalorder %s43, 0
      %p326 = por %p324, %p325
      %p327 = scmp.ne.s32.totalorder %s315, %s316
      %p328 = scmp.eq.s32.totalorder %s44, 7
      %p329 = por %p327, %p328
      %p331 = scmp.ne.s32.totalorder %s316, %s330
      %p332 = scmp.eq.s32.totalorder %s44, 0
      %p333 = por %p331, %p332
      %s335 = sadd.s32 %s334, 1
      %p338 = scmp.eq.s32.totalorder %s38, 7
      %p339 = scmp.ne.s32.totalorder %s334, %s336
      %p340 = scmp.eq.s32.totalorder %s38, 0
      %p341 = por %p339, %p340
      %p342 = scmp.ne.s32.totalorder %s334, %s336
      %p343 = scmp.eq.s32.totalorder %s43, 7
      %p344 = por %p342, %p343
      %p345 = scmp.ne.s32.totalorder %s336, %s337
      %p346 = scmp.eq.s32.totalorder %s43, 0
      %p347 = por %p345, %p346
      %p348 = scmp.ne.s32.totalorder %s336, %s337
      %p349 = scmp.eq.s32.totalorder %s44, 7
      %p350 = por %p348, %p349
      %p352 = scmp.ne.s32.totalorder %s337, %s351
      %p353 = scmp.eq.s32.totalorder %s44, 0
      %p354 = por %p352, %p353
      %s355 = ssub.s32 %s45, %s57
      %p356 = scmp.eq.s32.totalorder %s355, 0
      %s358 = sadd.s32 %s357, 1
      %s359 = scalar_select %p356, %s357, %s358
      %p362 = pneg %p356
      %p363 = scmp.eq.s32.totalorder %s38, 7
      %p364 = por %p362, %p363
      %p365 = scmp.ne.s32.totalorder %s357, %s360
      %p366 = scmp.eq.s32.totalorder %s38, 0
      %p367 = por %p365, %p366
      %p368 = scmp.ne.s32.totalorder %s357, %s360
      %p369 = scmp.eq.s32.totalorder %s43, 7
      %p370 = por %p368, %p369
      %p371 = scmp.ne.s32.totalorder %s360, %s361
      %p372 = scmp.eq.s32.totalorder %s43, 0
      %p373 = por %p371, %p372
      %p374 = scmp.ne.s32.totalorder %s360, %s361
      %p375 = scmp.eq.s32.totalorder %s44, 7
      %p376 = por %p374, %p375
      %p378 = scmp.ne.s32.totalorder %s361, %s377
      %p379 = scmp.eq.s32.totalorder %s44, 0
      %p380 = por %p378, %p379
      %p381 = scmp.le.s32.totalorder 1, %s38
      %p382 = scmp.lt.s32.totalorder %s38, 9
      %p383 = pnand %p381, %p382
      %p384 = pneg %p383
      // Predicated region
      $region9: #{decoder_layer.3} parent=5 // pred_check
        _
      $region10: #{decoder_layer.3} parent=5 // pred_check_branch
        %386 = sbr.rel (%p383) target = $region12
      $region11: #{decoder_layer.3} parent=5 // pred_region
        %s387 = ssub.s32 %s38, 1
        // Predicated region
        $region13: #{decoder_layer.3} parent=11 // pred_check
          %p388 = pneg %p305
        $region14: #{decoder_layer.3} parent=11 // pred_check_branch
          %390 = sbr.rel (%p388) target = $region16
        $region15: #{decoder_layer.3} parent=11 // pred_region
          %s392 = ssub.s32 16, 16
          %393 = vsyncadd [#allocation19], %s392
          %s395 = sshll.u32 [#allocation18], 4
          %s396 = int_to_ptr.vmem [resolvable:$true] %s395
          %398 = dma.hbm_to_vmem [thread:$0]  %s9, 16, %s396, [#allocation19]
        $region16: #{decoder_layer.3} parent=11 // pred_fallthru
          _
        // Predicated region
        $region17: #{decoder_layer.3} parent=11 // pred_check
          %p399 = pneg %p326
        $region18: #{decoder_layer.3} parent=11 // pred_check_branch
          %401 = sbr.rel (%p399) target = $region20
        $region19: #{decoder_layer.3} parent=11 // pred_region
          %s403 = ssub.s32 16, 16
          %404 = vsyncadd [#allocation19], %s403
          %s406 = sshll.u32 [#allocation20], 4
          %s407 = int_to_ptr.vmem [resolvable:$true] %s406
          %409 = dma.hbm_to_vmem [thread:$0]  %s10, 16, %s407, [#allocation19]
        $region20: #{decoder_layer.3} parent=11 // pred_fallthru
          _
        // Predicated region
        $region21: #{decoder_layer.3} parent=11 // pred_check
          %p410 = pneg %p347
        $region22: #{decoder_layer.3} parent=11 // pred_check_branch
          %412 = sbr.rel (%p410) target = $region24
        $region23: #{decoder_layer.3} parent=11 // pred_region
          %s414 = ssub.s32 16, 16
          %415 = vsyncadd [#allocation22], %s414
          %s417 = sshll.u32 [#allocation21], 4
          %s418 = int_to_ptr.vmem [resolvable:$true] %s417
          %420 = dma.hbm_to_vmem [thread:$0]  %s11, 16, %s418, [#allocation22]
        $region24: #{decoder_layer.3} parent=11 // pred_fallthru
          _
      $region12: #{decoder_layer.3} parent=5 // pred_fallthru
        _
      %p421 = scmp.lt.s32.totalorder %s38, 8
      // Predicated region
      $region25: #{decoder_layer.3} parent=5 // pred_check
        %p422 = pneg %p421
      $region26: #{decoder_layer.3} parent=5 // pred_check_branch
        %424 = sbr.rel (%p422) target = $region28
      $region27: #{decoder_layer.3} parent=5 // pred_region
        // Predicated region
        $region29: #{decoder_layer.3} parent=27 // pred_check
          %p425 = pneg %p70
        $region30: #{decoder_layer.3} parent=27 // pred_check_branch
          %427 = sbr.rel (%p425) target = $region32
        $region31: #{decoder_layer.3} parent=27 // pred_region
          %s428 = sand.u32 %s60, 1
          %s429 = scalar_lea.sflag [#allocation4], %s428
          %s430 = sand.u32 %s60, 1
          %s431 = smul.addr %s430, 8
          %s432 = scalar_lea.vmem [#allocation3], %s431
          %s434 = ssub.s32 128, 128
          %435 = vsyncadd %s429, %s434
          %s436 = smul.addr %s45, 128
          %s437 = scalar_lea.hbm %s0, %s436
          %s439 = sshll.u32 %s432, 4
          %s440 = int_to_ptr.vmem [resolvable:$true] %s439
          %442 = dma.hbm_to_vmem [thread:$0]  %s437, 128, %s440, %s429
        $region32: #{decoder_layer.3} parent=27 // pred_fallthru
          _
        // Predicated region
        $region33: #{decoder_layer.3} parent=27 // pred_check
          %p443 = pneg %p96
        $region34: #{decoder_layer.3} parent=27 // pred_check_branch
          %445 = sbr.rel (%p443) target = $region36
        $region35: #{decoder_layer.3} parent=27 // pred_region
          %s446 = sand.u32 %s38, 1
          %s447 = scalar_lea.sflag [#allocation7], %s446
          %s448 = sand.u32 %s86, 1
          %s449 = smul.addr %s448, 8
          %s450 = scalar_lea.vmem [#allocation6], %s449
          %s452 = ssub.s32 128, 128
          %453 = vsyncadd %s447, %s452
          %s454 = smul.addr %s45, 128
          %s455 = scalar_lea.hbm %s1, %s454
          %s457 = sshll.u32 %s450, 4
          %s458 = int_to_ptr.vmem [resolvable:$true] %s457
          %460 = dma.hbm_to_vmem [thread:$0]  %s455, 128, %s458, %s447
        $region36: #{decoder_layer.3} parent=27 // pred_fallthru
          _
        // Predicated region
        $region37: #{decoder_layer.3} parent=27 // pred_check
          %p461 = pneg %p122
        $region38: #{decoder_layer.3} parent=27 // pred_check_branch
          %463 = sbr.rel (%p461) target = $region40
        $region39: #{decoder_layer.3} parent=27 // pred_region
          %s464 = sand.u32 %s38, 1
          %s465 = scalar_lea.sflag [#allocation7], %s464
          %s466 = sand.u32 %s112, 1
          %s467 = smul.addr %s466, 16
          %s468 = scalar_lea.vmem [#allocation8], %s467
          %s470 = ssub.s32 256, 256
          %471 = vsyncadd %s465, %s470
          %s472 = smul.addr %s46, 4
          %s473 = smul.addr %s472, 64
          %s474 = scalar_lea.hbm %s2, %s473
          %s475 = sshll.u32 %s468, 4
          %s476 = int_to_ptr.vmem [resolvable:$true] %s475
          %481 = dma.hbm_to_vmem [thread:$0]  %s474, 256, %s476, %s465, 64, 64, 4
        $region40: #{decoder_layer.3} parent=27 // pred_fallthru
          _
        // Predicated region
        $region41: #{decoder_layer.3} parent=27 // pred_check
          %p482 = pneg %p148
        $region42: #{decoder_layer.3} parent=27 // pred_check_branch
          %484 = sbr.rel (%p482) target = $region44
        $region43: #{decoder_layer.3} parent=27 // pred_region
          %s485 = sand.u32 %s38, 1
          %s486 = scalar_lea.sflag [#allocation10], %s485
          %s487 = sand.u32 %s138, 1
          %s488 = scalar_lea.vmem [#allocation9], %s487
          %s490 = ssub.s32 16, 16
          %491 = vsyncadd %s486, %s490
          %s492 = smul.addr %s46, 16
          %s493 = scalar_lea.hbm %s3, %s492
          %s495 = sshll.u32 %s488, 4
          %s496 = int_to_ptr.vmem [resolvable:$true] %s495
          %498 = dma.hbm_to_vmem [thread:$0]  %s493, 16, %s496, %s486
        $region44: #{decoder_layer.3} parent=27 // pred_fallthru
          _
        // Predicated region
        $region45: #{decoder_layer.3} parent=27 // pred_check
          %p499 = pneg %p174
        $region46: #{decoder_layer.3} parent=27 // pred_check_branch
          %501 = sbr.rel (%p499) target = $region48
        $region47: #{decoder_layer.3} parent=27 // pred_region
          %s502 = sand.u32 %s38, 1
          %s503 = scalar_lea.sflag [#allocation10], %s502
          %s504 = sand.u32 %s164, 1
          %s505 = smul.addr %s504, 16
          %s506 = scalar_lea.vmem [#allocation11], %s505
          %s508 = ssub.s32 256, 256
          %509 = vsyncadd %s503, %s508
          %s510 = smul.addr %s46, 4
          %s511 = smul.addr %s510, 64
          %s512 = scalar_lea.hbm %s4, %s511
          %s513 = sshll.u32 %s506, 4
          %s514 = int_to_ptr.vmem [resolvable:$true] %s513
          %519 = dma.hbm_to_vmem [thread:$0]  %s512, 256, %s514, %s503, 64, 64, 4
        $region48: #{decoder_layer.3} parent=27 // pred_fallthru
          _
        // Predicated region
        $region49: #{decoder_layer.3} parent=27 // pred_check
          %p520 = pneg %p200
        $region50: #{decoder_layer.3} parent=27 // pred_check_branch
          %522 = sbr.rel (%p520) target = $region52
        $region51: #{decoder_layer.3} parent=27 // pred_region
          %s523 = sand.u32 %s38, 1
          %s524 = scalar_lea.sflag [#allocation13], %s523
          %s525 = sand.u32 %s190, 1
          %s526 = scalar_lea.vmem [#allocation12], %s525
          %s528 = ssub.s32 16, 16
          %529 = vsyncadd %s524, %s528
          %s530 = smul.addr %s46, 16
          %s531 = scalar_lea.hbm %s5, %s530
          %s533 = sshll.u32 %s526, 4
          %s534 = int_to_ptr.vmem [resolvable:$true] %s533
          %536 = dma.hbm_to_vmem [thread:$0]  %s531, 16, %s534, %s524
        $region52: #{decoder_layer.3} parent=27 // pred_fallthru
          _
        // Predicated region
        $region53: #{decoder_layer.3} parent=27 // pred_check
          %p537 = pneg %p226
        $region54: #{decoder_layer.3} parent=27 // pred_check_branch
          %539 = sbr.rel (%p537) target = $region56
        $region55: #{decoder_layer.3} parent=27 // pred_region
          %s540 = sand.u32 %s38, 1
          %s541 = scalar_lea.sflag [#allocation13], %s540
          %s542 = sand.u32 %s216, 1
          %s543 = smul.addr %s542, 16
          %s544 = scalar_lea.vmem [#allocation14], %s543
          %s546 = ssub.s32 256, 256
          %547 = vsyncadd %s541, %s546
          %s548 = smul.addr %s46, 4
          %s549 = smul.addr %s548, 64
          %s550 = scalar_lea.hbm %s6, %s549
          %s551 = sshll.u32 %s544, 4
          %s552 = int_to_ptr.vmem [resolvable:$true] %s551
          %557 = dma.hbm_to_vmem [thread:$0]  %s550, 256, %s552, %s541, 64, 64, 4
        $region56: #{decoder_layer.3} parent=27 // pred_fallthru
          _
        // Predicated region
        $region57: #{decoder_layer.3} parent=27 // pred_check
          %p558 = pneg %p252
        $region58: #{decoder_layer.3} parent=27 // pred_check_branch
          %560 = sbr.rel (%p558) target = $region60
        $region59: #{decoder_layer.3} parent=27 // pred_region
          %s561 = sand.u32 %s38, 1
          %s562 = scalar_lea.sflag [#allocation16], %s561
          %s563 = sand.u32 %s242, 1
          %s564 = scalar_lea.vmem [#allocation15], %s563
          %s566 = ssub.s32 16, 16
          %567 = vsyncadd %s562, %s566
          %s568 = smul.addr %s46, 16
          %s569 = scalar_lea.hbm %s7, %s568
          %s571 = sshll.u32 %s564, 4
          %s572 = int_to_ptr.vmem [resolvable:$true] %s571
          %574 = dma.hbm_to_vmem [thread:$0]  %s569, 16, %s572, %s562
        $region60: #{decoder_layer.3} parent=27 // pred_fallthru
          _
        // Predicated region
        $region61: #{decoder_layer.3} parent=27 // pred_check
          %p575 = pneg %p278
        $region62: #{decoder_layer.3} parent=27 // pred_check_branch
          %577 = sbr.rel (%p575) target = $region64
        $region63: #{decoder_layer.3} parent=27 // pred_region
          %s578 = sand.u32 %s38, 1
          %s579 = scalar_lea.sflag [#allocation16], %s578
          %s580 = sand.u32 %s268, 1
          %s581 = smul.addr %s580, 4
          %s582 = scalar_lea.vmem [#allocation17], %s581
          %s584 = ssub.s32 64, 64
          %585 = vsyncadd %s579, %s584
          %s586 = smul.addr %s46, 64
          %s587 = scalar_lea.hbm %s8, %s586
          %s589 = sshll.u32 %s582, 4
          %s590 = int_to_ptr.vmem [resolvable:$true] %s589
          %592 = dma.hbm_to_vmem [thread:$0]  %s587, 64, %s590, %s579
        $region64: #{decoder_layer.3} parent=27 // pred_fallthru
          _
      $region28: #{decoder_layer.3} parent=5 // pred_fallthru
        _
      %p593 = scmp.le.s32.totalorder 1, %s38
      %p594 = scmp.lt.s32.totalorder %s38, 9
      %p595 = pnand %p593, %p594
      %p596 = pneg %p595
      // Predicated region
      $region65: #{decoder_layer.3} parent=5 // pred_check
        _
      $region66: #{decoder_layer.3} parent=5 // pred_check_branch
        %598 = sbr.rel (%p595) target = $region68
      $region67: #{decoder_layer.3} parent=5 // pred_region
        %s599 = ssub.s32 %s38, 1
        %s600 = sand.u32 %s63, 1
        %s601 = scalar_lea.sflag [#allocation4], %s600
        %s602 = sand.u32 %s63, 1
        %s603 = smul.addr %s602, 8
        %s604 = scalar_lea.vmem [#allocation3], %s603
        // Predicated region
        $region69: #{decoder_layer.3} parent=67 // pred_check
          %p605 = pneg %p76
        $region70: #{decoder_layer.3} parent=67 // pred_check_branch
          %607 = sbr.rel (%p605) target = $region72
        $region71: #{decoder_layer.3} parent=67 // pred_region
          %608 = dma.done %s601, 128
        $region72: #{decoder_layer.3} parent=67 // pred_fallthru
          _
        %s609 = sand.u32 %s43, 1
        %s610 = scalar_lea.sflag [#allocation7], %s609
        %s611 = sand.u32 %s89, 1
        %s612 = smul.addr %s611, 8
        %s613 = scalar_lea.vmem [#allocation6], %s612
        // Predicated region
        $region73: #{decoder_layer.3} parent=67 // pred_check
          %p614 = pneg %p102
        $region74: #{decoder_layer.3} parent=67 // pred_check_branch
          %616 = sbr.rel (%p614) target = $region76
        $region75: #{decoder_layer.3} parent=67 // pred_region
          %617 = dma.done %s610, 128
        $region76: #{decoder_layer.3} parent=67 // pred_fallthru
          _
        %s618 = sand.u32 %s43, 1
        %s619 = scalar_lea.sflag [#allocation7], %s618
        %s620 = sand.u32 %s115, 1
        %s621 = smul.addr %s620, 16
        %s622 = scalar_lea.vmem [#allocation8], %s621
        // Predicated region
        $region77: #{decoder_layer.3} parent=67 // pred_check
          %p623 = pneg %p128
        $region78: #{decoder_layer.3} parent=67 // pred_check_branch
          %625 = sbr.rel (%p623) target = $region80
        $region79: #{decoder_layer.3} parent=67 // pred_region
          %626 = dma.done %s619, 256
        $region80: #{decoder_layer.3} parent=67 // pred_fallthru
          _
        %s627 = sand.u32 %s43, 1
        %s628 = scalar_lea.sflag [#allocation10], %s627
        %s629 = sand.u32 %s141, 1
        %s630 = scalar_lea.vmem [#allocation9], %s629
        // Predicated region
        $region81: #{decoder_layer.3} parent=67 // pred_check
          %p631 = pneg %p154
        $region82: #{decoder_layer.3} parent=67 // pred_check_branch
          %633 = sbr.rel (%p631) target = $region84
        $region83: #{decoder_layer.3} parent=67 // pred_region
          %634 = dma.done %s628, 16
        $region84: #{decoder_layer.3} parent=67 // pred_fallthru
          _
        %s635 = sand.u32 %s43, 1
        %s636 = scalar_lea.sflag [#allocation10], %s635
        %s637 = sand.u32 %s167, 1
        %s638 = smul.addr %s637, 16
        %s639 = scalar_lea.vmem [#allocation11], %s638
        // Predicated region
        $region85: #{decoder_layer.3} parent=67 // pred_check
          %p640 = pneg %p180
        $region86: #{decoder_layer.3} parent=67 // pred_check_branch
          %642 = sbr.rel (%p640) target = $region88
        $region87: #{decoder_layer.3} parent=67 // pred_region
          %643 = dma.done %s636, 256
        $region88: #{decoder_layer.3} parent=67 // pred_fallthru
          _
        %s644 = sand.u32 %s43, 1
        %s645 = scalar_lea.sflag [#allocation13], %s644
        %s646 = sand.u32 %s193, 1
        %s647 = scalar_lea.vmem [#allocation12], %s646
        // Predicated region
        $region89: #{decoder_layer.3} parent=67 // pred_check
          %p648 = pneg %p206
        $region90: #{decoder_layer.3} parent=67 // pred_check_branch
          %650 = sbr.rel (%p648) target = $region92
        $region91: #{decoder_layer.3} parent=67 // pred_region
          %651 = dma.done %s645, 16
        $region92: #{decoder_layer.3} parent=67 // pred_fallthru
          _
        %s652 = sand.u32 %s43, 1
        %s653 = scalar_lea.sflag [#allocation13], %s652
        %s654 = sand.u32 %s219, 1
        %s655 = smul.addr %s654, 16
        %s656 = scalar_lea.vmem [#allocation14], %s655
        // Predicated region
        $region93: #{decoder_layer.3} parent=67 // pred_check
          %p657 = pneg %p232
        $region94: #{decoder_layer.3} parent=67 // pred_check_branch
          %659 = sbr.rel (%p657) target = $region96
        $region95: #{decoder_layer.3} parent=67 // pred_region
          %660 = dma.done %s653, 256
        $region96: #{decoder_layer.3} parent=67 // pred_fallthru
          _
        %s661 = sand.u32 %s43, 1
        %s662 = scalar_lea.sflag [#allocation16], %s661
        %s663 = sand.u32 %s245, 1
        %s664 = scalar_lea.vmem [#allocation15], %s663
        // Predicated region
        $region97: #{decoder_layer.3} parent=67 // pred_check
          %p665 = pneg %p258
        $region98: #{decoder_layer.3} parent=67 // pred_check_branch
          %667 = sbr.rel (%p665) target = $region100
        $region99: #{decoder_layer.3} parent=67 // pred_region
          %668 = dma.done %s662, 16
        $region100: #{decoder_layer.3} parent=67 // pred_fallthru
          _
        %s669 = sand.u32 %s43, 1
        %s670 = scalar_lea.sflag [#allocation16], %s669
        %s671 = sand.u32 %s271, 1
        %s672 = smul.addr %s671, 4
        %s673 = scalar_lea.vmem [#allocation17], %s672
        // Predicated region
        $region101: #{decoder_layer.3} parent=67 // pred_check
          %p674 = pneg %p284
        $region102: #{decoder_layer.3} parent=67 // pred_check_branch
          %676 = sbr.rel (%p674) target = $region104
        $region103: #{decoder_layer.3} parent=67 // pred_region
          %677 = dma.done %s670, 64
        $region104: #{decoder_layer.3} parent=67 // pred_fallthru
          _
        // Predicated region
        $region105: #{decoder_layer.3} parent=67 // pred_check
          %p678 = pneg %p305
        $region106: #{decoder_layer.3} parent=67 // pred_check_branch
          %680 = sbr.rel (%p678) target = $region108
        $region107: #{decoder_layer.3} parent=67 // pred_region
          %681 = dma.done [#allocation19], 16
        $region108: #{decoder_layer.3} parent=67 // pred_fallthru
          _
        // Predicated region
        $region109: #{decoder_layer.3} parent=67 // pred_check
          %p682 = pneg %p326
        $region110: #{decoder_layer.3} parent=67 // pred_check_branch
          %684 = sbr.rel (%p682) target = $region112
        $region111: #{decoder_layer.3} parent=67 // pred_region
          %685 = dma.done [#allocation19], 16
        $region112: #{decoder_layer.3} parent=67 // pred_fallthru
          _
        // Predicated region
        $region113: #{decoder_layer.3} parent=67 // pred_check
          %p686 = pneg %p347
        $region114: #{decoder_layer.3} parent=67 // pred_check_branch
          %688 = sbr.rel (%p686) target = $region116
        $region115: #{decoder_layer.3} parent=67 // pred_region
          %689 = dma.done [#allocation22], 16
        $region116: #{decoder_layer.3} parent=67 // pred_fallthru
          _
        %s690 = sand.u32 %s63, 1
        %s691 = scalar_lea.sflag [#allocation4], %s690
        %s692 = sand.u32 %s63, 1
        %s693 = smul.addr %s692, 8
        %s694 = scalar_lea.vmem [#allocation3], %s693
        %p695 = pneg %p76
        %p696 = pneg %p73
        %s697 = sand.u32 %s43, 1
        %s698 = scalar_lea.sflag [#allocation7], %s697
        %s699 = sand.u32 %s89, 1
        %s700 = smul.addr %s699, 8
        %s701 = scalar_lea.vmem [#allocation6], %s700
        %p702 = pneg %p102
        %p703 = pneg %p99
        %s704 = sand.u32 %s43, 1
        %s705 = scalar_lea.sflag [#allocation7], %s704
        %s706 = sand.u32 %s115, 1
        %s707 = smul.addr %s706, 16
        %s708 = scalar_lea.vmem [#allocation8], %s707
        %p709 = pneg %p128
        %p710 = pneg %p125
        %s711 = sand.u32 %s43, 1
        %s712 = scalar_lea.sflag [#allocation10], %s711
        %s713 = sand.u32 %s141, 1
        %s714 = scalar_lea.vmem [#allocation9], %s713
        %p715 = pneg %p154
        %p716 = pneg %p151
        %s717 = sand.u32 %s43, 1
        %s718 = scalar_lea.sflag [#allocation10], %s717
        %s719 = sand.u32 %s167, 1
        %s720 = smul.addr %s719, 16
        %s721 = scalar_lea.vmem [#allocation11], %s720
        %p722 = pneg %p180
        %p723 = pneg %p177
        %s724 = sand.u32 %s43, 1
        %s725 = scalar_lea.sflag [#allocation13], %s724
        %s726 = sand.u32 %s193, 1
        %s727 = scalar_lea.vmem [#allocation12], %s726
        %p728 = pneg %p206
        %p729 = pneg %p203
        %s730 = sand.u32 %s43, 1
        %s731 = scalar_lea.sflag [#allocation13], %s730
        %s732 = sand.u32 %s219, 1
        %s733 = smul.addr %s732, 16
        %s734 = scalar_lea.vmem [#allocation14], %s733
        %p735 = pneg %p232
        %p736 = pneg %p229
        %s737 = sand.u32 %s43, 1
        %s738 = scalar_lea.sflag [#allocation16], %s737
        %s739 = sand.u32 %s245, 1
        %s740 = scalar_lea.vmem [#allocation15], %s739
        %p741 = pneg %p258
        %p742 = pneg %p255
        %s743 = sand.u32 %s43, 1
        %s744 = scalar_lea.sflag [#allocation16], %s743
        %s745 = sand.u32 %s271, 1
        %s746 = smul.addr %s745, 4
        %s747 = scalar_lea.vmem [#allocation17], %s746
        %p748 = pneg %p284
        %p749 = pneg %p281
        %p750 = pneg %p305
        %p751 = pneg %p302
        %p752 = pneg %p326
        %p753 = pneg %p323
        %p754 = pneg %p347
        %p755 = pneg %p344
        %p756 = pneg %p373
        %p757 = pneg %p370
        %s758 = sand.u32 %s360, 1
        %s759 = scalar_lea.sflag [#allocation5], %s758
        %s760 = sand.u32 %s360, 1
        %s761 = smul.addr %s760, 8
        %s762 = scalar_lea.vmem [#allocation23], %s761
        %p764 = scmp.eq.s32.totalorder %s48, 0
        // Predicated region
        $region117: #{decoder_layer.3} parent=67 // pred_check
          %p765 = pneg %p764
        $region118: #{decoder_layer.3} parent=67 // pred_check_branch
          %767 = sbr.rel (%p765) target = $region120
        $region119: #{decoder_layer.3} parent=67 // pred_region
          %vm768 = vcmask 261120
          %769 = vst.msk [vmem:[#allocation2] sm:$0xff] %vm768, 0.0
        $region120: #{decoder_layer.3} parent=67 // pred_fallthru
          _
        %v770 = vld [vmem:[%s604] sm:$0xff]
        %v771 = vld [vmem:[%s613] sm:$0xff]
        %v772 = vpack.c.bf16 %v770, %v770
        %v773 = vpack.c.bf16 %v771, %v771
        %v774 = vld [vmem:[%s622] sm:$0xf]
        %v775 = vld [vmem:[%s622 + $0x4] sm:$0xf]
        %v776 = vld [vmem:[%s622 + $0x8] sm:$0xf]
        %v777 = vld [vmem:[%s622 + $0xc] sm:$0xf]
        %v778 = vld [vmem:[%s630] sm:$0x1]
        %v780 = vlaneseq
        %v781 = vshrl.u32 %v780, 7
        %v782 = vsub.s32 0, %v781
        %v783 = vrot.slane %v778, %v782
        %v789 = vunpack.c.l.b16 %v774
        %v790 = vunpack.c.l.b16 %v775
        %v791 = vunpack.c.l.b16 %v776
        %v792 = vunpack.c.l.b16 %v777
        %v793 = vpack.c.b16 %v790, %v789
        %v794 = vpack.c.b16 %v792, %v791
        %vm797 = vcmask 261120
        %v799 = vsel %vm797, %v772, 0
        %801 = vmatprep.subr.bf16.mxu0 0
        %802 = vmatpush1.bf16.msra.mxu0 %v793
        %803 = vmatprep.subr.bf16.mxu0 0
        %804 = vmatpush1.bf16.msra.mxu0 %v794
        %805 = vmatprep.subr.bf16.mxu0 0
        %806 = vmatpush1.bf16.msra.mxu0 0
        %807 = vmatprep.subr.bf16.mxu0 0
        %808 = vmatpush1.bf16.msra.mxu0 0
        %809 = vmatprep.subr.bf16.mxu0 0
        %810 = vmatpush1.bf16.msra.mxu0 0
        %811 = vmatprep.subr.bf16.mxu0 0
        %812 = vmatpush1.bf16.msra.mxu0 0
        %813 = vmatprep.subr.bf16.mxu0 0
        %814 = vmatpush1.bf16.msra.mxu0 0
        %815 = vmatprep.subr.bf16.mxu0 0
        %816 = vmatpush1.bf16.msra.mxu0 0
        %817 = vmatprep.subr.bf16.mxu0 0
        %818 = vmatpush1.bf16.msra.mxu0 0
        %819 = vmatprep.subr.bf16.mxu0 0
        %820 = vmatpush1.bf16.msra.mxu0 0
        %821 = vmatprep.subr.bf16.mxu0 0
        %822 = vmatpush1.bf16.msra.mxu0 0
        %823 = vmatprep.subr.bf16.mxu0 0
        %824 = vmatpush1.bf16.msra.mxu0 0
        %825 = vmatprep.subr.bf16.mxu0 0
        %826 = vmatpush1.bf16.msra.mxu0 0
        %827 = vmatprep.subr.bf16.mxu0 0
        %828 = vmatpush1.bf16.msra.mxu0 0
        %829 = vmatprep.subr.bf16.mxu0 0
        %830 = vmatpush1.bf16.msra.mxu0 0
        %831 = vmatprep.subr.bf16.mxu0 0
        %832 = vmatpush1.bf16.msra.mxu0 0
        %833 = vmatprep.mubr.bf16.mxu0 0
        %834 = vmatmul.mubr.bf16.gmra.mrb[0].mxu0 %v799
        %v835 = vpop.f32.mrb[0].mxu0
        %v836 = vadd.f32 %v783, %v835
        %v837 = vpop.f32.mrb[0].mxu0
        %v838 = vpop.f32.mrb[0].mxu0
        %v839 = vpop.f32.mrb[0].mxu0
        %840 = vdwg.mxu0
        %v841 = vmul.f32 %v836, 0.35355338
        %v842 = vld [vmem:[%s639] sm:$0xf]
        %v843 = vld [vmem:[%s639 + $0x4] sm:$0xf]
        %v844 = vld [vmem:[%s639 + $0x8] sm:$0xf]
        %v845 = vld [vmem:[%s639 + $0xc] sm:$0xf]
        %v846 = vld [vmem:[%s647] sm:$0x1]
        %v848 = vlaneseq
        %v849 = vshrl.u32 %v848, 7
        %v850 = vsub.s32 0, %v849
        %v851 = vrot.slane %v846, %v850
        %v857 = vunpack.c.l.b16 %v842
        %v858 = vunpack.c.l.b16 %v843
        %v859 = vunpack.c.l.b16 %v844
        %v860 = vunpack.c.l.b16 %v845
        %v861 = vpack.c.b16 %v858, %v857
        %v862 = vpack.c.b16 %v860, %v859
        %v866 = vsel %vm797, %v773, 0
        %868 = vmatprep.subr.bf16.mxu0 0
        %869 = vmatpush1.bf16.msra.mxu0 %v861
        %870 = vmatprep.subr.bf16.mxu0 0
        %871 = vmatpush1.bf16.msra.mxu0 %v862
        %872 = vmatprep.subr.bf16.mxu0 0
        %873 = vmatpush1.bf16.msra.mxu0 0
        %874 = vmatprep.subr.bf16.mxu0 0
        %875 = vmatpush1.bf16.msra.mxu0 0
        %876 = vmatprep.subr.bf16.mxu0 0
        %877 = vmatpush1.bf16.msra.mxu0 0
        %878 = vmatprep.subr.bf16.mxu0 0
        %879 = vmatpush1.bf16.msra.mxu0 0
        %880 = vmatprep.subr.bf16.mxu0 0
        %881 = vmatpush1.bf16.msra.mxu0 0
        %882 = vmatprep.subr.bf16.mxu0 0
        %883 = vmatpush1.bf16.msra.mxu0 0
        %884 = vmatprep.subr.bf16.mxu0 0
        %885 = vmatpush1.bf16.msra.mxu0 0
        %886 = vmatprep.subr.bf16.mxu0 0
        %887 = vmatpush1.bf16.msra.mxu0 0
        %888 = vmatprep.subr.bf16.mxu0 0
        %889 = vmatpush1.bf16.msra.mxu0 0
        %890 = vmatprep.subr.bf16.mxu0 0
        %891 = vmatpush1.bf16.msra.mxu0 0
        %892 = vmatprep.subr.bf16.mxu0 0
        %893 = vmatpush1.bf16.msra.mxu0 0
        %894 = vmatprep.subr.bf16.mxu0 0
        %895 = vmatpush1.bf16.msra.mxu0 0
        %896 = vmatprep.subr.bf16.mxu0 0
        %897 = vmatpush1.bf16.msra.mxu0 0
        %898 = vmatprep.subr.bf16.mxu0 0
        %899 = vmatpush1.bf16.msra.mxu0 0
        %900 = vmatprep.mubr.bf16.mxu0 0
        %901 = vmatmul.mubr.bf16.gmra.mrb[0].mxu0 %v866
        %v902 = vpop.f32.mrb[0].mxu0
        %v903 = vadd.f32 %v851, %v902
        %v904 = vpop.f32.mrb[0].mxu0
        %v905 = vpop.f32.mrb[0].mxu0
        %v906 = vpop.f32.mrb[0].mxu0
        %907 = vdwg.mxu0
        %v908 = vld [vmem:[%s656] sm:$0xf]
        %v909 = vld [vmem:[%s656 + $0x4] sm:$0xf]
        %v910 = vld [vmem:[%s656 + $0x8] sm:$0xf]
        %v911 = vld [vmem:[%s656 + $0xc] sm:$0xf]
        %v912 = vld [vmem:[%s664] sm:$0x1]
        %v914 = vlaneseq
        %v915 = vshrl.u32 %v914, 7
        %v916 = vsub.s32 0, %v915
        %v917 = vrot.slane %v912, %v916
        %v923 = vunpack.c.l.b16 %v908
        %v924 = vunpack.c.l.b16 %v909
        %v925 = vunpack.c.l.b16 %v910
        %v926 = vunpack.c.l.b16 %v911
        %v927 = vpack.c.b16 %v924, %v923
        %v928 = vpack.c.b16 %v926, %v925
        %931 = vmatprep.subr.bf16.mxu0 0
        %932 = vmatpush1.bf16.msra.mxu0 %v927
        %933 = vmatprep.subr.bf16.mxu0 0
        %934 = vmatpush1.bf16.msra.mxu0 %v928
        %935 = vmatprep.subr.bf16.mxu0 0
        %936 = vmatpush1.bf16.msra.mxu0 0
        %937 = vmatprep.subr.bf16.mxu0 0
        %938 = vmatpush1.bf16.msra.mxu0 0
        %939 = vmatprep.subr.bf16.mxu0 0
        %940 = vmatpush1.bf16.msra.mxu0 0
        %941 = vmatprep.subr.bf16.mxu0 0
        %942 = vmatpush1.bf16.msra.mxu0 0
        %943 = vmatprep.subr.bf16.mxu0 0
        %944 = vmatpush1.bf16.msra.mxu0 0
        %945 = vmatprep.subr.bf16.mxu0 0
        %946 = vmatpush1.bf16.msra.mxu0 0
        %947 = vmatprep.subr.bf16.mxu0 0
        %948 = vmatpush1.bf16.msra.mxu0 0
        %949 = vmatprep.subr.bf16.mxu0 0
        %950 = vmatpush1.bf16.msra.mxu0 0
        %951 = vmatprep.subr.bf16.mxu0 0
        %952 = vmatpush1.bf16.msra.mxu0 0
        %953 = vmatprep.subr.bf16.mxu0 0
        %954 = vmatpush1.bf16.msra.mxu0 0
        %955 = vmatprep.subr.bf16.mxu0 0
        %956 = vmatpush1.bf16.msra.mxu0 0
        %957 = vmatprep.subr.bf16.mxu0 0
        %958 = vmatpush1.bf16.msra.mxu0 0
        %959 = vmatprep.subr.bf16.mxu0 0
        %960 = vmatpush1.bf16.msra.mxu0 0
        %961 = vmatprep.subr.bf16.mxu0 0
        %962 = vmatpush1.bf16.msra.mxu0 0
        %963 = vmatprep.mubr.bf16.mxu0 0
        %964 = vmatmul.mubr.bf16.gmra.mrb[0].mxu0 %v866
        %v965 = vpop.f32.mrb[0].mxu0
        %v966 = vadd.f32 %v917, %v965
        %v967 = vpop.f32.mrb[0].mxu0
        %v968 = vpop.f32.mrb[0].mxu0
        %v969 = vpop.f32.mrb[0].mxu0
        %970 = vdwg.mxu0
        %v971 = vpack.c.bf16 %v841, %v841
        %v972 = vpack.c.bf16 %v903, %v903
        %vm973 = vcmask 64512
        %v975 = vsel %vm973, %v971, 0
        %v978 = vsel %vm973, %v972, 0
        %980 = vmatprep.subr.bf16.mxu0 0
        %981 = vmatpush1.bf16.xpose.msra.mxu0 %v978
        %982 = vmatprep.subr.bf16.mxu0 0
        %983 = vmatpush1.bf16.xpose.msra.mxu0 0
        %984 = vmatprep.subr.bf16.mxu0 0
        %985 = vmatpush1.bf16.xpose.msra.mxu0 0
        %986 = vmatprep.subr.bf16.mxu0 0
        %987 = vmatpush1.bf16.xpose.msra.mxu0 0
        %988 = vmatprep.subr.bf16.mxu0 0
        %989 = vmatpush1.bf16.xpose.msra.mxu0 0
        %990 = vmatprep.subr.bf16.mxu0 0
        %991 = vmatpush1.bf16.xpose.msra.mxu0 0
        %992 = vmatprep.subr.bf16.mxu0 0
        %993 = vmatpush1.bf16.xpose.msra.mxu0 0
        %994 = vmatprep.subr.bf16.mxu0 0
        %995 = vmatpush1.bf16.xpose.msra.mxu0 0
        %996 = vmatprep.subr.bf16.mxu0 0
        %997 = vmatpush1.bf16.xpose.msra.mxu0 0
        %998 = vmatprep.subr.bf16.mxu0 0
        %999 = vmatpush1.bf16.xpose.msra.mxu0 0
        %1000 = vmatprep.subr.bf16.mxu0 0
        %1001 = vmatpush1.bf16.xpose.msra.mxu0 0
        %1002 = vmatprep.subr.bf16.mxu0 0
        %1003 = vmatpush1.bf16.xpose.msra.mxu0 0
        %1004 = vmatprep.subr.bf16.mxu0 0
        %1005 = vmatpush1.bf16.xpose.msra.mxu0 0
        %1006 = vmatprep.subr.bf16.mxu0 0
        %1007 = vmatpush1.bf16.xpose.msra.mxu0 0
        %1008 = vmatprep.subr.bf16.mxu0 0
        %1009 = vmatpush1.bf16.xpose.msra.mxu0 0
        %1010 = vmatprep.subr.bf16.mxu0 0
        %1011 = vmatpush1.bf16.xpose.msra.mxu0 0
        %1012 = vmatprep.mubr.bf16.mxu0 0
        %1013 = vmatmul.mubr.bf16.gmra.mrb[0].mxu0 %v975
        %v1014 = vpop.f32.mrb[0].mxu0
        %v1015 = vadd.f32 0.0, %v1014
        %v1016 = vpop.f32.mrb[0].mxu0
        %v1017 = vpop.f32.mrb[0].mxu0
        %v1018 = vpop.f32.mrb[0].mxu0
        %1019 = vdwg.mxu0
        %v1020 = vsel %vm973, %v1015, -inf
        %1021 = vmax.xlane.f32.xlu0 %v1020
        %v1022 = vpop.xlane.xlu0 %1021
        %v1023 = vsub.f32 %v1015, %v1022
        %v1024 = vmul.f32 %v1023, 1.442695
        %v1025 = vpow.pop %v1024
        %v1026 = vsel %vm973, %v1025, 0.0
        %1027 = vadd.xlane.f32.xlu0 %v1026
        %v1028 = vpop.xlane.xlu0 %1027
        %v1029 = vrcp.pop %v1028
        %v1030 = vmul.f32 1.0, %v1029
        %v1031 = vmul.f32 %v1025, %v1030
        %v1032 = vpack.c.bf16 %v1031, %v1031
        %v1033 = vpack.c.bf16 %v966, %v966
        %v1035 = vsel %vm973, %v1032, 0
        %vm1037 = vcmask 1043456
        %v1039 = vsel %vm1037, %v1033, 0
        %1041 = vmatprep.subr.bf16.mxu0 0
        %1042 = vmatpush1.bf16.msra.mxu0 %v1039
        %1043 = vmatprep.subr.bf16.mxu0 0
        %1044 = vmatpush1.bf16.msra.mxu0 0
        %1045 = vmatprep.subr.bf16.mxu0 0
        %1046 = vmatpush1.bf16.msra.mxu0 0
        %1047 = vmatprep.subr.bf16.mxu0 0
        %1048 = vmatpush1.bf16.msra.mxu0 0
        %1049 = vmatprep.subr.bf16.mxu0 0
        %1050 = vmatpush1.bf16.msra.mxu0 0
        %1051 = vmatprep.subr.bf16.mxu0 0
        %1052 = vmatpush1.bf16.msra.mxu0 0
        %1053 = vmatprep.subr.bf16.mxu0 0
        %1054 = vmatpush1.bf16.msra.mxu0 0
        %1055 = vmatprep.subr.bf16.mxu0 0
        %1056 = vmatpush1.bf16.msra.mxu0 0
        %1057 = vmatprep.subr.bf16.mxu0 0
        %1058 = vmatpush1.bf16.msra.mxu0 0
        %1059 = vmatprep.subr.bf16.mxu0 0
        %1060 = vmatpush1.bf16.msra.mxu0 0
        %1061 = vmatprep.subr.bf16.mxu0 0
        %1062 = vmatpush1.bf16.msra.mxu0 0
        %1063 = vmatprep.subr.bf16.mxu0 0
        %1064 = vmatpush1.bf16.msra.mxu0 0
        %1065 = vmatprep.subr.bf16.mxu0 0
        %1066 = vmatpush1.bf16.msra.mxu0 0
        %1067 = vmatprep.subr.bf16.mxu0 0
        %1068 = vmatpush1.bf16.msra.mxu0 0
        %1069 = vmatprep.subr.bf16.mxu0 0
        %1070 = vmatpush1.bf16.msra.mxu0 0
        %1071 = vmatprep.subr.bf16.mxu0 0
        %1072 = vmatpush1.bf16.msra.mxu0 0
        %1073 = vmatprep.mubr.bf16.mxu0 0
        %1074 = vmatmul.mubr.bf16.gmra.mrb[0].mxu0 %v1035
        %v1075 = vpop.f32.mrb[0].mxu0
        %v1076 = vadd.f32 0.0, %v1075
        %v1077 = vpop.f32.mrb[0].mxu0
        %v1078 = vpop.f32.mrb[0].mxu0
        %v1079 = vpop.f32.mrb[0].mxu0
        %1080 = vdwg.mxu0
        %v1081 = vld [vmem:[#allocation2] sm:$0xff]
        %v1082 = vpack.c.bf16 %v1076, %v1076
        %v1083 = vld [vmem:[%s673] sm:$0xf]
        %v1085 = vsel %vm973, %v1082, 0
        %v1088 = vsel %vm1037, %v1083, 0
        %1090 = vmatprep.subr.bf16.mxu0 0
        %1091 = vmatpush1.bf16.msra.mxu0 %v1088
        %1092 = vmatprep.subr.bf16.mxu0 0
        %1093 = vmatpush1.bf16.msra.mxu0 0
        %1094 = vmatprep.subr.bf16.mxu0 0
        %1095 = vmatpush1.bf16.msra.mxu0 0
        %1096 = vmatprep.subr.bf16.mxu0 0
        %1097 = vmatpush1.bf16.msra.mxu0 0
        %1098 = vmatprep.subr.bf16.mxu0 0
        %1099 = vmatpush1.bf16.msra.mxu0 0
        %1100 = vmatprep.subr.bf16.mxu0 0
        %1101 = vmatpush1.bf16.msra.mxu0 0
        %1102 = vmatprep.subr.bf16.mxu0 0
        %1103 = vmatpush1.bf16.msra.mxu0 0
        %1104 = vmatprep.subr.bf16.mxu0 0
        %1105 = vmatpush1.bf16.msra.mxu0 0
        %1106 = vmatprep.subr.bf16.mxu0 0
        %1107 = vmatpush1.bf16.msra.mxu0 0
        %1108 = vmatprep.subr.bf16.mxu0 0
        %1109 = vmatpush1.bf16.msra.mxu0 0
        %1110 = vmatprep.subr.bf16.mxu0 0
        %1111 = vmatpush1.bf16.msra.mxu0 0
        %1112 = vmatprep.subr.bf16.mxu0 0
        %1113 = vmatpush1.bf16.msra.mxu0 0
        %1114 = vmatprep.subr.bf16.mxu0 0
        %1115 = vmatpush1.bf16.msra.mxu0 0
        %1116 = vmatprep.subr.bf16.mxu0 0
        %1117 = vmatpush1.bf16.msra.mxu0 0
        %1118 = vmatprep.subr.bf16.mxu0 0
        %1119 = vmatpush1.bf16.msra.mxu0 0
        %1120 = vmatprep.subr.bf16.mxu0 0
        %1121 = vmatpush1.bf16.msra.mxu0 0
        %1122 = vmatprep.mubr.bf16.mxu0 0
        %1123 = vmatmul.mubr.bf16.gmra.mrb[0].mxu0 %v1085
        %v1124 = vpop.f32.mrb[0].mxu0
        %v1125 = vadd.f32 0.0, %v1124
        %v1126 = vpop.f32.mrb[0].mxu0
        %v1127 = vpop.f32.mrb[0].mxu0
        %v1128 = vpop.f32.mrb[0].mxu0
        %1129 = vdwg.mxu0
        %v1130 = vadd.f32 %v1081, %v1125
        %1131 = vst.msk [vmem:[#allocation2] sm:$0xff] %vm797, %v1130
        %p1132 = scmp.eq.s32.totalorder %s48, 3
        // Predicated region
        $region121: #{decoder_layer.3} parent=67 // pred_check
          %p1133 = pneg %p1132
        $region122: #{decoder_layer.3} parent=67 // pred_check_branch
          %1135 = sbr.rel (%p1133) target = $region124
        $region123: #{decoder_layer.3} parent=67 // pred_region
          %v1136 = vld [vmem:[#allocation2] sm:$0xff]
          %v1137 = vadd.f32 %v770, %v1136
          %v1138 = vld [vmem:[#allocation18] sm:$0x1]
          %v1140 = vlaneseq
          %v1141 = vshrl.u32 %v1140, 7
          %v1142 = vsub.s32 0, %v1141
          %v1143 = vrot.slane %v1138, %v1142
          %v1145 = vadd.f32 %v1137, %v1143
          %v1146 = vsel %vm797, %v1145, 0.0
          %1147 = vadd.xlane.f32.xlu0 %v1146
          %v1148 = vpop.xlane.xlu0 %1147
          %v1149 = vrcp.pop 32.0
          %v1150 = vmul.f32 %v1148, %v1149
          %v1151 = vsub.f32 %v1145, %v1150
          %v1152 = vmul.f32 %v1151, %v1151
          %v1153 = vsel %vm797, %v1152, 0.0
          %1154 = vadd.xlane.f32.xlu0 %v1153
          %v1155 = vpop.xlane.xlu0 %1154
          %v1156 = vmul.f32 %v1155, %v1149
          %v1157 = vadd.f32 %v1156, 1e-05
          %v1158 = vrsqrt.pop %v1157
          %v1159 = vmul.f32 %v1151, %v1158
          %v1160 = vld [vmem:[#allocation20] sm:$0x1]
          %v1162 = vlaneseq
          %v1163 = vshrl.u32 %v1162, 7
          %v1164 = vsub.s32 0, %v1163
          %v1165 = vrot.slane %v1160, %v1164
          %v1167 = vmul.f32 %v1159, %v1165
          %v1168 = vld [vmem:[#allocation21] sm:$0x1]
          %v1170 = vlaneseq
          %v1171 = vshrl.u32 %v1170, 7
          %v1172 = vsub.s32 0, %v1171
          %v1173 = vrot.slane %v1168, %v1172
          %v1175 = vadd.f32 %v1167, %v1173
          %1176 = vst.msk [vmem:[%s762] sm:$0xff] %vm797, %v1175
        $region124: #{decoder_layer.3} parent=67 // pred_fallthru
          _
        %s1177 = sand.u32 %s360, 1
        %s1178 = scalar_lea.sflag [#allocation5], %s1177
        %s1179 = sand.u32 %s360, 1
        %s1180 = smul.addr %s1179, 8
        %s1181 = scalar_lea.vmem [#allocation23], %s1180
        // Predicated region
        $region125: #{decoder_layer.3} parent=67 // pred_check
          %p1182 = pneg %p370
        $region126: #{decoder_layer.3} parent=67 // pred_check_branch
          %1184 = sbr.rel (%p1182) target = $region128
        $region127: #{decoder_layer.3} parent=67 // pred_region
          %s1186 = ssub.s32 128, 128
          %1187 = vsyncadd %s1178, %s1186
          %s1188 = smul.addr %s47, 128
          %s1189 = scalar_lea.hbm %s12, %s1188
          %s1191 = sshll.u32 %s1181, 4
          %s1192 = int_to_ptr.vmem [resolvable:$true] %s1191
          %1194 = dma.vmem_to_hbm [thread:$0]  %s1192, 128, %s1189, %s1178
        $region128: #{decoder_layer.3} parent=67 // pred_fallthru
          _
      $region68: #{decoder_layer.3} parent=5 // pred_fallthru
        _
      %p1195 = scmp.le.s32.totalorder 2, %s38
      // Predicated region
      $region129: #{decoder_layer.3} parent=5 // pred_check
        %p1196 = pneg %p1195
      $region130: #{decoder_layer.3} parent=5 // pred_check_branch
        %1198 = sbr.rel (%p1196) target = $region132
      $region131: #{decoder_layer.3} parent=5 // pred_region
        %s1199 = ssub.s32 %s38, 2
        // Predicated region
        $region133: #{decoder_layer.3} parent=131 // pred_check
          %p1200 = pneg %p376
        $region134: #{decoder_layer.3} parent=131 // pred_check_branch
          %1202 = sbr.rel (%p1200) target = $region136
        $region135: #{decoder_layer.3} parent=131 // pred_region
          %s1203 = sand.u32 %s361, 1
          %s1204 = scalar_lea.sflag [#allocation5], %s1203
          %s1205 = sand.u32 %s361, 1
          %s1206 = smul.addr %s1205, 8
          %s1207 = scalar_lea.vmem [#allocation23], %s1206
          %1208 = dma.done %s1204, 128
        $region136: #{decoder_layer.3} parent=131 // pred_fallthru
          _
      $region132: #{decoder_layer.3} parent=5 // pred_fallthru
        _
    $region6: #{decoder_layer.3} parent=1 // loop_footer
      %s42 = sadd.s32 1, %s38
    $region7: #{decoder_layer.3} parent=1 // loop_footer_branch
      %37 = sbr.rel target = $region3
    $region8: #{decoder_layer.3} parent=1 // loop_exit
      _
    %1209 = vsyncpa [#allocation4], 1
    %s1210 = scalar_lea.sflag [#allocation4], 1
    %1211 = vsyncpa %s1210, 1
    %1212 = vsyncpa [#allocation7], 1
    %s1213 = scalar_lea.sflag [#allocation7], 1
    %1214 = vsyncpa %s1213, 1
    %1215 = vsyncpa [#allocation10], 1
    %s1216 = scalar_lea.sflag [#allocation10], 1
    %1217 = vsyncpa %s1216, 1
    %1218 = vsyncpa [#allocation13], 1
    %s1219 = scalar_lea.sflag [#allocation13], 1
    %1220 = vsyncpa %s1219, 1
    %1221 = vsyncpa [#allocation16], 1
    %s1222 = scalar_lea.sflag [#allocation16], 1
    %1223 = vsyncpa %s1222, 1
    %1224 = vsyncpa [#allocation19], 1
    %1225 = vsyncpa [#allocation22], 1
    %1226 = vsyncpa [#allocation5], 1
    %s1227 = scalar_lea.sflag [#allocation5], 1
    %1228 = vsyncpa %s1227, 1

// kernel: decoder_layer.4
$region0: #{decoder_layer.4}
  #allocation0 [shape = 'u32[]', space=smem, size = 0x4, offset = 0x4, fixed_abs, tag = 'smem constant byte address 0x4 - core index']
  #allocation1 [shape = 'u32[144,128]{1,0:T(1,128)}', space=vmem, size = 0x12000, scoped, tag = 'internal scratch']
  #allocation2 [shape = 'f32[8,32]{1,0:T(8,128)}', space=vmem, size = 0x1000, scoped, tag = 'scratch operand']
  %s0 = inlined_call_operand.hbm [shape: f32[2,8,32], index: 0, kind: input, shape index: {}]
  %s1 = inlined_call_operand.hbm [shape: f32[2,16,32], index: 1, kind: input, shape index: {}]
  %s2 = inlined_call_operand.hbm [shape: bf16[4,32,8], index: 2, kind: input, shape index: {}]
  %s3 = inlined_call_operand.hbm [shape: f32[4,1,8], index: 3, kind: input, shape index: {}]
  %s4 = inlined_call_operand.hbm [shape: bf16[4,32,8], index: 4, kind: input, shape index: {}]
  %s5 = inlined_call_operand.hbm [shape: f32[4,1,8], index: 5, kind: input, shape index: {}]
  %s6 = inlined_call_operand.hbm [shape: bf16[4,32,8], index: 6, kind: input, shape index: {}]
  %s7 = inlined_call_operand.hbm [shape: f32[4,1,8], index: 7, kind: input, shape index: {}]
  %s8 = inlined_call_operand.hbm [shape: bf16[4,8,32], index: 8, kind: input, shape index: {}]
  %s9 = inlined_call_operand.hbm [shape: f32[1,32], index: 9, kind: input, shape index: {}]
  %s10 = inlined_call_operand.hbm [shape: f32[1,32], index: 10, kind: input, shape index: {}]
  %s11 = inlined_call_operand.hbm [shape: f32[1,32], index: 11, kind: input, shape index: {}]
  %s12 = inlined_call_operand.hbm [shape: f32[2,8,32], index: 12, kind: output, shape index: {}]
  %s13 = sld [smem:[#allocation0]]
  $region137: #{decoder_layer.4} parent=0
    _
  %s15 = ssub.s32 1, %s13
  %s16 = scalar_select 0, %s15, %s13
  $region1: #{decoder_layer.4} parent=0
    #allocation3 [shape = 'u8[8192]{0}', space=vmem, size = 0x2000, scoped, tag = 'input window, operand 0']
    #allocation4 [shape = 's32[2]{0}', space=sflag, size = 0x8, scoped, tag = 'scoped memory for decoder_layer.4']
    #allocation5 [shape = 's32[2]{0}', space=sflag, size = 0x8, scoped, tag = 'scoped memory for decoder_layer.4']
    #allocation6 [shape = 'u8[16384]{0}', space=vmem, size = 0x4000, scoped, tag = 'input window, operand 1']
    #allocation7 [shape = 's32[2]{0}', space=sflag, size = 0x8, scoped, tag = 'scoped memory for decoder_layer.4']
    #allocation8 [shape = 'u8[16384]{0}', space=vmem, size = 0x4000, scoped, tag = 'input window, operand 2']
    #allocation9 [shape = 'u8[1024]{0}', space=vmem, size = 0x400, scoped, tag = 'input window, operand 3']
    #allocation10 [shape = 's32[2]{0}', space=sflag, size = 0x8, scoped, tag = 'scoped memory for decoder_layer.4']
    #allocation11 [shape = 'u8[16384]{0}', space=vmem, size = 0x4000, scoped, tag = 'input window, operand 4']
    #allocation12 [shape = 'u8[1024]{0}', space=vmem, size = 0x400, scoped, tag = 'input window, operand 5']
    #allocation13 [shape = 's32[2]{0}', space=sflag, size = 0x8, scoped, tag = 'scoped memory for decoder_layer.4']
    #allocation14 [shape = 'u8[16384]{0}', space=vmem, size = 0x4000, scoped, tag = 'input window, operand 6']
    #allocation15 [shape = 'u8[1024]{0}', space=vmem, size = 0x400, scoped, tag = 'input window, operand 7']
    #allocation16 [shape = 's32[2]{0}', space=sflag, size = 0x8, scoped, tag = 'scoped memory for decoder_layer.4']
    #allocation17 [shape = 'u8[4096]{0}', space=vmem, size = 0x1000, scoped, tag = 'input window, operand 8']
    #allocation18 [shape = 'u8[512]{0}', space=vmem, size = 0x400, scoped, tag = 'input window, operand 9, single buffered']
    #allocation19 [shape = 's32[1]{0}', space=sflag, size = 0x4, scoped, tag = 'scoped memory for decoder_layer.4']
    #allocation20 [shape = 'u8[512]{0}', space=vmem, size = 0x400, scoped, tag = 'input window, operand 10, single buffered']
    #allocation21 [shape = 'u8[512]{0}', space=vmem, size = 0x400, scoped, tag = 'input window, operand 11, single buffered']
    #allocation22 [shape = 's32[1]{0}', space=sflag, size = 0x4, scoped, tag = 'scoped memory for decoder_layer.4']
    #allocation23 [shape = 'u8[8192]{0}', space=vmem, size = 0x2000, scoped, tag = 'output window, operand 0']
    %17 = vsyncpa [#allocation4], 0
    %s18 = scalar_lea.sflag [#allocation4], 1
    %19 = vsyncpa %s18, 0
    %20 = vsyncpa [#allocation7], 0
    %s21 = scalar_lea.sflag [#allocation7], 1
    %22 = vsyncpa %s21, 0
    %23 = vsyncpa [#allocation10], 0
    %s24 = scalar_lea.sflag [#allocation10], 1
    %25 = vsyncpa %s24, 0
    %26 = vsyncpa [#allocation13], 0
    %s27 = scalar_lea.sflag [#allocation13], 1
    %28 = vsyncpa %s27, 0
    %29 = vsyncpa [#allocation16], 0
    %s30 = scalar_lea.sflag [#allocation16], 1
    %31 = vsyncpa %s30, 0
    %32 = vsyncpa [#allocation19], 0
    %33 = vsyncpa [#allocation22], 0
    %34 = vsyncpa [#allocation5], 0
    %s35 = scalar_lea.sflag [#allocation5], 1
    %36 = vsyncpa %s35, 0
    loop: start=0, step=1, limit=10
    $region2: #{decoder_layer.4} parent=1 // loop_pre_header
      _
    $region3: #{decoder_layer.4} parent=1 // loop_header
      %s38 = sphi 0, %s42
      %p39 = scmp.ge.s32.totalorder %s38, 10
      %s45 = sphi 0, %s57
      %s46 = sphi 0, %s53
      %s47 = sphi 0, %s45
      %s48 = sphi 0, %s46
      %s49 = sphi 0, %s47
      %s50 = sphi 0, %s48
      %s60 = sphi 0, %s62
      %s63 = sphi 0, %s60
      %s64 = sphi 0, %s63
      %s80 = sphi 0, %s64
      %s86 = sphi 0, %s88
      %s89 = sphi 0, %s86
      %s90 = sphi 0, %s89
      %s106 = sphi 0, %s90
      %s112 = sphi 0, %s114
      %s115 = sphi 0, %s112
      %s116 = sphi 0, %s115
      %s132 = sphi 0, %s116
      %s138 = sphi 0, %s140
      %s141 = sphi 0, %s138
      %s142 = sphi 0, %s141
      %s158 = sphi 0, %s142
      %s164 = sphi 0, %s166
      %s167 = sphi 0, %s164
      %s168 = sphi 0, %s167
      %s184 = sphi 0, %s168
      %s190 = sphi 0, %s192
      %s193 = sphi 0, %s190
      %s194 = sphi 0, %s193
      %s210 = sphi 0, %s194
      %s216 = sphi 0, %s218
      %s219 = sphi 0, %s216
      %s220 = sphi 0, %s219
      %s236 = sphi 0, %s220
      %s242 = sphi 0, %s244
      %s245 = sphi 0, %s242
      %s246 = sphi 0, %s245
      %s262 = sphi 0, %s246
      %s268 = sphi 0, %s270
      %s271 = sphi 0, %s268
      %s272 = sphi 0, %s271
      %s288 = sphi 0, %s272
      %s292 = sphi 0, %s292
      %s294 = sphi 0, %s292
      %s295 = sphi 0, %s294
      %s309 = sphi 0, %s295
      %s313 = sphi 0, %s313
      %s315 = sphi 0, %s313
      %s316 = sphi 0, %s315
      %s330 = sphi 0, %s316
      %s334 = sphi 0, %s334
      %s336 = sphi 0, %s334
      %s337 = sphi 0, %s336
      %s351 = sphi 0, %s337
      %s357 = sphi 0, %s359
      %s360 = sphi 0, %s357
      %s361 = sphi 0, %s360
      %s377 = sphi 0, %s361
    $region4: #{decoder_layer.4} parent=1 // loop_header_branch
      %41 = sbr.rel (%p39) target = $region8
    $region5: #{decoder_layer.4} parent=1 // loop_body
      %s43 = ssub.s32 %s38, 1
      %s44 = ssub.s32 %s38, 2
      %s51 = sadd.s32 1, %s46
      %p52 = scmp.ge.s32.totalorder %s51, 4
      %s53 = scalar_select %p52, 0, %s51
      %s54 = sadd.s32 1, %s45
      %s55 = scalar_select %p52, %s54, %s45
      %p56 = scmp.ge.s32.totalorder %s55, 2
      %s57 = scalar_select %p56, 0, %s55
      %s58 = ssub.s32 %s45, %s57
      %p59 = scmp.eq.s32.totalorder %s58, 0
      %s61 = sadd.s32 %s60, 1
      %s62 = scalar_select %p59, %s60, %s61
      %p65 = pneg %p59
      %p66 = scmp.eq.s32.totalorder %s38, 7
      %p67 = por %p65, %p66
      %p68 = scmp.ne.s32.totalorder %s60, %s63
      %p69 = scmp.eq.s32.totalorder %s38, 0
      %p70 = por %p68, %p69
      %p71 = scmp.ne.s32.totalorder %s60, %s63
      %p72 = scmp.eq.s32.totalorder %s43, 7
      %p73 = por %p71, %p72
      %p74 = scmp.ne.s32.totalorder %s63, %s64
      %p75 = scmp.eq.s32.totalorder %s43, 0
      %p76 = por %p74, %p75
      %p77 = scmp.ne.s32.totalorder %s63, %s64
      %p78 = scmp.eq.s32.totalorder %s44, 7
      %p79 = por %p77, %p78
      %p81 = scmp.ne.s32.totalorder %s64, %s80
      %p82 = scmp.eq.s32.totalorder %s44, 0
      %p83 = por %p81, %p82
      %s84 = ssub.s32 %s45, %s57
      %p85 = scmp.eq.s32.totalorder %s84, 0
      %s87 = sadd.s32 %s86, 1
      %s88 = scalar_select %p85, %s86, %s87
      %p91 = pneg %p85
      %p92 = scmp.eq.s32.totalorder %s38, 7
      %p93 = por %p91, %p92
      %p94 = scmp.ne.s32.totalorder %s86, %s89
      %p95 = scmp.eq.s32.totalorder %s38, 0
      %p96 = por %p94, %p95
      %p97 = scmp.ne.s32.totalorder %s86, %s89
      %p98 = scmp.eq.s32.totalorder %s43, 7
      %p99 = por %p97, %p98
      %p100 = scmp.ne.s32.totalorder %s89, %s90
      %p101 = scmp.eq.s32.totalorder %s43, 0
      %p102 = por %p100, %p101
      %p103 = scmp.ne.s32.totalorder %s89, %s90
      %p104 = scmp.eq.s32.totalorder %s44, 7
      %p105 = por %p103, %p104
      %p107 = scmp.ne.s32.totalorder %s90, %s106
      %p108 = scmp.eq.s32.totalorder %s44, 0
      %p109 = por %p107, %p108
      %s110 = ssub.s32 %s46, %s53
      %p111 = scmp.eq.s32.totalorder %s110, 0
      %s113 = sadd.s32 %s112, 1
      %s114 = scalar_select %p111, %s112, %s113
      %p117 = pneg %p111
      %p118 = scmp.eq.s32.totalorder %s38, 7
      %p119 = por %p117, %p118
      %p120 = scmp.ne.s32.totalorder %s112, %s115
      %p121 = scmp.eq.s32.totalorder %s38, 0
      %p122 = por %p120, %p121
      %p123 = scmp.ne.s32.totalorder %s112, %s115
      %p124 = scmp.eq.s32.totalorder %s43, 7
      %p125 = por %p123, %p124
      %p126 = scmp.ne.s32.totalorder %s115, %s116
      %p127 = scmp.eq.s32.totalorder %s43, 0
      %p128 = por %p126, %p127
      %p129 = scmp.ne.s32.totalorder %s115, %s116
      %p130 = scmp.eq.s32.totalorder %s44, 7
      %p131 = por %p129, %p130
      %p133 = scmp.ne.s32.totalorder %s116, %s132
      %p134 = scmp.eq.s32.totalorder %s44, 0
      %p135 = por %p133, %p134
      %s136 = ssub.s32 %s46, %s53
      %p137 = scmp.eq.s32.totalorder %s136, 0
      %s139 = sadd.s32 %s138, 1
      %s140 = scalar_select %p137, %s138, %s139
      %p143 = pneg %p137
      %p144 = scmp.eq.s32.totalorder %s38, 7
      %p145 = por %p143, %p144
      %p146 = scmp.ne.s32.totalorder %s138, %s141
      %p147 = scmp.eq.s32.totalorder %s38, 0
      %p148 = por %p146, %p147
      %p149 = scmp.ne.s32.totalorder %s138, %s141
      %p150 = scmp.eq.s32.totalorder %s43, 7
      %p151 = por %p149, %p150
      %p152 = scmp.ne.s32.totalorder %s141, %s142
      %p153 = scmp.eq.s32.totalorder %s43, 0
      %p154 = por %p152, %p153
      %p155 = scmp.ne.s32.totalorder %s141, %s142
      %p156 = scmp.eq.s32.totalorder %s44, 7
      %p157 = por %p155, %p156
      %p159 = scmp.ne.s32.totalorder %s142, %s158
      %p160 = scmp.eq.s32.totalorder %s44, 0
      %p161 = por %p159, %p160
      %s162 = ssub.s32 %s46, %s53
      %p163 = scmp.eq.s32.totalorder %s162, 0
      %s165 = sadd.s32 %s164, 1
      %s166 = scalar_select %p163, %s164, %s165
      %p169 = pneg %p163
      %p170 = scmp.eq.s32.totalorder %s38, 7
      %p171 = por %p169, %p170
      %p172 = scmp.ne.s32.totalorder %s164, %s167
      %p173 = scmp.eq.s32.totalorder %s38, 0
      %p174 = por %p172, %p173
      %p175 = scmp.ne.s32.totalorder %s164, %s167
      %p176 = scmp.eq.s32.totalorder %s43, 7
      %p177 = por %p175, %p176
      %p178 = scmp.ne.s32.totalorder %s167, %s168
      %p179 = scmp.eq.s32.totalorder %s43, 0
      %p180 = por %p178, %p179
      %p181 = scmp.ne.s32.totalorder %s167, %s168
      %p182 = scmp.eq.s32.totalorder %s44, 7
      %p183 = por %p181, %p182
      %p185 = scmp.ne.s32.totalorder %s168, %s184
      %p186 = scmp.eq.s32.totalorder %s44, 0
      %p187 = por %p185, %p186
      %s188 = ssub.s32 %s46, %s53
      %p189 = scmp.eq.s32.totalorder %s188, 0
      %s191 = sadd.s32 %s190, 1
      %s192 = scalar_select %p189, %s190, %s191
      %p195 = pneg %p189
      %p196 = scmp.eq.s32.totalorder %s38, 7
      %p197 = por %p195, %p196
      %p198 = scmp.ne.s32.totalorder %s190, %s193
      %p199 = scmp.eq.s32.totalorder %s38, 0
      %p200 = por %p198, %p199
      %p201 = scmp.ne.s32.totalorder %s190, %s193
      %p202 = scmp.eq.s32.totalorder %s43, 7
      %p203 = por %p201, %p202
      %p204 = scmp.ne.s32.totalorder %s193, %s194
      %p205 = scmp.eq.s32.totalorder %s43, 0
      %p206 = por %p204, %p205
      %p207 = scmp.ne.s32.totalorder %s193, %s194
      %p208 = scmp.eq.s32.totalorder %s44, 7
      %p209 = por %p207, %p208
      %p211 = scmp.ne.s32.totalorder %s194, %s210
      %p212 = scmp.eq.s32.totalorder %s44, 0
      %p213 = por %p211, %p212
      %s214 = ssub.s32 %s46, %s53
      %p215 = scmp.eq.s32.totalorder %s214, 0
      %s217 = sadd.s32 %s216, 1
      %s218 = scalar_select %p215, %s216, %s217
      %p221 = pneg %p215
      %p222 = scmp.eq.s32.totalorder %s38, 7
      %p223 = por %p221, %p222
      %p224 = scmp.ne.s32.totalorder %s216, %s219
      %p225 = scmp.eq.s32.totalorder %s38, 0
      %p226 = por %p224, %p225
      %p227 = scmp.ne.s32.totalorder %s216, %s219
      %p228 = scmp.eq.s32.totalorder %s43, 7
      %p229 = por %p227, %p228
      %p230 = scmp.ne.s32.totalorder %s219, %s220
      %p231 = scmp.eq.s32.totalorder %s43, 0
      %p232 = por %p230, %p231
      %p233 = scmp.ne.s32.totalorder %s219, %s220
      %p234 = scmp.eq.s32.totalorder %s44, 7
      %p235 = por %p233, %p234
      %p237 = scmp.ne.s32.totalorder %s220, %s236
      %p238 = scmp.eq.s32.totalorder %s44, 0
      %p239 = por %p237, %p238
      %s240 = ssub.s32 %s46, %s53
      %p241 = scmp.eq.s32.totalorder %s240, 0
      %s243 = sadd.s32 %s242, 1
      %s244 = scalar_select %p241, %s242, %s243
      %p247 = pneg %p241
      %p248 = scmp.eq.s32.totalorder %s38, 7
      %p249 = por %p247, %p248
      %p250 = scmp.ne.s32.totalorder %s242, %s245
      %p251 = scmp.eq.s32.totalorder %s38, 0
      %p252 = por %p250, %p251
      %p253 = scmp.ne.s32.totalorder %s242, %s245
      %p254 = scmp.eq.s32.totalorder %s43, 7
      %p255 = por %p253, %p254
      %p256 = scmp.ne.s32.totalorder %s245, %s246
      %p257 = scmp.eq.s32.totalorder %s43, 0
      %p258 = por %p256, %p257
      %p259 = scmp.ne.s32.totalorder %s245, %s246
      %p260 = scmp.eq.s32.totalorder %s44, 7
      %p261 = por %p259, %p260
      %p263 = scmp.ne.s32.totalorder %s246, %s262
      %p264 = scmp.eq.s32.totalorder %s44, 0
      %p265 = por %p263, %p264
      %s266 = ssub.s32 %s46, %s53
      %p267 = scmp.eq.s32.totalorder %s266, 0
      %s269 = sadd.s32 %s268, 1
      %s270 = scalar_select %p267, %s268, %s269
      %p273 = pneg %p267
      %p274 = scmp.eq.s32.totalorder %s38, 7
      %p275 = por %p273, %p274
      %p276 = scmp.ne.s32.totalorder %s268, %s271
      %p277 = scmp.eq.s32.totalorder %s38, 0
      %p278 = por %p276, %p277
      %p279 = scmp.ne.s32.totalorder %s268, %s271
      %p280 = scmp.eq.s32.totalorder %s43, 7
      %p281 = por %p279, %p280
      %p282 = scmp.ne.s32.totalorder %s271, %s272
      %p283 = scmp.eq.s32.totalorder %s43, 0
      %p284 = por %p282, %p283
      %p285 = scmp.ne.s32.totalorder %s271, %s272
      %p286 = scmp.eq.s32.totalorder %s44, 7
      %p287 = por %p285, %p286
      %p289 = scmp.ne.s32.totalorder %s272, %s288
      %p290 = scmp.eq.s32.totalorder %s44, 0
      %p291 = por %p289, %p290
      %s293 = sadd.s32 %s292, 1
      %p296 = scmp.eq.s32.totalorder %s38, 7
      %p297 = scmp.ne.s32.totalorder %s292, %s294
      %p298 = scmp.eq.s32.totalorder %s38, 0
      %p299 = por %p297, %p298
      %p300 = scmp.ne.s32.totalorder %s292, %s294
      %p301 = scmp.eq.s32.totalorder %s43, 7
      %p302 = por %p300, %p301
      %p303 = scmp.ne.s32.totalorder %s294, %s295
      %p304 = scmp.eq.s32.totalorder %s43, 0
      %p305 = por %p303, %p304
      %p306 = scmp.ne.s32.totalorder %s294, %s295
      %p307 = scmp.eq.s32.totalorder %s44, 7
      %p308 = por %p306, %p307
      %p310 = scmp.ne.s32.totalorder %s295, %s309
      %p311 = scmp.eq.s32.totalorder %s44, 0
      %p312 = por %p310, %p311
      %s314 = sadd.s32 %s313, 1
      %p317 = scmp.eq.s32.totalorder %s38, 7
      %p318 = scmp.ne.s32.totalorder %s313, %s315
      %p319 = scmp.eq.s32.totalorder %s38, 0
      %p320 = por %p318, %p319
      %p321 = scmp.ne.s32.totalorder %s313, %s315
      %p322 = scmp.eq.s32.totalorder %s43, 7
      %p323 = por %p321, %p322
      %p324 = scmp.ne.s32.totalorder %s315, %s316
      %p325 = scmp.eq.s32.totalorder %s43, 0
      %p326 = por %p324, %p325
      %p327 = scmp.ne.s32.totalorder %s315, %s316
      %p328 = scmp.eq.s32.totalorder %s44, 7
      %p329 = por %p327, %p328
      %p331 = scmp.ne.s32.totalorder %s316, %s330
      %p332 = scmp.eq.s32.totalorder %s44, 0
      %p333 = por %p331, %p332
      %s335 = sadd.s32 %s334, 1
      %p338 = scmp.eq.s32.totalorder %s38, 7
      %p339 = scmp.ne.s32.totalorder %s334, %s336
      %p340 = scmp.eq.s32.totalorder %s38, 0
      %p341 = por %p339, %p340
      %p342 = scmp.ne.s32.totalorder %s334, %s336
      %p343 = scmp.eq.s32.totalorder %s43, 7
      %p344 = por %p342, %p343
      %p345 = scmp.ne.s32.totalorder %s336, %s337
      %p346 = scmp.eq.s32.totalorder %s43, 0
      %p347 = por %p345, %p346
      %p348 = scmp.ne.s32.totalorder %s336, %s337
      %p349 = scmp.eq.s32.totalorder %s44, 7
      %p350 = por %p348, %p349
      %p352 = scmp.ne.s32.totalorder %s337, %s351
      %p353 = scmp.eq.s32.totalorder %s44, 0
      %p354 = por %p352, %p353
      %s355 = ssub.s32 %s45, %s57
      %p356 = scmp.eq.s32.totalorder %s355, 0
      %s358 = sadd.s32 %s357, 1
      %s359 = scalar_select %p356, %s357, %s358
      %p362 = pneg %p356
      %p363 = scmp.eq.s32.totalorder %s38, 7
      %p364 = por %p362, %p363
      %p365 = scmp.ne.s32.totalorder %s357, %s360
      %p366 = scmp.eq.s32.totalorder %s38, 0
      %p367 = por %p365, %p366
      %p368 = scmp.ne.s32.totalorder %s357, %s360
      %p369 = scmp.eq.s32.totalorder %s43, 7
      %p370 = por %p368, %p369
      %p371 = scmp.ne.s32.totalorder %s360, %s361
      %p372 = scmp.eq.s32.totalorder %s43, 0
      %p373 = por %p371, %p372
      %p374 = scmp.ne.s32.totalorder %s360, %s361
      %p375 = scmp.eq.s32.totalorder %s44, 7
      %p376 = por %p374, %p375
      %p378 = scmp.ne.s32.totalorder %s361, %s377
      %p379 = scmp.eq.s32.totalorder %s44, 0
      %p380 = por %p378, %p379
      %p381 = scmp.le.s32.totalorder 1, %s38
      %p382 = scmp.lt.s32.totalorder %s38, 9
      %p383 = pnand %p381, %p382
      %p384 = pneg %p383
      // Predicated region
      $region9: #{decoder_layer.4} parent=5 // pred_check
        _
      $region10: #{decoder_layer.4} parent=5 // pred_check_branch
        %386 = sbr.rel (%p383) target = $region12
      $region11: #{decoder_layer.4} parent=5 // pred_region
        %s387 = ssub.s32 %s38, 1
        // Predicated region
        $region13: #{decoder_layer.4} parent=11 // pred_check
          %p388 = pneg %p305
        $region14: #{decoder_layer.4} parent=11 // pred_check_branch
          %390 = sbr.rel (%p388) target = $region16
        $region15: #{decoder_layer.4} parent=11 // pred_region
          %s392 = ssub.s32 16, 16
          %393 = vsyncadd [#allocation19], %s392
          %s395 = sshll.u32 [#allocation18], 4
          %s396 = int_to_ptr.vmem [resolvable:$true] %s395
          %398 = dma.hbm_to_vmem [thread:$0]  %s9, 16, %s396, [#allocation19]
        $region16: #{decoder_layer.4} parent=11 // pred_fallthru
          _
        // Predicated region
        $region17: #{decoder_layer.4} parent=11 // pred_check
          %p399 = pneg %p326
        $region18: #{decoder_layer.4} parent=11 // pred_check_branch
          %401 = sbr.rel (%p399) target = $region20
        $region19: #{decoder_layer.4} parent=11 // pred_region
          %s403 = ssub.s32 16, 16
          %404 = vsyncadd [#allocation19], %s403
          %s406 = sshll.u32 [#allocation20], 4
          %s407 = int_to_ptr.vmem [resolvable:$true] %s406
          %409 = dma.hbm_to_vmem [thread:$0]  %s10, 16, %s407, [#allocation19]
        $region20: #{decoder_layer.4} parent=11 // pred_fallthru
          _
        // Predicated region
        $region21: #{decoder_layer.4} parent=11 // pred_check
          %p410 = pneg %p347
        $region22: #{decoder_layer.4} parent=11 // pred_check_branch
          %412 = sbr.rel (%p410) target = $region24
        $region23: #{decoder_layer.4} parent=11 // pred_region
          %s414 = ssub.s32 16, 16
          %415 = vsyncadd [#allocation22], %s414
          %s417 = sshll.u32 [#allocation21], 4
          %s418 = int_to_ptr.vmem [resolvable:$true] %s417
          %420 = dma.hbm_to_vmem [thread:$0]  %s11, 16, %s418, [#allocation22]
        $region24: #{decoder_layer.4} parent=11 // pred_fallthru
          _
      $region12: #{decoder_layer.4} parent=5 // pred_fallthru
        _
      %p421 = scmp.lt.s32.totalorder %s38, 8
      // Predicated region
      $region25: #{decoder_layer.4} parent=5 // pred_check
        %p422 = pneg %p421
      $region26: #{decoder_layer.4} parent=5 // pred_check_branch
        %424 = sbr.rel (%p422) target = $region28
      $region27: #{decoder_layer.4} parent=5 // pred_region
        // Predicated region
        $region29: #{decoder_layer.4} parent=27 // pred_check
          %p425 = pneg %p70
        $region30: #{decoder_layer.4} parent=27 // pred_check_branch
          %427 = sbr.rel (%p425) target = $region32
        $region31: #{decoder_layer.4} parent=27 // pred_region
          %s428 = sand.u32 %s60, 1
          %s429 = scalar_lea.sflag [#allocation4], %s428
          %s430 = sand.u32 %s60, 1
          %s431 = smul.addr %s430, 8
          %s432 = scalar_lea.vmem [#allocation3], %s431
          %s434 = ssub.s32 128, 128
          %435 = vsyncadd %s429, %s434
          %s436 = smul.addr %s45, 128
          %s437 = scalar_lea.hbm %s0, %s436
          %s439 = sshll.u32 %s432, 4
          %s440 = int_to_ptr.vmem [resolvable:$true] %s439
          %442 = dma.hbm_to_vmem [thread:$0]  %s437, 128, %s440, %s429
        $region32: #{decoder_layer.4} parent=27 // pred_fallthru
          _
        // Predicated region
        $region33: #{decoder_layer.4} parent=27 // pred_check
          %p443 = pneg %p96
        $region34: #{decoder_layer.4} parent=27 // pred_check_branch
          %445 = sbr.rel (%p443) target = $region36
        $region35: #{decoder_layer.4} parent=27 // pred_region
          %s446 = sand.u32 %s38, 1
          %s447 = scalar_lea.sflag [#allocation7], %s446
          %s448 = sand.u32 %s86, 1
          %s449 = smul.addr %s448, 16
          %s450 = scalar_lea.vmem [#allocation6], %s449
          %s452 = ssub.s32 256, 256
          %453 = vsyncadd %s447, %s452
          %s454 = smul.addr %s45, 2
          %s455 = smul.addr %s454, 128
          %s456 = scalar_lea.hbm %s1, %s455
          %s457 = sshll.u32 %s450, 4
          %s458 = int_to_ptr.vmem [resolvable:$true] %s457
          %463 = dma.hbm_to_vmem [thread:$0]  %s456, 256, %s458, %s447, 128, 128, 8
        $region36: #{decoder_layer.4} parent=27 // pred_fallthru
          _
        // Predicated region
        $region37: #{decoder_layer.4} parent=27 // pred_check
          %p464 = pneg %p122
        $region38: #{decoder_layer.4} parent=27 // pred_check_branch
          %466 = sbr.rel (%p464) target = $region40
        $region39: #{decoder_layer.4} parent=27 // pred_region
          %s467 = sand.u32 %s38, 1
          %s468 = scalar_lea.sflag [#allocation7], %s467
          %s469 = sand.u32 %s112, 1
          %s470 = smul.addr %s469, 16
          %s471 = scalar_lea.vmem [#allocation8], %s470
          %s473 = ssub.s32 256, 256
          %474 = vsyncadd %s468, %s473
          %s475 = smul.addr %s46, 4
          %s476 = smul.addr %s475, 64
          %s477 = scalar_lea.hbm %s2, %s476
          %s478 = sshll.u32 %s471, 4
          %s479 = int_to_ptr.vmem [resolvable:$true] %s478
          %484 = dma.hbm_to_vmem [thread:$0]  %s477, 256, %s479, %s468, 64, 64, 4
        $region40: #{decoder_layer.4} parent=27 // pred_fallthru
          _
        // Predicated region
        $region41: #{decoder_layer.4} parent=27 // pred_check
          %p485 = pneg %p148
        $region42: #{decoder_layer.4} parent=27 // pred_check_branch
          %487 = sbr.rel (%p485) target = $region44
        $region43: #{decoder_layer.4} parent=27 // pred_region
          %s488 = sand.u32 %s38, 1
          %s489 = scalar_lea.sflag [#allocation10], %s488
          %s490 = sand.u32 %s138, 1
          %s491 = scalar_lea.vmem [#allocation9], %s490
          %s493 = ssub.s32 16, 16
          %494 = vsyncadd %s489, %s493
          %s495 = smul.addr %s46, 16
          %s496 = scalar_lea.hbm %s3, %s495
          %s498 = sshll.u32 %s491, 4
          %s499 = int_to_ptr.vmem [resolvable:$true] %s498
          %501 = dma.hbm_to_vmem [thread:$0]  %s496, 16, %s499, %s489
        $region44: #{decoder_layer.4} parent=27 // pred_fallthru
          _
        // Predicated region
        $region45: #{decoder_layer.4} parent=27 // pred_check
          %p502 = pneg %p174
        $region46: #{decoder_layer.4} parent=27 // pred_check_branch
          %504 = sbr.rel (%p502) target = $region48
        $region47: #{decoder_layer.4} parent=27 // pred_region
          %s505 = sand.u32 %s38, 1
          %s506 = scalar_lea.sflag [#allocation10], %s505
          %s507 = sand.u32 %s164, 1
          %s508 = smul.addr %s507, 16
          %s509 = scalar_lea.vmem [#allocation11], %s508
          %s511 = ssub.s32 256, 256
          %512 = vsyncadd %s506, %s511
          %s513 = smul.addr %s46, 4
          %s514 = smul.addr %s513, 64
          %s515 = scalar_lea.hbm %s4, %s514
          %s516 = sshll.u32 %s509, 4
          %s517 = int_to_ptr.vmem [resolvable:$true] %s516
          %522 = dma.hbm_to_vmem [thread:$0]  %s515, 256, %s517, %s506, 64, 64, 4
        $region48: #{decoder_layer.4} parent=27 // pred_fallthru
          _
        // Predicated region
        $region49: #{decoder_layer.4} parent=27 // pred_check
          %p523 = pneg %p200
        $region50: #{decoder_layer.4} parent=27 // pred_check_branch
          %525 = sbr.rel (%p523) target = $region52
        $region51: #{decoder_layer.4} parent=27 // pred_region
          %s526 = sand.u32 %s38, 1
          %s527 = scalar_lea.sflag [#allocation13], %s526
          %s528 = sand.u32 %s190, 1
          %s529 = scalar_lea.vmem [#allocation12], %s528
          %s531 = ssub.s32 16, 16
          %532 = vsyncadd %s527, %s531
          %s533 = smul.addr %s46, 16
          %s534 = scalar_lea.hbm %s5, %s533
          %s536 = sshll.u32 %s529, 4
          %s537 = int_to_ptr.vmem [resolvable:$true] %s536
          %539 = dma.hbm_to_vmem [thread:$0]  %s534, 16, %s537, %s527
        $region52: #{decoder_layer.4} parent=27 // pred_fallthru
          _
        // Predicated region
        $region53: #{decoder_layer.4} parent=27 // pred_check
          %p540 = pneg %p226
        $region54: #{decoder_layer.4} parent=27 // pred_check_branch
          %542 = sbr.rel (%p540) target = $region56
        $region55: #{decoder_layer.4} parent=27 // pred_region
          %s543 = sand.u32 %s38, 1
          %s544 = scalar_lea.sflag [#allocation13], %s543
          %s545 = sand.u32 %s216, 1
          %s546 = smul.addr %s545, 16
          %s547 = scalar_lea.vmem [#allocation14], %s546
          %s549 = ssub.s32 256, 256
          %550 = vsyncadd %s544, %s549
          %s551 = smul.addr %s46, 4
          %s552 = smul.addr %s551, 64
          %s553 = scalar_lea.hbm %s6, %s552
          %s554 = sshll.u32 %s547, 4
          %s555 = int_to_ptr.vmem [resolvable:$true] %s554
          %560 = dma.hbm_to_vmem [thread:$0]  %s553, 256, %s555, %s544, 64, 64, 4
        $region56: #{decoder_layer.4} parent=27 // pred_fallthru
          _
        // Predicated region
        $region57: #{decoder_layer.4} parent=27 // pred_check
          %p561 = pneg %p252
        $region58: #{decoder_layer.4} parent=27 // pred_check_branch
          %563 = sbr.rel (%p561) target = $region60
        $region59: #{decoder_layer.4} parent=27 // pred_region
          %s564 = sand.u32 %s38, 1
          %s565 = scalar_lea.sflag [#allocation16], %s564
          %s566 = sand.u32 %s242, 1
          %s567 = scalar_lea.vmem [#allocation15], %s566
          %s569 = ssub.s32 16, 16
          %570 = vsyncadd %s565, %s569
          %s571 = smul.addr %s46, 16
          %s572 = scalar_lea.hbm %s7, %s571
          %s574 = sshll.u32 %s567, 4
          %s575 = int_to_ptr.vmem [resolvable:$true] %s574
          %577 = dma.hbm_to_vmem [thread:$0]  %s572, 16, %s575, %s565
        $region60: #{decoder_layer.4} parent=27 // pred_fallthru
          _
        // Predicated region
        $region61: #{decoder_layer.4} parent=27 // pred_check
          %p578 = pneg %p278
        $region62: #{decoder_layer.4} parent=27 // pred_check_branch
          %580 = sbr.rel (%p578) target = $region64
        $region63: #{decoder_layer.4} parent=27 // pred_region
          %s581 = sand.u32 %s38, 1
          %s582 = scalar_lea.sflag [#allocation16], %s581
          %s583 = sand.u32 %s268, 1
          %s584 = smul.addr %s583, 4
          %s585 = scalar_lea.vmem [#allocation17], %s584
          %s587 = ssub.s32 64, 64
          %588 = vsyncadd %s582, %s587
          %s589 = smul.addr %s46, 64
          %s590 = scalar_lea.hbm %s8, %s589
          %s592 = sshll.u32 %s585, 4
          %s593 = int_to_ptr.vmem [resolvable:$true] %s592
          %595 = dma.hbm_to_vmem [thread:$0]  %s590, 64, %s593, %s582
        $region64: #{decoder_layer.4} parent=27 // pred_fallthru
          _
      $region28: #{decoder_layer.4} parent=5 // pred_fallthru
        _
      %p596 = scmp.le.s32.totalorder 1, %s38
      %p597 = scmp.lt.s32.totalorder %s38, 9
      %p598 = pnand %p596, %p597
      %p599 = pneg %p598
      // Predicated region
      $region65: #{decoder_layer.4} parent=5 // pred_check
        _
      $region66: #{decoder_layer.4} parent=5 // pred_check_branch
        %601 = sbr.rel (%p598) target = $region68
      $region67: #{decoder_layer.4} parent=5 // pred_region
        %s602 = ssub.s32 %s38, 1
        %s603 = sand.u32 %s63, 1
        %s604 = scalar_lea.sflag [#allocation4], %s603
        %s605 = sand.u32 %s63, 1
        %s606 = smul.addr %s605, 8
        %s607 = scalar_lea.vmem [#allocation3], %s606
        // Predicated region
        $region69: #{decoder_layer.4} parent=67 // pred_check
          %p608 = pneg %p76
        $region70: #{decoder_layer.4} parent=67 // pred_check_branch
          %610 = sbr.rel (%p608) target = $region72
        $region71: #{decoder_layer.4} parent=67 // pred_region
          %611 = dma.done %s604, 128
        $region72: #{decoder_layer.4} parent=67 // pred_fallthru
          _
        %s612 = sand.u32 %s43, 1
        %s613 = scalar_lea.sflag [#allocation7], %s612
        %s614 = sand.u32 %s89, 1
        %s615 = smul.addr %s614, 16
        %s616 = scalar_lea.vmem [#allocation6], %s615
        // Predicated region
        $region73: #{decoder_layer.4} parent=67 // pred_check
          %p617 = pneg %p102
        $region74: #{decoder_layer.4} parent=67 // pred_check_branch
          %619 = sbr.rel (%p617) target = $region76
        $region75: #{decoder_layer.4} parent=67 // pred_region
          %620 = dma.done %s613, 256
        $region76: #{decoder_layer.4} parent=67 // pred_fallthru
          _
        %s621 = sand.u32 %s43, 1
        %s622 = scalar_lea.sflag [#allocation7], %s621
        %s623 = sand.u32 %s115, 1
        %s624 = smul.addr %s623, 16
        %s625 = scalar_lea.vmem [#allocation8], %s624
        // Predicated region
        $region77: #{decoder_layer.4} parent=67 // pred_check
          %p626 = pneg %p128
        $region78: #{decoder_layer.4} parent=67 // pred_check_branch
          %628 = sbr.rel (%p626) target = $region80
        $region79: #{decoder_layer.4} parent=67 // pred_region
          %629 = dma.done %s622, 256
        $region80: #{decoder_layer.4} parent=67 // pred_fallthru
          _
        %s630 = sand.u32 %s43, 1
        %s631 = scalar_lea.sflag [#allocation10], %s630
        %s632 = sand.u32 %s141, 1
        %s633 = scalar_lea.vmem [#allocation9], %s632
        // Predicated region
        $region81: #{decoder_layer.4} parent=67 // pred_check
          %p634 = pneg %p154
        $region82: #{decoder_layer.4} parent=67 // pred_check_branch
          %636 = sbr.rel (%p634) target = $region84
        $region83: #{decoder_layer.4} parent=67 // pred_region
          %637 = dma.done %s631, 16
        $region84: #{decoder_layer.4} parent=67 // pred_fallthru
          _
        %s638 = sand.u32 %s43, 1
        %s639 = scalar_lea.sflag [#allocation10], %s638
        %s640 = sand.u32 %s167, 1
        %s641 = smul.addr %s640, 16
        %s642 = scalar_lea.vmem [#allocation11], %s641
        // Predicated region
        $region85: #{decoder_layer.4} parent=67 // pred_check
          %p643 = pneg %p180
        $region86: #{decoder_layer.4} parent=67 // pred_check_branch
          %645 = sbr.rel (%p643) target = $region88
        $region87: #{decoder_layer.4} parent=67 // pred_region
          %646 = dma.done %s639, 256
        $region88: #{decoder_layer.4} parent=67 // pred_fallthru
          _
        %s647 = sand.u32 %s43, 1
        %s648 = scalar_lea.sflag [#allocation13], %s647
        %s649 = sand.u32 %s193, 1
        %s650 = scalar_lea.vmem [#allocation12], %s649
        // Predicated region
        $region89: #{decoder_layer.4} parent=67 // pred_check
          %p651 = pneg %p206
        $region90: #{decoder_layer.4} parent=67 // pred_check_branch
          %653 = sbr.rel (%p651) target = $region92
        $region91: #{decoder_layer.4} parent=67 // pred_region
          %654 = dma.done %s648, 16
        $region92: #{decoder_layer.4} parent=67 // pred_fallthru
          _
        %s655 = sand.u32 %s43, 1
        %s656 = scalar_lea.sflag [#allocation13], %s655
        %s657 = sand.u32 %s219, 1
        %s658 = smul.addr %s657, 16
        %s659 = scalar_lea.vmem [#allocation14], %s658
        // Predicated region
        $region93: #{decoder_layer.4} parent=67 // pred_check
          %p660 = pneg %p232
        $region94: #{decoder_layer.4} parent=67 // pred_check_branch
          %662 = sbr.rel (%p660) target = $region96
        $region95: #{decoder_layer.4} parent=67 // pred_region
          %663 = dma.done %s656, 256
        $region96: #{decoder_layer.4} parent=67 // pred_fallthru
          _
        %s664 = sand.u32 %s43, 1
        %s665 = scalar_lea.sflag [#allocation16], %s664
        %s666 = sand.u32 %s245, 1
        %s667 = scalar_lea.vmem [#allocation15], %s666
        // Predicated region
        $region97: #{decoder_layer.4} parent=67 // pred_check
          %p668 = pneg %p258
        $region98: #{decoder_layer.4} parent=67 // pred_check_branch
          %670 = sbr.rel (%p668) target = $region100
        $region99: #{decoder_layer.4} parent=67 // pred_region
          %671 = dma.done %s665, 16
        $region100: #{decoder_layer.4} parent=67 // pred_fallthru
          _
        %s672 = sand.u32 %s43, 1
        %s673 = scalar_lea.sflag [#allocation16], %s672
        %s674 = sand.u32 %s271, 1
        %s675 = smul.addr %s674, 4
        %s676 = scalar_lea.vmem [#allocation17], %s675
        // Predicated region
        $region101: #{decoder_layer.4} parent=67 // pred_check
          %p677 = pneg %p284
        $region102: #{decoder_layer.4} parent=67 // pred_check_branch
          %679 = sbr.rel (%p677) target = $region104
        $region103: #{decoder_layer.4} parent=67 // pred_region
          %680 = dma.done %s673, 64
        $region104: #{decoder_layer.4} parent=67 // pred_fallthru
          _
        // Predicated region
        $region105: #{decoder_layer.4} parent=67 // pred_check
          %p681 = pneg %p305
        $region106: #{decoder_layer.4} parent=67 // pred_check_branch
          %683 = sbr.rel (%p681) target = $region108
        $region107: #{decoder_layer.4} parent=67 // pred_region
          %684 = dma.done [#allocation19], 16
        $region108: #{decoder_layer.4} parent=67 // pred_fallthru
          _
        // Predicated region
        $region109: #{decoder_layer.4} parent=67 // pred_check
          %p685 = pneg %p326
        $region110: #{decoder_layer.4} parent=67 // pred_check_branch
          %687 = sbr.rel (%p685) target = $region112
        $region111: #{decoder_layer.4} parent=67 // pred_region
          %688 = dma.done [#allocation19], 16
        $region112: #{decoder_layer.4} parent=67 // pred_fallthru
          _
        // Predicated region
        $region113: #{decoder_layer.4} parent=67 // pred_check
          %p689 = pneg %p347
        $region114: #{decoder_layer.4} parent=67 // pred_check_branch
          %691 = sbr.rel (%p689) target = $region116
        $region115: #{decoder_layer.4} parent=67 // pred_region
          %692 = dma.done [#allocation22], 16
        $region116: #{decoder_layer.4} parent=67 // pred_fallthru
          _
        %s693 = sand.u32 %s63, 1
        %s694 = scalar_lea.sflag [#allocation4], %s693
        %s695 = sand.u32 %s63, 1
        %s696 = smul.addr %s695, 8
        %s697 = scalar_lea.vmem [#allocation3], %s696
        %p698 = pneg %p76
        %p699 = pneg %p73
        %s700 = sand.u32 %s43, 1
        %s701 = scalar_lea.sflag [#allocation7], %s700
        %s702 = sand.u32 %s89, 1
        %s703 = smul.addr %s702, 16
        %s704 = scalar_lea.vmem [#allocation6], %s703
        %p705 = pneg %p102
        %p706 = pneg %p99
        %s707 = sand.u32 %s43, 1
        %s708 = scalar_lea.sflag [#allocation7], %s707
        %s709 = sand.u32 %s115, 1
        %s710 = smul.addr %s709, 16
        %s711 = scalar_lea.vmem [#allocation8], %s710
        %p712 = pneg %p128
        %p713 = pneg %p125
        %s714 = sand.u32 %s43, 1
        %s715 = scalar_lea.sflag [#allocation10], %s714
        %s716 = sand.u32 %s141, 1
        %s717 = scalar_lea.vmem [#allocation9], %s716
        %p718 = pneg %p154
        %p719 = pneg %p151
        %s720 = sand.u32 %s43, 1
        %s721 = scalar_lea.sflag [#allocation10], %s720
        %s722 = sand.u32 %s167, 1
        %s723 = smul.addr %s722, 16
        %s724 = scalar_lea.vmem [#allocation11], %s723
        %p725 = pneg %p180
        %p726 = pneg %p177
        %s727 = sand.u32 %s43, 1
        %s728 = scalar_lea.sflag [#allocation13], %s727
        %s729 = sand.u32 %s193, 1
        %s730 = scalar_lea.vmem [#allocation12], %s729
        %p731 = pneg %p206
        %p732 = pneg %p203
        %s733 = sand.u32 %s43, 1
        %s734 = scalar_lea.sflag [#allocation13], %s733
        %s735 = sand.u32 %s219, 1
        %s736 = smul.addr %s735, 16
        %s737 = scalar_lea.vmem [#allocation14], %s736
        %p738 = pneg %p232
        %p739 = pneg %p229
        %s740 = sand.u32 %s43, 1
        %s741 = scalar_lea.sflag [#allocation16], %s740
        %s742 = sand.u32 %s245, 1
        %s743 = scalar_lea.vmem [#allocation15], %s742
        %p744 = pneg %p258
        %p745 = pneg %p255
        %s746 = sand.u32 %s43, 1
        %s747 = scalar_lea.sflag [#allocation16], %s746
        %s748 = sand.u32 %s271, 1
        %s749 = smul.addr %s748, 4
        %s750 = scalar_lea.vmem [#allocation17], %s749
        %p751 = pneg %p284
        %p752 = pneg %p281
        %p753 = pneg %p305
        %p754 = pneg %p302
        %p755 = pneg %p326
        %p756 = pneg %p323
        %p757 = pneg %p347
        %p758 = pneg %p344
        %p759 = pneg %p373
        %p760 = pneg %p370
        %s761 = sand.u32 %s360, 1
        %s762 = scalar_lea.sflag [#allocation5], %s761
        %s763 = sand.u32 %s360, 1
        %s764 = smul.addr %s763, 8
        %s765 = scalar_lea.vmem [#allocation23], %s764
        %p767 = scmp.eq.s32.totalorder %s48, 0
        // Predicated region
        $region117: #{decoder_layer.4} parent=67 // pred_check
          %p768 = pneg %p767
        $region118: #{decoder_layer.4} parent=67 // pred_check_branch
          %770 = sbr.rel (%p768) target = $region120
        $region119: #{decoder_layer.4} parent=67 // pred_region
          %vm771 = vcmask 261120
          %772 = vst.msk [vmem:[#allocation2] sm:$0xff] %vm771, 0.0
        $region120: #{decoder_layer.4} parent=67 // pred_fallthru
          _
        %v773 = vld [vmem:[%s607] sm:$0xff]
        %v774 = vld [vmem:[%s616] sm:$0xff]
        %v775 = vld [vmem:[%s616 + $0x8] sm:$0xff]
        %v776 = vpack.c.bf16 %v773, %v773
        %v777 = vpack.c.bf16 %v775, %v774
        %v778 = vld [vmem:[%s625] sm:$0xf]
        %v779 = vld [vmem:[%s625 + $0x4] sm:$0xf]
        %v780 = vld [vmem:[%s625 + $0x8] sm:$0xf]
        %v781 = vld [vmem:[%s625 + $0xc] sm:$0xf]
        %v782 = vld [vmem:[%s633] sm:$0x1]
        %v784 = vlaneseq
        %v785 = vshrl.u32 %v784, 7
        %v786 = vsub.s32 0, %v785
        %v787 = vrot.slane %v782, %v786
        %v793 = vunpack.c.l.b16 %v778
        %v794 = vunpack.c.l.b16 %v779
        %v795 = vunpack.c.l.b16 %v780
        %v796 = vunpack.c.l.b16 %v781
        %v797 = vpack.c.b16 %v794, %v793
        %v798 = vpack.c.b16 %v796, %v795
        %vm801 = vcmask 261120
        %v803 = vsel %vm801, %v776, 0
        %805 = vmatprep.subr.bf16.mxu0 0
        %806 = vmatpush1.bf16.msra.mxu0 %v797
        %807 = vmatprep.subr.bf16.mxu0 0
        %808 = vmatpush1.bf16.msra.mxu0 %v798
        %809 = vmatprep.subr.bf16.mxu0 0
        %810 = vmatpush1.bf16.msra.mxu0 0
        %811 = vmatprep.subr.bf16.mxu0 0
        %812 = vmatpush1.bf16.msra.mxu0 0
        %813 = vmatprep.subr.bf16.mxu0 0
        %814 = vmatpush1.bf16.msra.mxu0 0
        %815 = vmatprep.subr.bf16.mxu0 0
        %816 = vmatpush1.bf16.msra.mxu0 0
        %817 = vmatprep.subr.bf16.mxu0 0
        %818 = vmatpush1.bf16.msra.mxu0 0
        %819 = vmatprep.subr.bf16.mxu0 0
        %820 = vmatpush1.bf16.msra.mxu0 0
        %821 = vmatprep.subr.bf16.mxu0 0
        %822 = vmatpush1.bf16.msra.mxu0 0
        %823 = vmatprep.subr.bf16.mxu0 0
        %824 = vmatpush1.bf16.msra.mxu0 0
        %825 = vmatprep.subr.bf16.mxu0 0
        %826 = vmatpush1.bf16.msra.mxu0 0
        %827 = vmatprep.subr.bf16.mxu0 0
        %828 = vmatpush1.bf16.msra.mxu0 0
        %829 = vmatprep.subr.bf16.mxu0 0
        %830 = vmatpush1.bf16.msra.mxu0 0
        %831 = vmatprep.subr.bf16.mxu0 0
        %832 = vmatpush1.bf16.msra.mxu0 0
        %833 = vmatprep.subr.bf16.mxu0 0
        %834 = vmatpush1.bf16.msra.mxu0 0
        %835 = vmatprep.subr.bf16.mxu0 0
        %836 = vmatpush1.bf16.msra.mxu0 0
        %837 = vmatprep.mubr.bf16.mxu0 0
        %838 = vmatmul.mubr.bf16.gmra.mrb[0].mxu0 %v803
        %v839 = vpop.f32.mrb[0].mxu0
        %v840 = vadd.f32 %v787, %v839
        %v841 = vpop.f32.mrb[0].mxu0
        %v842 = vpop.f32.mrb[0].mxu0
        %v843 = vpop.f32.mrb[0].mxu0
        %844 = vdwg.mxu0
        %v845 = vmul.f32 %v840, 0.35355338
        %v846 = vld [vmem:[%s642] sm:$0xf]
        %v847 = vld [vmem:[%s642 + $0x4] sm:$0xf]
        %v848 = vld [vmem:[%s642 + $0x8] sm:$0xf]
        %v849 = vld [vmem:[%s642 + $0xc] sm:$0xf]
        %v850 = vld [vmem:[%s650] sm:$0x1]
        %v852 = vlaneseq
        %v853 = vshrl.u32 %v852, 7
        %v854 = vsub.s32 0, %v853
        %v855 = vrot.slane %v850, %v854
        %v861 = vunpack.c.l.b16 %v846
        %v862 = vunpack.c.l.b16 %v847
        %v863 = vunpack.c.l.b16 %v848
        %v864 = vunpack.c.l.b16 %v849
        %v865 = vpack.c.b16 %v862, %v861
        %v866 = vpack.c.b16 %v864, %v863
        %v870 = vsel %vm801, %v777, 0
        %872 = vmatprep.subr.bf16.mxu0 0
        %873 = vmatpush1.bf16.msra.mxu0 %v865
        %874 = vmatprep.subr.bf16.mxu0 0
        %875 = vmatpush1.bf16.msra.mxu0 %v866
        %876 = vmatprep.subr.bf16.mxu0 0
        %877 = vmatpush1.bf16.msra.mxu0 0
        %878 = vmatprep.subr.bf16.mxu0 0
        %879 = vmatpush1.bf16.msra.mxu0 0
        %880 = vmatprep.subr.bf16.mxu0 0
        %881 = vmatpush1.bf16.msra.mxu0 0
        %882 = vmatprep.subr.bf16.mxu0 0
        %883 = vmatpush1.bf16.msra.mxu0 0
        %884 = vmatprep.subr.bf16.mxu0 0
        %885 = vmatpush1.bf16.msra.mxu0 0
        %886 = vmatprep.subr.bf16.mxu0 0
        %887 = vmatpush1.bf16.msra.mxu0 0
        %888 = vmatprep.subr.bf16.mxu0 0
        %889 = vmatpush1.bf16.msra.mxu0 0
        %890 = vmatprep.subr.bf16.mxu0 0
        %891 = vmatpush1.bf16.msra.mxu0 0
        %892 = vmatprep.subr.bf16.mxu0 0
        %893 = vmatpush1.bf16.msra.mxu0 0
        %894 = vmatprep.subr.bf16.mxu0 0
        %895 = vmatpush1.bf16.msra.mxu0 0
        %896 = vmatprep.subr.bf16.mxu0 0
        %897 = vmatpush1.bf16.msra.mxu0 0
        %898 = vmatprep.subr.bf16.mxu0 0
        %899 = vmatpush1.bf16.msra.mxu0 0
        %900 = vmatprep.subr.bf16.mxu0 0
        %901 = vmatpush1.bf16.msra.mxu0 0
        %902 = vmatprep.subr.bf16.mxu0 0
        %903 = vmatpush1.bf16.msra.mxu0 0
        %904 = vmatprep.mubr.bf16.mxu0 0
        %905 = vmatmul.mubr.bf16.gmra.mrb[0].mxu0 %v870
        %v906 = vpop.f32.mrb[0].mxu0
        %v907 = vadd.f32 %v855, %v906
        %v908 = vpop.f32.mrb[0].mxu0
        %v909 = vpop.f32.mrb[0].mxu0
        %v910 = vadd.f32 %v855, %v909
        %v911 = vpop.f32.mrb[0].mxu0
        %912 = vdwg.mxu0
        %v913 = vld [vmem:[%s659] sm:$0xf]
        %v914 = vld [vmem:[%s659 + $0x4] sm:$0xf]
        %v915 = vld [vmem:[%s659 + $0x8] sm:$0xf]
        %v916 = vld [vmem:[%s659 + $0xc] sm:$0xf]
        %v917 = vld [vmem:[%s667] sm:$0x1]
        %v919 = vlaneseq
        %v920 = vshrl.u32 %v919, 7
        %v921 = vsub.s32 0, %v920
        %v922 = vrot.slane %v917, %v921
        %v928 = vunpack.c.l.b16 %v913
        %v929 = vunpack.c.l.b16 %v914
        %v930 = vunpack.c.l.b16 %v915
        %v931 = vunpack.c.l.b16 %v916
        %v932 = vpack.c.b16 %v929, %v928
        %v933 = vpack.c.b16 %v931, %v930
        %936 = vmatprep.subr.bf16.mxu0 0
        %937 = vmatpush1.bf16.msra.mxu0 %v932
        %938 = vmatprep.subr.bf16.mxu0 0
        %939 = vmatpush1.bf16.msra.mxu0 %v933
        %940 = vmatprep.subr.bf16.mxu0 0
        %941 = vmatpush1.bf16.msra.mxu0 0
        %942 = vmatprep.subr.bf16.mxu0 0
        %943 = vmatpush1.bf16.msra.mxu0 0
        %944 = vmatprep.subr.bf16.mxu0 0
        %945 = vmatpush1.bf16.msra.mxu0 0
        %946 = vmatprep.subr.bf16.mxu0 0
        %947 = vmatpush1.bf16.msra.mxu0 0
        %948 = vmatprep.subr.bf16.mxu0 0
        %949 = vmatpush1.bf16.msra.mxu0 0
        %950 = vmatprep.subr.bf16.mxu0 0
        %951 = vmatpush1.bf16.msra.mxu0 0
        %952 = vmatprep.subr.bf16.mxu0 0
        %953 = vmatpush1.bf16.msra.mxu0 0
        %954 = vmatprep.subr.bf16.mxu0 0
        %955 = vmatpush1.bf16.msra.mxu0 0
        %956 = vmatprep.subr.bf16.mxu0 0
        %957 = vmatpush1.bf16.msra.mxu0 0
        %958 = vmatprep.subr.bf16.mxu0 0
        %959 = vmatpush1.bf16.msra.mxu0 0
        %960 = vmatprep.subr.bf16.mxu0 0
        %961 = vmatpush1.bf16.msra.mxu0 0
        %962 = vmatprep.subr.bf16.mxu0 0
        %963 = vmatpush1.bf16.msra.mxu0 0
        %964 = vmatprep.subr.bf16.mxu0 0
        %965 = vmatpush1.bf16.msra.mxu0 0
        %966 = vmatprep.subr.bf16.mxu0 0
        %967 = vmatpush1.bf16.msra.mxu0 0
        %968 = vmatprep.mubr.bf16.mxu0 0
        %969 = vmatmul.mubr.bf16.gmra.mrb[0].mxu0 %v870
        %v970 = vpop.f32.mrb[0].mxu0
        %v971 = vadd.f32 %v922, %v970
        %v972 = vpop.f32.mrb[0].mxu0
        %v973 = vpop.f32.mrb[0].mxu0
        %v974 = vadd.f32 %v922, %v973
        %v975 = vpop.f32.mrb[0].mxu0
        %976 = vdwg.mxu0
        %v977 = vpack.c.bf16 %v845, %v845
        %v978 = vpack.c.bf16 %v910, %v907
        %vm979 = vcmask 64512
        %v981 = vsel %vm979, %v977, 0
        %v984 = vsel %vm979, %v978, 0
        %986 = vmatprep.subr.bf16.mxu0 0
        %987 = vmatpush1.bf16.xpose.msra.mxu0 %v984
        %988 = vmatprep.subr.bf16.mxu0 0
        %989 = vmatpush1.bf16.xpose.msra.mxu0 0
        %990 = vmatprep.subr.bf16.mxu0 0
        %991 = vmatpush1.bf16.xpose.msra.mxu0 0
        %992 = vmatprep.subr.bf16.mxu0 0
        %993 = vmatpush1.bf16.xpose.msra.mxu0 0
        %994 = vmatprep.subr.bf16.mxu0 0
        %995 = vmatpush1.bf16.xpose.msra.mxu0 0
        %996 = vmatprep.subr.bf16.mxu0 0
        %997 = vmatpush1.bf16.xpose.msra.mxu0 0
        %998 = vmatprep.subr.bf16.mxu0 0
        %999 = vmatpush1.bf16.xpose.msra.mxu0 0
        %1000 = vmatprep.subr.bf16.mxu0 0
        %1001 = vmatpush1.bf16.xpose.msra.mxu0 0
        %1002 = vmatprep.subr.bf16.mxu0 0
        %1003 = vmatpush1.bf16.xpose.msra.mxu0 0
        %1004 = vmatprep.subr.bf16.mxu0 0
        %1005 = vmatpush1.bf16.xpose.msra.mxu0 0
        %1006 = vmatprep.subr.bf16.mxu0 0
        %1007 = vmatpush1.bf16.xpose.msra.mxu0 0
        %1008 = vmatprep.subr.bf16.mxu0 0
        %1009 = vmatpush1.bf16.xpose.msra.mxu0 0
        %1010 = vmatprep.subr.bf16.mxu0 0
        %1011 = vmatpush1.bf16.xpose.msra.mxu0 0
        %1012 = vmatprep.subr.bf16.mxu0 0
        %1013 = vmatpush1.bf16.xpose.msra.mxu0 0
        %1014 = vmatprep.subr.bf16.mxu0 0
        %1015 = vmatpush1.bf16.xpose.msra.mxu0 0
        %1016 = vmatprep.subr.bf16.mxu0 0
        %1017 = vmatpush1.bf16.xpose.msra.mxu0 0
        %1018 = vmatprep.mubr.bf16.mxu0 0
        %1019 = vmatmul.mubr.bf16.gmra.mrb[0].mxu0 %v981
        %v1020 = vpop.f32.mrb[0].mxu0
        %v1021 = vadd.f32 0.0, %v1020
        %v1022 = vpop.f32.mrb[0].mxu0
        %v1023 = vpop.f32.mrb[0].mxu0
        %v1024 = vpop.f32.mrb[0].mxu0
        %1025 = vdwg.mxu0
        %vm1026 = vcmask 130048
        %v1027 = vsel %vm1026, %v1021, -inf
        %1028 = vmax.xlane.f32.xlu0 %v1027
        %v1029 = vpop.xlane.xlu0 %1028
        %v1030 = vsub.f32 %v1021, %v1029
        %v1031 = vmul.f32 %v1030, 1.442695
        %v1032 = vpow.pop %v1031
        %v1033 = vsel %vm1026, %v1032, 0.0
        %1034 = vadd.xlane.f32.xlu0 %v1033
        %v1035 = vpop.xlane.xlu0 %1034
        %v1036 = vrcp.pop %v1035
        %v1037 = vmul.f32 1.0, %v1036
        %v1038 = vmul.f32 %v1032, %v1037
        %v1039 = vpack.c.bf16 %v1038, %v1038
        %v1040 = vpack.c.bf16 %v974, %v971
        %v1042 = vsel %vm1026, %v1039, 0
        %1044 = vmatprep.subr.bf16.mxu0 0
        %1045 = vmatpush1.bf16.msra.mxu0 %v1040
        %1046 = vmatprep.subr.bf16.mxu0 0
        %1047 = vmatpush1.bf16.msra.mxu0 0
        %1048 = vmatprep.subr.bf16.mxu0 0
        %1049 = vmatpush1.bf16.msra.mxu0 0
        %1050 = vmatprep.subr.bf16.mxu0 0
        %1051 = vmatpush1.bf16.msra.mxu0 0
        %1052 = vmatprep.subr.bf16.mxu0 0
        %1053 = vmatpush1.bf16.msra.mxu0 0
        %1054 = vmatprep.subr.bf16.mxu0 0
        %1055 = vmatpush1.bf16.msra.mxu0 0
        %1056 = vmatprep.subr.bf16.mxu0 0
        %1057 = vmatpush1.bf16.msra.mxu0 0
        %1058 = vmatprep.subr.bf16.mxu0 0
        %1059 = vmatpush1.bf16.msra.mxu0 0
        %1060 = vmatprep.subr.bf16.mxu0 0
        %1061 = vmatpush1.bf16.msra.mxu0 0
        %1062 = vmatprep.subr.bf16.mxu0 0
        %1063 = vmatpush1.bf16.msra.mxu0 0
        %1064 = vmatprep.subr.bf16.mxu0 0
        %1065 = vmatpush1.bf16.msra.mxu0 0
        %1066 = vmatprep.subr.bf16.mxu0 0
        %1067 = vmatpush1.bf16.msra.mxu0 0
        %1068 = vmatprep.subr.bf16.mxu0 0
        %1069 = vmatpush1.bf16.msra.mxu0 0
        %1070 = vmatprep.subr.bf16.mxu0 0
        %1071 = vmatpush1.bf16.msra.mxu0 0
        %1072 = vmatprep.subr.bf16.mxu0 0
        %1073 = vmatpush1.bf16.msra.mxu0 0
        %1074 = vmatprep.subr.bf16.mxu0 0
        %1075 = vmatpush1.bf16.msra.mxu0 0
        %1076 = vmatprep.mubr.bf16.mxu0 0
        %1077 = vmatmul.mubr.bf16.gmra.mrb[0].mxu0 %v1042
        %v1078 = vpop.f32.mrb[0].mxu0
        %v1079 = vadd.f32 0.0, %v1078
        %v1080 = vpop.f32.mrb[0].mxu0
        %v1081 = vpop.f32.mrb[0].mxu0
        %v1082 = vpop.f32.mrb[0].mxu0
        %1083 = vdwg.mxu0
        %v1084 = vld [vmem:[#allocation2] sm:$0xff]
        %v1085 = vpack.c.bf16 %v1079, %v1079
        %v1086 = vld [vmem:[%s676] sm:$0xf]
        %v1088 = vsel %vm979, %v1085, 0
        %vm1090 = vcmask 1043456
        %v1092 = vsel %vm1090, %v1086, 0
        %1094 = vmatprep.subr.bf16.mxu0 0
        %1095 = vmatpush1.bf16.msra.mxu0 %v1092
        %1096 = vmatprep.subr.bf16.mxu0 0
        %1097 = vmatpush1.bf16.msra.mxu0 0
        %1098 = vmatprep.subr.bf16.mxu0 0
        %1099 = vmatpush1.bf16.msra.mxu0 0
        %1100 = vmatprep.subr.bf16.mxu0 0
        %1101 = vmatpush1.bf16.msra.mxu0 0
        %1102 = vmatprep.subr.bf16.mxu0 0
        %1103 = vmatpush1.bf16.msra.mxu0 0
        %1104 = vmatprep.subr.bf16.mxu0 0
        %1105 = vmatpush1.bf16.msra.mxu0 0
        %1106 = vmatprep.subr.bf16.mxu0 0
        %1107 = vmatpush1.bf16.msra.mxu0 0
        %1108 = vmatprep.subr.bf16.mxu0 0
        %1109 = vmatpush1.bf16.msra.mxu0 0
        %1110 = vmatprep.subr.bf16.mxu0 0
        %1111 = vmatpush1.bf16.msra.mxu0 0
        %1112 = vmatprep.subr.bf16.mxu0 0
        %1113 = vmatpush1.bf16.msra.mxu0 0
        %1114 = vmatprep.subr.bf16.mxu0 0
        %1115 = vmatpush1.bf16.msra.mxu0 0
        %1116 = vmatprep.subr.bf16.mxu0 0
        %1117 = vmatpush1.bf16.msra.mxu0 0
        %1118 = vmatprep.subr.bf16.mxu0 0
        %1119 = vmatpush1.bf16.msra.mxu0 0
        %1120 = vmatprep.subr.bf16.mxu0 0
        %1121 = vmatpush1.bf16.msra.mxu0 0
        %1122 = vmatprep.subr.bf16.mxu0 0
        %1123 = vmatpush1.bf16.msra.mxu0 0
        %1124 = vmatprep.subr.bf16.mxu0 0
        %1125 = vmatpush1.bf16.msra.mxu0 0
        %1126 = vmatprep.mubr.bf16.mxu0 0
        %1127 = vmatmul.mubr.bf16.gmra.mrb[0].mxu0 %v1088
        %v1128 = vpop.f32.mrb[0].mxu0
        %v1129 = vadd.f32 0.0, %v1128
        %v1130 = vpop.f32.mrb[0].mxu0
        %v1131 = vpop.f32.mrb[0].mxu0
        %v1132 = vpop.f32.mrb[0].mxu0
        %1133 = vdwg.mxu0
        %v1134 = vadd.f32 %v1084, %v1129
        %1135 = vst.msk [vmem:[#allocation2] sm:$0xff] %vm801, %v1134
        %p1136 = scmp.eq.s32.totalorder %s48, 3
        // Predicated region
        $region121: #{decoder_layer.4} parent=67 // pred_check
          %p1137 = pneg %p1136
        $region122: #{decoder_layer.4} parent=67 // pred_check_branch
          %1139 = sbr.rel (%p1137) target = $region124
        $region123: #{decoder_layer.4} parent=67 // pred_region
          %v1140 = vld [vmem:[#allocation2] sm:$0xff]
          %v1141 = vadd.f32 %v773, %v1140
          %v1142 = vld [vmem:[#allocation18] sm:$0x1]
          %v1144 = vlaneseq
          %v1145 = vshrl.u32 %v1144, 7
          %v1146 = vsub.s32 0, %v1145
          %v1147 = vrot.slane %v1142, %v1146
          %v1149 = vadd.f32 %v1141, %v1147
          %v1150 = vsel %vm801, %v1149, 0.0
          %1151 = vadd.xlane.f32.xlu0 %v1150
          %v1152 = vpop.xlane.xlu0 %1151
          %v1153 = vrcp.pop 32.0
          %v1154 = vmul.f32 %v1152, %v1153
          %v1155 = vsub.f32 %v1149, %v1154
          %v1156 = vmul.f32 %v1155, %v1155
          %v1157 = vsel %vm801, %v1156, 0.0
          %1158 = vadd.xlane.f32.xlu0 %v1157
          %v1159 = vpop.xlane.xlu0 %1158
          %v1160 = vmul.f32 %v1159, %v1153
          %v1161 = vadd.f32 %v1160, 1e-05
          %v1162 = vrsqrt.pop %v1161
          %v1163 = vmul.f32 %v1155, %v1162
          %v1164 = vld [vmem:[#allocation20] sm:$0x1]
          %v1166 = vlaneseq
          %v1167 = vshrl.u32 %v1166, 7
          %v1168 = vsub.s32 0, %v1167
          %v1169 = vrot.slane %v1164, %v1168
          %v1171 = vmul.f32 %v1163, %v1169
          %v1172 = vld [vmem:[#allocation21] sm:$0x1]
          %v1174 = vlaneseq
          %v1175 = vshrl.u32 %v1174, 7
          %v1176 = vsub.s32 0, %v1175
          %v1177 = vrot.slane %v1172, %v1176
          %v1179 = vadd.f32 %v1171, %v1177
          %1180 = vst.msk [vmem:[%s765] sm:$0xff] %vm801, %v1179
        $region124: #{decoder_layer.4} parent=67 // pred_fallthru
          _
        %s1181 = sand.u32 %s360, 1
        %s1182 = scalar_lea.sflag [#allocation5], %s1181
        %s1183 = sand.u32 %s360, 1
        %s1184 = smul.addr %s1183, 8
        %s1185 = scalar_lea.vmem [#allocation23], %s1184
        // Predicated region
        $region125: #{decoder_layer.4} parent=67 // pred_check
          %p1186 = pneg %p370
        $region126: #{decoder_layer.4} parent=67 // pred_check_branch
          %1188 = sbr.rel (%p1186) target = $region128
        $region127: #{decoder_layer.4} parent=67 // pred_region
          %s1190 = ssub.s32 128, 128
          %1191 = vsyncadd %s1182, %s1190
          %s1192 = smul.addr %s47, 128
          %s1193 = scalar_lea.hbm %s12, %s1192
          %s1195 = sshll.u32 %s1185, 4
          %s1196 = int_to_ptr.vmem [resolvable:$true] %s1195
          %1198 = dma.vmem_to_hbm [thread:$0]  %s1196, 128, %s1193, %s1182
        $region128: #{decoder_layer.4} parent=67 // pred_fallthru
          _
      $region68: #{decoder_layer.4} parent=5 // pred_fallthru
        _
      %p1199 = scmp.le.s32.totalorder 2, %s38
      // Predicated region
      $region129: #{decoder_layer.4} parent=5 // pred_check
        %p1200 = pneg %p1199
      $region130: #{decoder_layer.4} parent=5 // pred_check_branch
        %1202 = sbr.rel (%p1200) target = $region132
      $region131: #{decoder_layer.4} parent=5 // pred_region
        %s1203 = ssub.s32 %s38, 2
        // Predicated region
        $region133: #{decoder_layer.4} parent=131 // pred_check
          %p1204 = pneg %p376
        $region134: #{decoder_layer.4} parent=131 // pred_check_branch
          %1206 = sbr.rel (%p1204) target = $region136
        $region135: #{decoder_layer.4} parent=131 // pred_region
          %s1207 = sand.u32 %s361, 1
          %s1208 = scalar_lea.sflag [#allocation5], %s1207
          %s1209 = sand.u32 %s361, 1
          %s1210 = smul.addr %s1209, 8
          %s1211 = scalar_lea.vmem [#allocation23], %s1210
          %1212 = dma.done %s1208, 128
        $region136: #{decoder_layer.4} parent=131 // pred_fallthru
          _
      $region132: #{decoder_layer.4} parent=5 // pred_fallthru
        _
    $region6: #{decoder_layer.4} parent=1 // loop_footer
      %s42 = sadd.s32 1, %s38
    $region7: #{decoder_layer.4} parent=1 // loop_footer_branch
      %37 = sbr.rel target = $region3
    $region8: #{decoder_layer.4} parent=1 // loop_exit
      _
    %1213 = vsyncpa [#allocation4], 1
    %s1214 = scalar_lea.sflag [#allocation4], 1
    %1215 = vsyncpa %s1214, 1
    %1216 = vsyncpa [#allocation7], 1
    %s1217 = scalar_lea.sflag [#allocation7], 1
    %1218 = vsyncpa %s1217, 1
    %1219 = vsyncpa [#allocation10], 1
    %s1220 = scalar_lea.sflag [#allocation10], 1
    %1221 = vsyncpa %s1220, 1
    %1222 = vsyncpa [#allocation13], 1
    %s1223 = scalar_lea.sflag [#allocation13], 1
    %1224 = vsyncpa %s1223, 1
    %1225 = vsyncpa [#allocation16], 1
    %s1226 = scalar_lea.sflag [#allocation16], 1
    %1227 = vsyncpa %s1226, 1
    %1228 = vsyncpa [#allocation19], 1
    %1229 = vsyncpa [#allocation22], 1
    %1230 = vsyncpa [#allocation5], 1
    %s1231 = scalar_lea.sflag [#allocation5], 1
    %1232 = vsyncpa %s1231, 1

// kernel: decoder_layer.5
$region0: #{decoder_layer.5}
  #allocation0 [shape = 'u32[]', space=smem, size = 0x4, offset = 0x4, fixed_abs, tag = 'smem constant byte address 0x4 - core index']
  #allocation1 [shape = 'u32[144,128]{1,0:T(1,128)}', space=vmem, size = 0x12000, scoped, tag = 'internal scratch']
  #allocation2 [shape = 'f32[8,32]{1,0:T(8,128)}', space=vmem, size = 0x1000, scoped, tag = 'scratch operand']
  %s0 = inlined_call_operand.hbm [shape: f32[16,32], index: 0, kind: input, shape index: {}]
  %s1 = inlined_call_operand.hbm [shape: bf16[32,64], index: 1, kind: input, shape index: {}]
  %s2 = inlined_call_operand.hbm [shape: f32[1,64], index: 2, kind: input, shape index: {}]
  %s3 = inlined_call_operand.hbm [shape: bf16[64,32], index: 3, kind: input, shape index: {}]
  %s4 = inlined_call_operand.hbm [shape: f32[1,32], index: 4, kind: input, shape index: {}]
  %s5 = inlined_call_operand.hbm [shape: f32[1,32], index: 5, kind: input, shape index: {}]
  %s6 = inlined_call_operand.hbm [shape: f32[1,32], index: 6, kind: input, shape index: {}]
  %s7 = inlined_call_operand.hbm [shape: f32[16,32], index: 7, kind: output, shape index: {}]
  %s8 = sld [smem:[#allocation0]]
  $region97: #{decoder_layer.5} parent=0
    _
  %s10 = ssub.s32 1, %s8
  %s11 = scalar_select 0, %s10, %s8
  $region1: #{decoder_layer.5} parent=0
    #allocation3 [shape = 'u8[8192]{0}', space=vmem, size = 0x2000, scoped, tag = 'input window, operand 0']
    #allocation4 [shape = 's32[2]{0}', space=sflag, size = 0x8, scoped, tag = 'scoped memory for decoder_layer.5']
    #allocation5 [shape = 's32[2]{0}', space=sflag, size = 0x8, scoped, tag = 'scoped memory for decoder_layer.5']
    #allocation6 [shape = 'u8[8192]{0}', space=vmem, size = 0x2000, scoped, tag = 'input window, operand 1, single buffered']
    #allocation7 [shape = 's32[1]{0}', space=sflag, size = 0x4, scoped, tag = 'scoped memory for decoder_layer.5']
    #allocation8 [shape = 'u8[512]{0}', space=vmem, size = 0x400, scoped, tag = 'input window, operand 2, single buffered']
    #allocation9 [shape = 'u8[16384]{0}', space=vmem, size = 0x4000, scoped, tag = 'input window, operand 3, single buffered']
    #allocation10 [shape = 's32[1]{0}', space=sflag, size = 0x4, scoped, tag = 'scoped memory for decoder_layer.5']
    #allocation11 [shape = 'u8[512]{0}', space=vmem, size = 0x400, scoped, tag = 'input window, operand 4, single buffered']
    #allocation12 [shape = 'u8[512]{0}', space=vmem, size = 0x400, scoped, tag = 'input window, operand 5, single buffered']
    #allocation13 [shape = 's32[1]{0}', space=sflag, size = 0x4, scoped, tag = 'scoped memory for decoder_layer.5']
    #allocation14 [shape = 'u8[512]{0}', space=vmem, size = 0x400, scoped, tag = 'input window, operand 6, single buffered']
    #allocation15 [shape = 'u8[8192]{0}', space=vmem, size = 0x2000, scoped, tag = 'output window, operand 0']
    %12 = vsyncpa [#allocation4], 0
    %s13 = scalar_lea.sflag [#allocation4], 1
    %14 = vsyncpa %s13, 0
    %15 = vsyncpa [#allocation7], 0
    %16 = vsyncpa [#allocation10], 0
    %17 = vsyncpa [#allocation13], 0
    %18 = vsyncpa [#allocation5], 0
    %s19 = scalar_lea.sflag [#allocation5], 1
    %20 = vsyncpa %s19, 0
    loop: start=0, step=1, limit=4
    $region2: #{decoder_layer.5} parent=1 // loop_pre_header
      _
    $region3: #{decoder_layer.5} parent=1 // loop_header
      %s22 = sphi 0, %s26
      %p23 = scmp.ge.s32.totalorder %s22, 4
      %s29 = sphi 0, %s41
      %s30 = sphi 0, %s37
      %s31 = sphi 0, %s29
      %s32 = sphi 0, %s30
      %s33 = sphi 0, %s31
      %s34 = sphi 0, %s32
      %s44 = sphi 0, %s46
      %s47 = sphi 0, %s44
      %s48 = sphi 0, %s47
      %s64 = sphi 0, %s48
      %s70 = sphi 0, %s72
      %s73 = sphi 0, %s70
      %s74 = sphi 0, %s73
      %s90 = sphi 0, %s74
      %s96 = sphi 0, %s98
      %s99 = sphi 0, %s96
      %s100 = sphi 0, %s99
      %s116 = sphi 0, %s100
      %s122 = sphi 0, %s124
      %s125 = sphi 0, %s122
      %s126 = sphi 0, %s125
      %s142 = sphi 0, %s126
      %s146 = sphi 0, %s146
      %s148 = sphi 0, %s146
      %s149 = sphi 0, %s148
      %s163 = sphi 0, %s149
      %s167 = sphi 0, %s167
      %s169 = sphi 0, %s167
      %s170 = sphi 0, %s169
      %s184 = sphi 0, %s170
      %s188 = sphi 0, %s188
      %s190 = sphi 0, %s188
      %s191 = sphi 0, %s190
      %s205 = sphi 0, %s191
      %s211 = sphi 0, %s213
      %s214 = sphi 0, %s211
      %s215 = sphi 0, %s214
      %s231 = sphi 0, %s215
    $region4: #{decoder_layer.5} parent=1 // loop_header_branch
      %25 = sbr.rel (%p23) target = $region8
    $region5: #{decoder_layer.5} parent=1 // loop_body
      %s27 = ssub.s32 %s22, 1
      %s28 = ssub.s32 %s22, 2
      %s35 = sadd.s32 1, %s30
      %p36 = scmp.ge.s32.totalorder %s35, 1
      %s37 = scalar_select %p36, 0, %s35
      %s38 = sadd.s32 1, %s29
      %s39 = scalar_select %p36, %s38, %s29
      %p40 = scmp.ge.s32.totalorder %s39, 2
      %s41 = scalar_select %p40, 0, %s39
      %s42 = ssub.s32 %s29, %s41
      %p43 = scmp.eq.s32.totalorder %s42, 0
      %s45 = sadd.s32 %s44, 1
      %s46 = scalar_select %p43, %s44, %s45
      %p49 = pneg %p43
      %p50 = scmp.eq.s32.totalorder %s22, 1
      %p51 = por %p49, %p50
      %p52 = scmp.ne.s32.totalorder %s44, %s47
      %p53 = scmp.eq.s32.totalorder %s22, 0
      %p54 = por %p52, %p53
      %p55 = scmp.ne.s32.totalorder %s44, %s47
      %p56 = scmp.eq.s32.totalorder %s27, 1
      %p57 = por %p55, %p56
      %p58 = scmp.ne.s32.totalorder %s47, %s48
      %p59 = scmp.eq.s32.totalorder %s27, 0
      %p60 = por %p58, %p59
      %p61 = scmp.ne.s32.totalorder %s47, %s48
      %p62 = scmp.eq.s32.totalorder %s28, 1
      %p63 = por %p61, %p62
      %p65 = scmp.ne.s32.totalorder %s48, %s64
      %p66 = scmp.eq.s32.totalorder %s28, 0
      %p67 = por %p65, %p66
      %s68 = ssub.s32 %s30, %s37
      %p69 = scmp.eq.s32.totalorder %s68, 0
      %s71 = sadd.s32 %s70, 1
      %s72 = scalar_select %p69, %s70, %s71
      %p75 = pneg %p69
      %p76 = scmp.eq.s32.totalorder %s22, 1
      %p77 = por %p75, %p76
      %p78 = scmp.ne.s32.totalorder %s70, %s73
      %p79 = scmp.eq.s32.totalorder %s22, 0
      %p80 = por %p78, %p79
      %p81 = scmp.ne.s32.totalorder %s70, %s73
      %p82 = scmp.eq.s32.totalorder %s27, 1
      %p83 = por %p81, %p82
      %p84 = scmp.ne.s32.totalorder %s73, %s74
      %p85 = scmp.eq.s32.totalorder %s27, 0
      %p86 = por %p84, %p85
      %p87 = scmp.ne.s32.totalorder %s73, %s74
      %p88 = scmp.eq.s32.totalorder %s28, 1
      %p89 = por %p87, %p88
      %p91 = scmp.ne.s32.totalorder %s74, %s90
      %p92 = scmp.eq.s32.totalorder %s28, 0
      %p93 = por %p91, %p92
      %s94 = ssub.s32 %s30, %s37
      %p95 = scmp.eq.s32.totalorder %s94, 0
      %s97 = sadd.s32 %s96, 1
      %s98 = scalar_select %p95, %s96, %s97
      %p101 = pneg %p95
      %p102 = scmp.eq.s32.totalorder %s22, 1
      %p103 = por %p101, %p102
      %p104 = scmp.ne.s32.totalorder %s96, %s99
      %p105 = scmp.eq.s32.totalorder %s22, 0
      %p106 = por %p104, %p105
      %p107 = scmp.ne.s32.totalorder %s96, %s99
      %p108 = scmp.eq.s32.totalorder %s27, 1
      %p109 = por %p107, %p108
      %p110 = scmp.ne.s32.totalorder %s99, %s100
      %p111 = scmp.eq.s32.totalorder %s27, 0
      %p112 = por %p110, %p111
      %p113 = scmp.ne.s32.totalorder %s99, %s100
      %p114 = scmp.eq.s32.totalorder %s28, 1
      %p115 = por %p113, %p114
      %p117 = scmp.ne.s32.totalorder %s100, %s116
      %p118 = scmp.eq.s32.totalorder %s28, 0
      %p119 = por %p117, %p118
      %s120 = ssub.s32 %s30, %s37
      %p121 = scmp.eq.s32.totalorder %s120, 0
      %s123 = sadd.s32 %s122, 1
      %s124 = scalar_select %p121, %s122, %s123
      %p127 = pneg %p121
      %p128 = scmp.eq.s32.totalorder %s22, 1
      %p129 = por %p127, %p128
      %p130 = scmp.ne.s32.totalorder %s122, %s125
      %p131 = scmp.eq.s32.totalorder %s22, 0
      %p132 = por %p130, %p131
      %p133 = scmp.ne.s32.totalorder %s122, %s125
      %p134 = scmp.eq.s32.totalorder %s27, 1
      %p135 = por %p133, %p134
      %p136 = scmp.ne.s32.totalorder %s125, %s126
      %p137 = scmp.eq.s32.totalorder %s27, 0
      %p138 = por %p136, %p137
      %p139 = scmp.ne.s32.totalorder %s125, %s126
      %p140 = scmp.eq.s32.totalorder %s28, 1
      %p141 = por %p139, %p140
      %p143 = scmp.ne.s32.totalorder %s126, %s142
      %p144 = scmp.eq.s32.totalorder %s28, 0
      %p145 = por %p143, %p144
      %s147 = sadd.s32 %s146, 1
      %p150 = scmp.eq.s32.totalorder %s22, 1
      %p151 = scmp.ne.s32.totalorder %s146, %s148
      %p152 = scmp.eq.s32.totalorder %s22, 0
      %p153 = por %p151, %p152
      %p154 = scmp.ne.s32.totalorder %s146, %s148
      %p155 = scmp.eq.s32.totalorder %s27, 1
      %p156 = por %p154, %p155
      %p157 = scmp.ne.s32.totalorder %s148, %s149
      %p158 = scmp.eq.s32.totalorder %s27, 0
      %p159 = por %p157, %p158
      %p160 = scmp.ne.s32.totalorder %s148, %s149
      %p161 = scmp.eq.s32.totalorder %s28, 1
      %p162 = por %p160, %p161
      %p164 = scmp.ne.s32.totalorder %s149, %s163
      %p165 = scmp.eq.s32.totalorder %s28, 0
      %p166 = por %p164, %p165
      %s168 = sadd.s32 %s167, 1
      %p171 = scmp.eq.s32.totalorder %s22, 1
      %p172 = scmp.ne.s32.totalorder %s167, %s169
      %p173 = scmp.eq.s32.totalorder %s22, 0
      %p174 = por %p172, %p173
      %p175 = scmp.ne.s32.totalorder %s167, %s169
      %p176 = scmp.eq.s32.totalorder %s27, 1
      %p177 = por %p175, %p176
      %p178 = scmp.ne.s32.totalorder %s169, %s170
      %p179 = scmp.eq.s32.totalorder %s27, 0
      %p180 = por %p178, %p179
      %p181 = scmp.ne.s32.totalorder %s169, %s170
      %p182 = scmp.eq.s32.totalorder %s28, 1
      %p183 = por %p181, %p182
      %p185 = scmp.ne.s32.totalorder %s170, %s184
      %p186 = scmp.eq.s32.totalorder %s28, 0
      %p187 = por %p185, %p186
      %s189 = sadd.s32 %s188, 1
      %p192 = scmp.eq.s32.totalorder %s22, 1
      %p193 = scmp.ne.s32.totalorder %s188, %s190
      %p194 = scmp.eq.s32.totalorder %s22, 0
      %p195 = por %p193, %p194
      %p196 = scmp.ne.s32.totalorder %s188, %s190
      %p197 = scmp.eq.s32.totalorder %s27, 1
      %p198 = por %p196, %p197
      %p199 = scmp.ne.s32.totalorder %s190, %s191
      %p200 = scmp.eq.s32.totalorder %s27, 0
      %p201 = por %p199, %p200
      %p202 = scmp.ne.s32.totalorder %s190, %s191
      %p203 = scmp.eq.s32.totalorder %s28, 1
      %p204 = por %p202, %p203
      %p206 = scmp.ne.s32.totalorder %s191, %s205
      %p207 = scmp.eq.s32.totalorder %s28, 0
      %p208 = por %p206, %p207
      %s209 = ssub.s32 %s29, %s41
      %p210 = scmp.eq.s32.totalorder %s209, 0
      %s212 = sadd.s32 %s211, 1
      %s213 = scalar_select %p210, %s211, %s212
      %p216 = pneg %p210
      %p217 = scmp.eq.s32.totalorder %s22, 1
      %p218 = por %p216, %p217
      %p219 = scmp.ne.s32.totalorder %s211, %s214
      %p220 = scmp.eq.s32.totalorder %s22, 0
      %p221 = por %p219, %p220
      %p222 = scmp.ne.s32.totalorder %s211, %s214
      %p223 = scmp.eq.s32.totalorder %s27, 1
      %p224 = por %p222, %p223
      %p225 = scmp.ne.s32.totalorder %s214, %s215
      %p226 = scmp.eq.s32.totalorder %s27, 0
      %p227 = por %p225, %p226
      %p228 = scmp.ne.s32.totalorder %s214, %s215
      %p229 = scmp.eq.s32.totalorder %s28, 1
      %p230 = por %p228, %p229
      %p232 = scmp.ne.s32.totalorder %s215, %s231
      %p233 = scmp.eq.s32.totalorder %s28, 0
      %p234 = por %p232, %p233
      %p235 = scmp.le.s32.totalorder 1, %s22
      %p236 = scmp.lt.s32.totalorder %s22, 3
      %p237 = pnand %p235, %p236
      %p238 = pneg %p237
      // Predicated region
      $region9: #{decoder_layer.5} parent=5 // pred_check
        _
      $region10: #{decoder_layer.5} parent=5 // pred_check_branch
        %240 = sbr.rel (%p237) target = $region12
      $region11: #{decoder_layer.5} parent=5 // pred_region
        %s241 = ssub.s32 %s22, 1
        // Predicated region
        $region13: #{decoder_layer.5} parent=11 // pred_check
          %p242 = pneg %p86
        $region14: #{decoder_layer.5} parent=11 // pred_check_branch
          %244 = sbr.rel (%p242) target = $region16
        $region15: #{decoder_layer.5} parent=11 // pred_region
          %s246 = ssub.s32 256, 256
          %247 = vsyncadd [#allocation7], %s246
          %s248 = smul.addr %s32, 64
          %s249 = scalar_lea.hbm %s1, %s248
          %s250 = sshll.u32 [#allocation6], 4
          %s251 = int_to_ptr.vmem [resolvable:$true] %s250
          %256 = dma.hbm_to_vmem [thread:$0]  %s249, 256, %s251, [#allocation7], 64, 64, 4
        $region16: #{decoder_layer.5} parent=11 // pred_fallthru
          _
        // Predicated region
        $region17: #{decoder_layer.5} parent=11 // pred_check
          %p257 = pneg %p112
        $region18: #{decoder_layer.5} parent=11 // pred_check_branch
          %259 = sbr.rel (%p257) target = $region20
        $region19: #{decoder_layer.5} parent=11 // pred_region
          %s261 = ssub.s32 16, 16
          %262 = vsyncadd [#allocation7], %s261
          %s263 = smul.addr %s32, 16
          %s264 = scalar_lea.hbm %s2, %s263
          %s266 = sshll.u32 [#allocation8], 4
          %s267 = int_to_ptr.vmem [resolvable:$true] %s266
          %269 = dma.hbm_to_vmem [thread:$0]  %s264, 16, %s267, [#allocation7]
        $region20: #{decoder_layer.5} parent=11 // pred_fallthru
          _
        // Predicated region
        $region21: #{decoder_layer.5} parent=11 // pred_check
          %p270 = pneg %p138
        $region22: #{decoder_layer.5} parent=11 // pred_check_branch
          %272 = sbr.rel (%p270) target = $region24
        $region23: #{decoder_layer.5} parent=11 // pred_region
          %s273 = smul.u32 8, %s32
          %s275 = ssub.s32 512, 512
          %276 = vsyncadd [#allocation10], %s275
          %s277 = smul.addr %s273, 64
          %s278 = scalar_lea.hbm %s3, %s277
          %s279 = sshll.u32 [#allocation9], 4
          %s280 = int_to_ptr.vmem [resolvable:$true] %s279
          %285 = dma.hbm_to_vmem [thread:$0]  %s278, 512, %s280, [#allocation10], 64, 64, 4
        $region24: #{decoder_layer.5} parent=11 // pred_fallthru
          _
        // Predicated region
        $region25: #{decoder_layer.5} parent=11 // pred_check
          %p286 = pneg %p159
        $region26: #{decoder_layer.5} parent=11 // pred_check_branch
          %288 = sbr.rel (%p286) target = $region28
        $region27: #{decoder_layer.5} parent=11 // pred_region
          %s290 = ssub.s32 16, 16
          %291 = vsyncadd [#allocation10], %s290
          %s293 = sshll.u32 [#allocation11], 4
          %s294 = int_to_ptr.vmem [resolvable:$true] %s293
          %296 = dma.hbm_to_vmem [thread:$0]  %s4, 16, %s294, [#allocation10]
        $region28: #{decoder_layer.5} parent=11 // pred_fallthru
          _
        // Predicated region
        $region29: #{decoder_layer.5} parent=11 // pred_check
          %p297 = pneg %p180
        $region30: #{decoder_layer.5} parent=11 // pred_check_branch
          %299 = sbr.rel (%p297) target = $region32
        $region31: #{decoder_layer.5} parent=11 // pred_region
          %s301 = ssub.s32 16, 16
          %302 = vsyncadd [#allocation13], %s301
          %s304 = sshll.u32 [#allocation12], 4
          %s305 = int_to_ptr.vmem [resolvable:$true] %s304
          %307 = dma.hbm_to_vmem [thread:$0]  %s5, 16, %s305, [#allocation13]
        $region32: #{decoder_layer.5} parent=11 // pred_fallthru
          _
        // Predicated region
        $region33: #{decoder_layer.5} parent=11 // pred_check
          %p308 = pneg %p201
        $region34: #{decoder_layer.5} parent=11 // pred_check_branch
          %310 = sbr.rel (%p308) target = $region36
        $region35: #{decoder_layer.5} parent=11 // pred_region
          %s312 = ssub.s32 16, 16
          %313 = vsyncadd [#allocation13], %s312
          %s315 = sshll.u32 [#allocation14], 4
          %s316 = int_to_ptr.vmem [resolvable:$true] %s315
          %318 = dma.hbm_to_vmem [thread:$0]  %s6, 16, %s316, [#allocation13]
        $region36: #{decoder_layer.5} parent=11 // pred_fallthru
          _
      $region12: #{decoder_layer.5} parent=5 // pred_fallthru
        _
      %p319 = scmp.lt.s32.totalorder %s22, 2
      // Predicated region
      $region37: #{decoder_layer.5} parent=5 // pred_check
        %p320 = pneg %p319
      $region38: #{decoder_layer.5} parent=5 // pred_check_branch
        %322 = sbr.rel (%p320) target = $region40
      $region39: #{decoder_layer.5} parent=5 // pred_region
        // Predicated region
        $region41: #{decoder_layer.5} parent=39 // pred_check
          %p323 = pneg %p54
        $region42: #{decoder_layer.5} parent=39 // pred_check_branch
          %325 = sbr.rel (%p323) target = $region44
        $region43: #{decoder_layer.5} parent=39 // pred_region
          %s326 = sand.u32 %s44, 1
          %s327 = scalar_lea.sflag [#allocation4], %s326
          %s328 = sand.u32 %s44, 1
          %s329 = smul.addr %s328, 8
          %s330 = scalar_lea.vmem [#allocation3], %s329
          %s332 = ssub.s32 128, 128
          %333 = vsyncadd %s327, %s332
          %s334 = smul.addr %s29, 128
          %s335 = scalar_lea.hbm %s0, %s334
          %s337 = sshll.u32 %s330, 4
          %s338 = int_to_ptr.vmem [resolvable:$true] %s337
          %340 = dma.hbm_to_vmem [thread:$0]  %s335, 128, %s338, %s327
        $region44: #{decoder_layer.5} parent=39 // pred_fallthru
          _
      $region40: #{decoder_layer.5} parent=5 // pred_fallthru
        _
      %p341 = scmp.le.s32.totalorder 1, %s22
      %p342 = scmp.lt.s32.totalorder %s22, 3
      %p343 = pnand %p341, %p342
      %p344 = pneg %p343
      // Predicated region
      $region45: #{decoder_layer.5} parent=5 // pred_check
        _
      $region46: #{decoder_layer.5} parent=5 // pred_check_branch
        %346 = sbr.rel (%p343) target = $region48
      $region47: #{decoder_layer.5} parent=5 // pred_region
        %s347 = ssub.s32 %s22, 1
        %s348 = sand.u32 %s47, 1
        %s349 = scalar_lea.sflag [#allocation4], %s348
        %s350 = sand.u32 %s47, 1
        %s351 = smul.addr %s350, 8
        %s352 = scalar_lea.vmem [#allocation3], %s351
        // Predicated region
        $region49: #{decoder_layer.5} parent=47 // pred_check
          %p353 = pneg %p60
        $region50: #{decoder_layer.5} parent=47 // pred_check_branch
          %355 = sbr.rel (%p353) target = $region52
        $region51: #{decoder_layer.5} parent=47 // pred_region
          %356 = dma.done %s349, 128
        $region52: #{decoder_layer.5} parent=47 // pred_fallthru
          _
        // Predicated region
        $region53: #{decoder_layer.5} parent=47 // pred_check
          %p357 = pneg %p86
        $region54: #{decoder_layer.5} parent=47 // pred_check_branch
          %359 = sbr.rel (%p357) target = $region56
        $region55: #{decoder_layer.5} parent=47 // pred_region
          %360 = dma.done [#allocation7], 256
        $region56: #{decoder_layer.5} parent=47 // pred_fallthru
          _
        // Predicated region
        $region57: #{decoder_layer.5} parent=47 // pred_check
          %p361 = pneg %p112
        $region58: #{decoder_layer.5} parent=47 // pred_check_branch
          %363 = sbr.rel (%p361) target = $region60
        $region59: #{decoder_layer.5} parent=47 // pred_region
          %364 = dma.done [#allocation7], 16
        $region60: #{decoder_layer.5} parent=47 // pred_fallthru
          _
        // Predicated region
        $region61: #{decoder_layer.5} parent=47 // pred_check
          %p365 = pneg %p138
        $region62: #{decoder_layer.5} parent=47 // pred_check_branch
          %367 = sbr.rel (%p365) target = $region64
        $region63: #{decoder_layer.5} parent=47 // pred_region
          %368 = dma.done [#allocation10], 512
        $region64: #{decoder_layer.5} parent=47 // pred_fallthru
          _
        // Predicated region
        $region65: #{decoder_layer.5} parent=47 // pred_check
          %p369 = pneg %p159
        $region66: #{decoder_layer.5} parent=47 // pred_check_branch
          %371 = sbr.rel (%p369) target = $region68
        $region67: #{decoder_layer.5} parent=47 // pred_region
          %372 = dma.done [#allocation10], 16
        $region68: #{decoder_layer.5} parent=47 // pred_fallthru
          _
        // Predicated region
        $region69: #{decoder_layer.5} parent=47 // pred_check
          %p373 = pneg %p180
        $region70: #{decoder_layer.5} parent=47 // pred_check_branch
          %375 = sbr.rel (%p373) target = $region72
        $region71: #{decoder_layer.5} parent=47 // pred_region
          %376 = dma.done [#allocation13], 16
        $region72: #{decoder_layer.5} parent=47 // pred_fallthru
          _
        // Predicated region
        $region73: #{decoder_layer.5} parent=47 // pred_check
          %p377 = pneg %p201
        $region74: #{decoder_layer.5} parent=47 // pred_check_branch
          %379 = sbr.rel (%p377) target = $region76
        $region75: #{decoder_layer.5} parent=47 // pred_region
          %380 = dma.done [#allocation13], 16
        $region76: #{decoder_layer.5} parent=47 // pred_fallthru
          _
        %s381 = sand.u32 %s47, 1
        %s382 = scalar_lea.sflag [#allocation4], %s381
        %s383 = sand.u32 %s47, 1
        %s384 = smul.addr %s383, 8
        %s385 = scalar_lea.vmem [#allocation3], %s384
        %p386 = pneg %p60
        %p387 = pneg %p57
        %p388 = pneg %p86
        %p389 = pneg %p83
        %p390 = pneg %p112
        %p391 = pneg %p109
        %p392 = pneg %p138
        %p393 = pneg %p135
        %p394 = pneg %p159
        %p395 = pneg %p156
        %p396 = pneg %p180
        %p397 = pneg %p177
        %p398 = pneg %p201
        %p399 = pneg %p198
        %p400 = pneg %p227
        %p401 = pneg %p224
        %s402 = sand.u32 %s214, 1
        %s403 = scalar_lea.sflag [#allocation5], %s402
        %s404 = sand.u32 %s214, 1
        %s405 = smul.addr %s404, 8
        %s406 = scalar_lea.vmem [#allocation15], %s405
        %s407 = smul.u32 8, %s32
        %p409 = scmp.eq.s32.totalorder %s32, 0
        // Predicated region
        $region77: #{decoder_layer.5} parent=47 // pred_check
          %p410 = pneg %p409
        $region78: #{decoder_layer.5} parent=47 // pred_check_branch
          %412 = sbr.rel (%p410) target = $region80
        $region79: #{decoder_layer.5} parent=47 // pred_region
          %vm413 = vcmask 261120
          %414 = vst.msk [vmem:[#allocation2] sm:$0xff] %vm413, 0.0
        $region80: #{decoder_layer.5} parent=47 // pred_fallthru
          _
        %v415 = vld [vmem:[%s352] sm:$0xff]
        %v416 = vpack.c.bf16 %v415, %v415
        %v417 = vld [vmem:[#allocation6] sm:$0xf]
        %v418 = vld [vmem:[#allocation6 + $0x4] sm:$0xf]
        %v419 = vld [vmem:[#allocation6 + $0x8] sm:$0xf]
        %v420 = vld [vmem:[#allocation6 + $0xc] sm:$0xf]
        %v421 = vld [vmem:[#allocation8] sm:$0x1]
        %v423 = vlaneseq
        %v424 = vshrl.u32 %v423, 7
        %v425 = vsub.s32 0, %v424
        %v426 = vrot.slane %v421, %v425
        %v432 = vunpack.c.l.b16 %v417
        %v433 = vunpack.c.l.b16 %v418
        %v434 = vunpack.c.l.b16 %v419
        %v435 = vunpack.c.l.b16 %v420
        %v436 = vpack.c.b16 %v433, %v432
        %v437 = vpack.c.b16 %v435, %v434
        %vm440 = vcmask 261120
        %v442 = vsel %vm440, %v416, 0
        %444 = vmatprep.subr.bf16.mxu0 0
        %445 = vmatpush1.bf16.msra.mxu0 %v436
        %446 = vmatprep.subr.bf16.mxu0 0
        %447 = vmatpush1.bf16.msra.mxu0 %v437
        %448 = vmatprep.subr.bf16.mxu0 0
        %449 = vmatpush1.bf16.msra.mxu0 0
        %450 = vmatprep.subr.bf16.mxu0 0
        %451 = vmatpush1.bf16.msra.mxu0 0
        %452 = vmatprep.subr.bf16.mxu0 0
        %453 = vmatpush1.bf16.msra.mxu0 0
        %454 = vmatprep.subr.bf16.mxu0 0
        %455 = vmatpush1.bf16.msra.mxu0 0
        %456 = vmatprep.subr.bf16.mxu0 0
        %457 = vmatpush1.bf16.msra.mxu0 0
        %458 = vmatprep.subr.bf16.mxu0 0
        %459 = vmatpush1.bf16.msra.mxu0 0
        %460 = vmatprep.subr.bf16.mxu0 0
        %461 = vmatpush1.bf16.msra.mxu0 0
        %462 = vmatprep.subr.bf16.mxu0 0
        %463 = vmatpush1.bf16.msra.mxu0 0
        %464 = vmatprep.subr.bf16.mxu0 0
        %465 = vmatpush1.bf16.msra.mxu0 0
        %466 = vmatprep.subr.bf16.mxu0 0
        %467 = vmatpush1.bf16.msra.mxu0 0
        %468 = vmatprep.subr.bf16.mxu0 0
        %469 = vmatpush1.bf16.msra.mxu0 0
        %470 = vmatprep.subr.bf16.mxu0 0
        %471 = vmatpush1.bf16.msra.mxu0 0
        %472 = vmatprep.subr.bf16.mxu0 0
        %473 = vmatpush1.bf16.msra.mxu0 0
        %474 = vmatprep.subr.bf16.mxu0 0
        %475 = vmatpush1.bf16.msra.mxu0 0
        %476 = vmatprep.mubr.bf16.mxu0 0
        %477 = vmatmul.mubr.bf16.gmra.mrb[0].mxu0 %v442
        %v478 = vpop.f32.mrb[0].mxu0
        %v479 = vadd.f32 %v426, %v478
        %v480 = vpop.f32.mrb[0].mxu0
        %v481 = vpop.f32.mrb[0].mxu0
        %v482 = vpop.f32.mrb[0].mxu0
        %483 = vdwg.mxu0
        %v484 = vmax.f32 %v479, 0.0
        %v485 = vld [vmem:[#allocation2] sm:$0xff]
        %v486 = vpack.c.bf16 %v484, %v484
        %v487 = vld [vmem:[#allocation9] sm:$0xf]
        %v488 = vld [vmem:[#allocation9 + $0x4] sm:$0xf]
        %v489 = vld [vmem:[#allocation9 + $0x8] sm:$0xf]
        %v490 = vld [vmem:[#allocation9 + $0xc] sm:$0xf]
        %v491 = vld [vmem:[#allocation9 + $0x10] sm:$0xf]
        %v492 = vld [vmem:[#allocation9 + $0x14] sm:$0xf]
        %v493 = vld [vmem:[#allocation9 + $0x18] sm:$0xf]
        %v494 = vld [vmem:[#allocation9 + $0x1c] sm:$0xf]
        %v503 = vunpack.c.l.b16 %v487
        %v504 = vunpack.c.l.b16 %v488
        %v505 = vunpack.c.l.b16 %v489
        %v506 = vunpack.c.l.b16 %v490
        %v507 = vunpack.c.l.b16 %v491
        %v508 = vunpack.c.l.b16 %v492
        %v509 = vunpack.c.l.b16 %v493
        %v510 = vunpack.c.l.b16 %v494
        %v511 = vpack.c.b16 %v504, %v503
        %v512 = vpack.c.b16 %v506, %v505
        %v513 = vpack.c.b16 %v508, %v507
        %v514 = vpack.c.b16 %v510, %v509
        %vm519 = vcmask 523264
        %v521 = vsel %vm519, %v486, 0
        %523 = vmatprep.subr.bf16.mxu0 0
        %524 = vmatpush1.bf16.msra.mxu0 %v511
        %525 = vmatprep.subr.bf16.mxu0 0
        %526 = vmatpush1.bf16.msra.mxu0 %v512
        %527 = vmatprep.subr.bf16.mxu0 0
        %528 = vmatpush1.bf16.msra.mxu0 %v513
        %529 = vmatprep.subr.bf16.mxu0 0
        %530 = vmatpush1.bf16.msra.mxu0 %v514
        %531 = vmatprep.subr.bf16.mxu0 0
        %532 = vmatpush1.bf16.msra.mxu0 0
        %533 = vmatprep.subr.bf16.mxu0 0
        %534 = vmatpush1.bf16.msra.mxu0 0
        %535 = vmatprep.subr.bf16.mxu0 0
        %536 = vmatpush1.bf16.msra.mxu0 0
        %537 = vmatprep.subr.bf16.mxu0 0
        %538 = vmatpush1.bf16.msra.mxu0 0
        %539 = vmatprep.subr.bf16.mxu0 0
        %540 = vmatpush1.bf16.msra.mxu0 0
        %541 = vmatprep.subr.bf16.mxu0 0
        %542 = vmatpush1.bf16.msra.mxu0 0
        %543 = vmatprep.subr.bf16.mxu0 0
        %544 = vmatpush1.bf16.msra.mxu0 0
        %545 = vmatprep.subr.bf16.mxu0 0
        %546 = vmatpush1.bf16.msra.mxu0 0
        %547 = vmatprep.subr.bf16.mxu0 0
        %548 = vmatpush1.bf16.msra.mxu0 0
        %549 = vmatprep.subr.bf16.mxu0 0
        %550 = vmatpush1.bf16.msra.mxu0 0
        %551 = vmatprep.subr.bf16.mxu0 0
        %552 = vmatpush1.bf16.msra.mxu0 0
        %553 = vmatprep.subr.bf16.mxu0 0
        %554 = vmatpush1.bf16.msra.mxu0 0
        %555 = vmatprep.mubr.bf16.mxu0 0
        %556 = vmatmul.mubr.bf16.gmra.mrb[0].mxu0 %v521
        %v557 = vpop.f32.mrb[0].mxu0
        %v558 = vadd.f32 0.0, %v557
        %v559 = vpop.f32.mrb[0].mxu0
        %v560 = vpop.f32.mrb[0].mxu0
        %v561 = vpop.f32.mrb[0].mxu0
        %562 = vdwg.mxu0
        %v563 = vadd.f32 %v485, %v558
        %564 = vst.msk [vmem:[#allocation2] sm:$0xff] %vm440, %v563
        // Predicated region
        $region81: #{decoder_layer.5} parent=47 // pred_check
          %p565 = pneg %p409
        $region82: #{decoder_layer.5} parent=47 // pred_check_branch
          %567 = sbr.rel (%p565) target = $region84
        $region83: #{decoder_layer.5} parent=47 // pred_region
          %v568 = vld [vmem:[#allocation2] sm:$0xff]
          %v569 = vadd.f32 %v415, %v568
          %v570 = vld [vmem:[#allocation11] sm:$0x1]
          %v572 = vlaneseq
          %v573 = vshrl.u32 %v572, 7
          %v574 = vsub.s32 0, %v573
          %v575 = vrot.slane %v570, %v574
          %v577 = vadd.f32 %v569, %v575
          %v578 = vsel %vm440, %v577, 0.0
          %579 = vadd.xlane.f32.xlu0 %v578
          %v580 = vpop.xlane.xlu0 %579
          %v581 = vrcp.pop 32.0
          %v582 = vmul.f32 %v580, %v581
          %v583 = vsub.f32 %v577, %v582
          %v584 = vmul.f32 %v583, %v583
          %v585 = vsel %vm440, %v584, 0.0
          %586 = vadd.xlane.f32.xlu0 %v585
          %v587 = vpop.xlane.xlu0 %586
          %v588 = vmul.f32 %v587, %v581
          %v589 = vadd.f32 %v588, 1e-05
          %v590 = vrsqrt.pop %v589
          %v591 = vmul.f32 %v583, %v590
          %v592 = vld [vmem:[#allocation12] sm:$0x1]
          %v594 = vlaneseq
          %v595 = vshrl.u32 %v594, 7
          %v596 = vsub.s32 0, %v595
          %v597 = vrot.slane %v592, %v596
          %v599 = vmul.f32 %v591, %v597
          %v600 = vld [vmem:[#allocation14] sm:$0x1]
          %v602 = vlaneseq
          %v603 = vshrl.u32 %v602, 7
          %v604 = vsub.s32 0, %v603
          %v605 = vrot.slane %v600, %v604
          %v607 = vadd.f32 %v599, %v605
          %608 = vst.msk [vmem:[%s406] sm:$0xff] %vm440, %v607
        $region84: #{decoder_layer.5} parent=47 // pred_fallthru
          _
        %s609 = sand.u32 %s214, 1
        %s610 = scalar_lea.sflag [#allocation5], %s609
        %s611 = sand.u32 %s214, 1
        %s612 = smul.addr %s611, 8
        %s613 = scalar_lea.vmem [#allocation15], %s612
        // Predicated region
        $region85: #{decoder_layer.5} parent=47 // pred_check
          %p614 = pneg %p224
        $region86: #{decoder_layer.5} parent=47 // pred_check_branch
          %616 = sbr.rel (%p614) target = $region88
        $region87: #{decoder_layer.5} parent=47 // pred_region
          %s618 = ssub.s32 128, 128
          %619 = vsyncadd %s610, %s618
          %s620 = smul.addr %s31, 128
          %s621 = scalar_lea.hbm %s7, %s620
          %s623 = sshll.u32 %s613, 4
          %s624 = int_to_ptr.vmem [resolvable:$true] %s623
          %626 = dma.vmem_to_hbm [thread:$0]  %s624, 128, %s621, %s610
        $region88: #{decoder_layer.5} parent=47 // pred_fallthru
          _
      $region48: #{decoder_layer.5} parent=5 // pred_fallthru
        _
      %p627 = scmp.le.s32.totalorder 2, %s22
      // Predicated region
      $region89: #{decoder_layer.5} parent=5 // pred_check
        %p628 = pneg %p627
      $region90: #{decoder_layer.5} parent=5 // pred_check_branch
        %630 = sbr.rel (%p628) target = $region92
      $region91: #{decoder_layer.5} parent=5 // pred_region
        %s631 = ssub.s32 %s22, 2
        // Predicated region
        $region93: #{decoder_layer.5} parent=91 // pred_check
          %p632 = pneg %p230
        $region94: #{decoder_layer.5} parent=91 // pred_check_branch
          %634 = sbr.rel (%p632) target = $region96
        $region95: #{decoder_layer.5} parent=91 // pred_region
          %s635 = sand.u32 %s215, 1
          %s636 = scalar_lea.sflag [#allocation5], %s635
          %s637 = sand.u32 %s215, 1
          %s638 = smul.addr %s637, 8
          %s639 = scalar_lea.vmem [#allocation15], %s638
          %640 = dma.done %s636, 128
        $region96: #{decoder_layer.5} parent=91 // pred_fallthru
          _
      $region92: #{decoder_layer.5} parent=5 // pred_fallthru
        _
    $region6: #{decoder_layer.5} parent=1 // loop_footer
      %s26 = sadd.s32 1, %s22
    $region7: #{decoder_layer.5} parent=1 // loop_footer_branch
      %21 = sbr.rel target = $region3
    $region8: #{decoder_layer.5} parent=1 // loop_exit
      _
    %641 = vsyncpa [#allocation4], 1
    %s642 = scalar_lea.sflag [#allocation4], 1
    %643 = vsyncpa %s642, 1
    %644 = vsyncpa [#allocation7], 1
    %645 = vsyncpa [#allocation10], 1
    %646 = vsyncpa [#allocation13], 1
    %647 = vsyncpa [#allocation5], 1
    %s648 = scalar_lea.sflag [#allocation5], 1
    %649 = vsyncpa %s648, 1

</llo_original>
